<compile_context>
chip_gen: v7x
topology: tpu7x:2x2x1
jax: 0.10.0
libtpu: 0.0.40
codegen_flags: <defaults>
</compile_context>

<pallas_src>
import functools
import sys

import jax
import jax.numpy as jnp
import numpy as np
from jax.experimental import pallas as pl
from jax.experimental.pallas import tpu as pltpu

_LANES = 128                      # TPU lane width
_BIN_PAD = 128                    # per-channel LUT padded to one full lane vector
_TARGET_ELEMS = 4096 * _LANES     # ~2 MiB f32 per block (amortizes grid-step overhead)
_BN_CAP = 16                      # max batch images folded into one block (unroll cap)
_VMEM_LIMIT = 48 * 1024 * 1024    # below v7x's 64 MiB physical VMEM, raises v5e/v6e default


def _index_from_x(x, inv_bw, bin_num):
    """Shared bin-index formula (identical in kernel and reference).

    floor(x * inv_bw) is a single multiply + floor (no FMA-contraction
    ambiguity); the integer half-offset is added exactly afterwards.
    """
    half = float(bin_num // 2)
    idx_f = jnp.floor(x * inv_bw) + half
    idx_f = jnp.clip(idx_f, 0.0, float(bin_num - 1))
    return idx_f.astype(jnp.int32)


# --------------------------------------------------------------------------- #
# Kernels
# --------------------------------------------------------------------------- #
def _mtlu_kernel_gather(x_ref, w_ref, b_ref, scal_ref, o_ref, *, bin_num):
    # x_ref:    (bn, rows, lanes) VMEM  spatial tiles of bn images, one channel
    # w_ref:    (1, _BIN_PAD)     VMEM  this channel's weight LUT (zero padded)
    # b_ref:    (1, _BIN_PAD)     VMEM  this channel's bias LUT (zero padded)
    # scal_ref: (1,)              SMEM  [1 / BinWidth]
    # o_ref:    (bn, rows, lanes) VMEM  output tiles
    bn, rows, _ = x_ref.shape
    inv_bw = scal_ref[0]

    # Hoisted: broadcast the (1,128) LUT row once (not per bn iteration).
    w_tab = jnp.broadcast_to(w_ref[...], (rows, _BIN_PAD))
    b_tab = jnp.broadcast_to(b_ref[...], (rows, _BIN_PAD))

    for i in range(bn):                          # bn is small & static
        x = x_ref[i].astype(jnp.float32)
        idx = _index_from_x(x, inv_bw, bin_num)
        # Per-element LUT lookup along lanes (XLU dynamic gather).
        w_sel = jnp.take_along_axis(w_tab, idx, axis=-1)
        b_sel = jnp.take_along_axis(b_tab, idx, axis=-1)
        o_ref[i] = (x * w_sel + b_sel).astype(o_ref.dtype)


def _mtlu_kernel_sweep(x_ref, w_ref, b_ref, scal_ref, o_ref, *, bin_num):
    # Fallback: unrolled compare/select sweep over the (small, static) bins.
    bn = x_ref.shape[0]
    inv_bw = scal_ref[0]
    for i in range(bn):
        x = x_ref[i].astype(jnp.float32)
        idx = _index_from_x(x, inv_bw, bin_num)
        w_sel = jnp.zeros_like(x)
        b_sel = jnp.zeros_like(x)
        for b in range(bin_num):
            m = idx == b                          # shared compare for w and b
            w_sel = jnp.where(m, w_ref[0, b], w_sel)
            b_sel = jnp.where(m, b_ref[0, b], b_sel)
        o_ref[i] = (x * w_sel + b_sel).astype(o_ref.dtype)


# --------------------------------------------------------------------------- #
# pallas_call builder
# --------------------------------------------------------------------------- #
def _build_call(kernel_fn, *, n, c, rows, lanes, bn, r_blk, bin_num, out_dtype):
    kernel = functools.partial(kernel_fn, bin_num=bin_num)
    grid = (c, n // bn, pl.cdiv(rows, r_blk))     # channel slowest -> max LUT reuse
    x_spec = pl.BlockSpec((bn, None, r_blk, lanes),
                          lambda ci, ni, si: (ni, ci, si, 0))
    lut_spec = pl.BlockSpec((None, 1, _BIN_PAD),
                            lambda ci, ni, si: (ci, 0, 0))
    return pl.pallas_call(
        kernel,
        out_shape=jax.ShapeDtypeStruct((n, c, rows, lanes), out_dtype),
        grid=grid,
        in_specs=[
            x_spec,                                   # data tile
            lut_spec,                                 # weight LUT row
            lut_spec,                                 # bias LUT row
            pl.BlockSpec(memory_space=pltpu.MemorySpace.SMEM),  # [1/BinWidth]
        ],
        out_specs=pl.BlockSpec((bn, None, r_blk, lanes),
                               lambda ci, ni, si: (ni, ci, si, 0)),
        compiler_params=pltpu.CompilerParams(
            dimension_semantics=("parallel", "parallel", "parallel"),
            vmem_limit_bytes=_VMEM_LIMIT,
        ),
    )


# One-time probe per lane configuration: does the lane gather lower here?
_GATHER_OK = {}


def _gather_supported(lanes):
    if lanes not in _GATHER_OK:
        ok, reason = True, ""
        try:
            call = _build_call(_mtlu_kernel_gather, n=1, c=1, rows=8, lanes=lanes,
                               bn=1, r_blk=8, bin_num=4, out_dtype=jnp.float32)
            xp = jnp.zeros((1, 1, 8, lanes), jnp.float32)
            tp = jnp.zeros((1, 1, _BIN_PAD), jnp.float32)
            sp = jnp.ones((1,), jnp.float32)
            jax.block_until_ready(call(xp, tp, tp, sp))
        except (pltpu.LoweringException, NotImplementedError) as e:
            ok, reason = False, f"lowering unsupported: {type(e).__name__}: {e}"
        except Exception as e:  # unexpected failure: warn loudly, keep running
            ok, reason = False, f"UNEXPECTED {type(e).__name__}: {e}"
        _GATHER_OK[lanes] = ok
        if ok:
            print(f"[mtlu] lane-gather kernel selected (lanes={lanes})",
                  file=sys.stderr)
        else:
            print(f"[mtlu] falling back to compare/select sweep (lanes={lanes}); "
                  f"{reason}", file=sys.stderr)
    return _GATHER_OK[lanes]


# --------------------------------------------------------------------------- #
# Public wrapper
# --------------------------------------------------------------------------- #
def mtlu_forward(x, weight, bias, paras, out_dtype=None):
    """Pallas MTLU forward.  x: (N,C,H,W); weight/bias: (C,BinNum); paras: (2,)."""
    N, C, H, W = x.shape
    Cw, bin_num = weight.shape
    assert Cw == C, "FeatMapNum must equal the channel count of x"
    assert bin_num <= _BIN_PAD, f"BinNum must be <= {_BIN_PAD}"
    out_dtype = x.dtype if out_dtype is None else out_dtype

    # ---- copy-free layout: lane-dense view when possible, raw NCHW otherwise
    HW = H * W
    if HW % _LANES == 0:
        rows, lanes = HW // _LANES, _LANES
        x_in = x.reshape(N, C, rows, lanes)   # row-major reshape: no HBM copy
    else:
        rows, lanes = H, W                    # last block dim == full W: no pad
        x_in = x

    # ---- tiling: big spatial blocks; batch across N when spatial is small ---
    target_rows = max(8, (_TARGET_ELEMS // lanes) // 8 * 8)
    if rows <= target_rows:
        r_blk = rows                                         # full spatial block
        bn = max(1, min(N, _BN_CAP, _TARGET_ELEMS // max(rows * lanes, 1)))
        while N % bn:                                        # keep grid exact
            bn -= 1
    else:
        r_blk = target_rows                                  # multiple of 8; ragged tail OK
        bn = 1

    # ---- per-channel LUT rows padded to one full 128-lane vector ------------
    w_p = jnp.zeros((C, 1, _BIN_PAD), jnp.float32).at[:, 0, :bin_num].set(
        weight.astype(jnp.float32))
    b_p = jnp.zeros((C, 1, _BIN_PAD), jnp.float32).at[:, 0, :bin_num].set(
        bias.astype(jnp.float32))
    # Precompute 1/BinWidth once (SMEM scalar); no per-tile divide.
    scal = (1.0 / paras[1].astype(jnp.float32)).reshape(1)

    kernel_fn = _mtlu_kernel_gather if _gather_supported(lanes) else _mtlu_kernel_sweep
    call = _build_call(kernel_fn, n=N, c=C, rows=rows, lanes=lanes, bn=bn,
                       r_blk=r_blk, bin_num=bin_num, out_dtype=out_dtype)
    y = call(x_in, w_p, b_p, scal)
    return y.reshape(N, C, H, W)


# --------------------------------------------------------------------------- #
# Reference / init helpers
# --------------------------------------------------------------------------- #
def mtlu_reference(x, weight, bias, paras):
    """Pure-JAX reference (same bin formulation as the kernel)."""
    C, bin_num = weight.shape
    inv_bw = 1.0 / paras[1].astype(jnp.float32)
    idx = _index_from_x(x.astype(jnp.float32), inv_bw, bin_num)
    c_idx = jnp.arange(C)[None, :, None, None]
    w = weight.astype(jnp.float32)[c_idx, idx]
    b = bias.astype(jnp.float32)[c_idx, idx]
    return (x.astype(jnp.float32) * w + b).astype(x.dtype)


def make_mtlu_params(bin_num=40, bin_width=0.05, feat_map_num=64,
                     dtype=jnp.float32):
    """Deterministic init matching MTLU.__init__ (ReLU-like at init)."""
    half = bin_num // 2
    weight = jnp.zeros((feat_map_num, bin_num), dtype=dtype)
    weight = weight.at[:, half:].set(1.0)
    bias = jnp.zeros((feat_map_num, bin_num), dtype=dtype)
    paras = jnp.array([bin_num, bin_width], dtype=dtype)
    return weight, bias, paras


if __name__ == "__main__":
    # Small shapes consistent with the module: NCHW input, FeatMapNum == C.
    N, C, H, W = 2, 8, 16, 16
    BIN_NUM, BIN_WIDTH = 40, 0.05

    key = jax.random.PRNGKey(0)
    kx, kw, kb = jax.random.split(key, 3)
    x = jax.random.normal(kx, (N, C, H, W), dtype=jnp.float32) * 0.5

    weight, bias, paras = make_mtlu_params(BIN_NUM, BIN_WIDTH, feat_map_num=C)
    # Perturb tables deterministically so the test exercises non-trivial bins.
    weight = weight + 0.1 * jax.random.normal(kw, weight.shape, dtype=jnp.float32)
    bias = bias + 0.05 * jax.random.normal(kb, bias.shape, dtype=jnp.float32)

    y = jax.block_until_ready(mtlu_forward(x, weight, bias, paras))

    y_ref = mtlu_reference(x, weight, bias, paras)
    np.testing.assert_allclose(np.asarray(y), np.asarray(y_ref),
                               rtol=1e-5, atol=1e-6)

    print("KERNEL_OK")
</pallas_src>

<mosaic_0001>
module attributes {stable_mosaic.version = 11 : i64} {
  func.func @_mtlu_kernel_gather(%arg0: i32, %arg1: i32, %arg2: i32, %arg3: memref<1x1x8x128xf32, #tpu.memory_space<vmem>>, %arg4: memref<1x1x128xf32, #tpu.memory_space<vmem>>, %arg5: memref<1x1x128xf32, #tpu.memory_space<vmem>>, %arg6: memref<1xf32, #tpu.memory_space<smem>>, %arg7: memref<1x1x8x128xf32, #tpu.memory_space<vmem>>) attributes {dimension_semantics = [#tpu.dimension_semantics<parallel>, #tpu.dimension_semantics<parallel>, #tpu.dimension_semantics<parallel>], iteration_bounds = array<i64: 1, 1, 1>, scalar_prefetch = 0 : i64, scratch_operands = 0 : i64, tpu.core_type = #tpu.core_type<tc>, window_params = [{transform_indices = @transform_0, window_bounds = array<i64: 1, 1, 8, 128>}, {transform_indices = @transform_1, window_bounds = array<i64: 1, 1, 128>}, {transform_indices = @transform_2, window_bounds = array<i64: 1, 1, 128>}, {transform_indices = @transform_3, window_bounds = array<i64: 1>}, {transform_indices = @transform_4, window_bounds = array<i64: 1, 1, 8, 128>}]} {
    %c0 = arith.constant 0 : index
    %0 = memref.load %arg6[%c0] : memref<1xf32, #tpu.memory_space<smem>>
    %c0_0 = arith.constant 0 : index
    %c0_1 = arith.constant 0 : index
    %c0_2 = arith.constant 0 : index
    %1 = vector.load %arg4[%c0_0, %c0_1, %c0_2] : memref<1x1x128xf32, #tpu.memory_space<vmem>>, vector<1x1x128xf32>
    %2 = vector.shape_cast %1 : vector<1x1x128xf32> to vector<1x128xf32>
    %3 = vector.shape_cast %2 : vector<1x128xf32> to vector<1x128xf32>
    %4 = vector.broadcast %3 : vector<1x128xf32> to vector<8x128xf32>
    %c0_3 = arith.constant 0 : index
    %c0_4 = arith.constant 0 : index
    %c0_5 = arith.constant 0 : index
    %5 = vector.load %arg5[%c0_3, %c0_4, %c0_5] : memref<1x1x128xf32, #tpu.memory_space<vmem>>, vector<1x1x128xf32>
    %6 = vector.shape_cast %5 : vector<1x1x128xf32> to vector<1x128xf32>
    %7 = vector.shape_cast %6 : vector<1x128xf32> to vector<1x128xf32>
    %8 = vector.broadcast %7 : vector<1x128xf32> to vector<8x128xf32>
    %c0_6 = arith.constant 0 : index
    %c0_7 = arith.constant 0 : index
    %c0_8 = arith.constant 0 : index
    %c0_9 = arith.constant 0 : index
    %9 = vector.load %arg3[%c0_6, %c0_7, %c0_8, %c0_9] : memref<1x1x8x128xf32, #tpu.memory_space<vmem>>, vector<1x1x8x128xf32>
    %10 = vector.shape_cast %9 : vector<1x1x8x128xf32> to vector<8x128xf32>
    %11 = vector.broadcast %0 : f32 to vector<8x128xf32>
    %12 = arith.mulf %10, %11 : vector<8x128xf32>
    %13 = math.floor %12 : vector<8x128xf32>
    %cst = arith.constant 2.000000e+00 : f32
    %14 = vector.broadcast %cst : f32 to vector<8x128xf32>
    %15 = arith.addf %13, %14 : vector<8x128xf32>
    %cst_10 = arith.constant 0.000000e+00 : f32
    %cst_11 = arith.constant 3.000000e+00 : f32
    %16 = vector.broadcast %cst_10 : f32 to vector<8x128xf32>
    %17 = arith.maximumf %16, %15 : vector<8x128xf32>
    %18 = vector.broadcast %cst_11 : f32 to vector<8x128xf32>
    %19 = arith.minimumf %18, %17 : vector<8x128xf32>
    %20 = arith.fptosi %19 : vector<8x128xf32> to vector<8x128xi32>
    %c0_i32 = arith.constant 0 : i32
    %21 = vector.broadcast %c0_i32 : i32 to vector<8x128xi32>
    %22 = arith.cmpi slt, %20, %21 : vector<8x128xi32>
    %c128_i32 = arith.constant 128 : i32
    %23 = vector.broadcast %c128_i32 : i32 to vector<8x128xi32>
    %24 = arith.addi %20, %23 : vector<8x128xi32>
    %25 = arith.select %22, %24, %20 : vector<8x128xi1>, vector<8x128xi32>
    %26 = vector.shape_cast %25 : vector<8x128xi32> to vector<8x128x1xi32>
    %27 = vector.shape_cast %26 : vector<8x128x1xi32> to vector<8x128xi32>
    %28 = tpu.dynamic_gather %4[%27] in [1] : vector<8x128xf32>, vector<8x128xi32> -> vector<8x128xf32>
    %c0_i32_12 = arith.constant 0 : i32
    %29 = vector.broadcast %c0_i32_12 : i32 to vector<8x128xi32>
    %30 = arith.cmpi slt, %20, %29 : vector<8x128xi32>
    %c128_i32_13 = arith.constant 128 : i32
    %31 = vector.broadcast %c128_i32_13 : i32 to vector<8x128xi32>
    %32 = arith.addi %20, %31 : vector<8x128xi32>
    %33 = arith.select %30, %32, %20 : vector<8x128xi1>, vector<8x128xi32>
    %34 = vector.shape_cast %33 : vector<8x128xi32> to vector<8x128x1xi32>
    %35 = vector.shape_cast %34 : vector<8x128x1xi32> to vector<8x128xi32>
    %36 = tpu.dynamic_gather %8[%35] in [1] : vector<8x128xf32>, vector<8x128xi32> -> vector<8x128xf32>
    %37 = arith.mulf %10, %28 : vector<8x128xf32>
    %38 = arith.addf %37, %36 : vector<8x128xf32>
    %c0_14 = arith.constant 0 : index
    %c0_15 = arith.constant 0 : index
    %c0_16 = arith.constant 0 : index
    %c0_17 = arith.constant 0 : index
    %39 = vector.load %arg7[%c0_14, %c0_15, %c0_16, %c0_17] : memref<1x1x8x128xf32, #tpu.memory_space<vmem>>, vector<1x1x8x128xf32>
    %40 = vector.shape_cast %39 : vector<1x1x8x128xf32> to vector<8x128xf32>
    %41 = vector.shape_cast %38 : vector<8x128xf32> to vector<1x1x8x128xf32>
    tpu.vector_store %arg7[%c0_14, %c0_15, %c0_16, %c0_17], %41 {strides = array<i32>} : memref<1x1x8x128xf32, #tpu.memory_space<vmem>>, vector<1x1x8x128xf32>,
    return
  }
  func.func @transform_0(%arg0: i32, %arg1: i32, %arg2: i32) -> (i32, i32, i32, i32) {
    %c0_i32 = arith.constant 0 : i32
    %c0_i32_0 = arith.constant 0 : i32
    return %arg1, %arg0, %arg2, %c0_i32 : i32, i32, i32, i32
  }
  func.func @transform_1(%arg0: i32, %arg1: i32, %arg2: i32) -> (i32, i32, i32) {
    %c0_i32 = arith.constant 0 : i32
    %c0_i32_0 = arith.constant 0 : i32
    %c0_i32_1 = arith.constant 0 : i32
    return %arg0, %c0_i32, %c0_i32_0 : i32, i32, i32
  }
  func.func @transform_2(%arg0: i32, %arg1: i32, %arg2: i32) -> (i32, i32, i32) {
    %c0_i32 = arith.constant 0 : i32
    %c0_i32_0 = arith.constant 0 : i32
    %c0_i32_1 = arith.constant 0 : i32
    return %arg0, %c0_i32, %c0_i32_0 : i32, i32, i32
  }
  func.func @transform_3(%arg0: i32, %arg1: i32, %arg2: i32) -> i32 {
    %c0_i32 = arith.constant 0 : i32
    %c0_i32_0 = arith.constant 0 : i32
    return %c0_i32 : i32
  }
  func.func @transform_4(%arg0: i32, %arg1: i32, %arg2: i32) -> (i32, i32, i32, i32) {
    %c0_i32 = arith.constant 0 : i32
    %c0_i32_0 = arith.constant 0 : i32
    return %arg1, %arg0, %arg2, %c0_i32 : i32, i32, i32, i32
  }
}

module attributes {stable_mosaic.version = 11 : i64} {
  func.func @_mtlu_kernel_sweep(%arg0: i32, %arg1: i32, %arg2: i32, %arg3: memref<2x1x2x128xf32, #tpu.memory_space<vmem>>, %arg4: memref<1x1x128xf32, #tpu.memory_space<vmem>>, %arg5: memref<1x1x128xf32, #tpu.memory_space<vmem>>, %arg6: memref<1xf32, #tpu.memory_space<smem>>, %arg7: memref<2x1x2x128xf32, #tpu.memory_space<vmem>>) attributes {dimension_semantics = [#tpu.dimension_semantics<parallel>, #tpu.dimension_semantics<parallel>, #tpu.dimension_semantics<parallel>], iteration_bounds = array<i64: 8, 1, 1>, scalar_prefetch = 0 : i64, scratch_operands = 0 : i64, tpu.core_type = #tpu.core_type<tc>, window_params = [{transform_indices = @transform_0, window_bounds = array<i64: 2, 1, 2, 128>}, {transform_indices = @transform_1, window_bounds = array<i64: 1, 1, 128>}, {transform_indices = @transform_2, window_bounds = array<i64: 1, 1, 128>}, {transform_indices = @transform_3, window_bounds = array<i64: 1>}, {transform_indices = @transform_4, window_bounds = array<i64: 2, 1, 2, 128>}]} {
    %c0 = arith.constant 0 : index
    %0 = memref.load %arg6[%c0] : memref<1xf32, #tpu.memory_space<smem>>
    %c0_0 = arith.constant 0 : index
    %c0_1 = arith.constant 0 : index
    %c0_2 = arith.constant 0 : index
    %c0_3 = arith.constant 0 : index
    %1 = vector.load %arg3[%c0_0, %c0_1, %c0_2, %c0_3] : memref<2x1x2x128xf32, #tpu.memory_space<vmem>>, vector<1x1x2x128xf32>
    %2 = vector.shape_cast %1 : vector<1x1x2x128xf32> to vector<2x128xf32>
    %3 = vector.broadcast %0 : f32 to vector<2x128xf32>
    %4 = arith.mulf %2, %3 : vector<2x128xf32>
    %5 = math.floor %4 : vector<2x128xf32>
    %cst = arith.constant 2.000000e+01 : f32
    %6 = vector.broadcast %cst : f32 to vector<2x128xf32>
    %7 = arith.addf %5, %6 : vector<2x128xf32>
    %cst_4 = arith.constant 0.000000e+00 : f32
    %cst_5 = arith.constant 3.900000e+01 : f32
    %8 = vector.broadcast %cst_4 : f32 to vector<2x128xf32>
    %9 = arith.maximumf %8, %7 : vector<2x128xf32>
    %10 = vector.broadcast %cst_5 : f32 to vector<2x128xf32>
    %11 = arith.minimumf %10, %9 : vector<2x128xf32>
    %12 = arith.fptosi %11 : vector<2x128xf32> to vector<2x128xi32>
    %cst_6 = arith.constant 0.000000e+00 : f32
    %13 = vector.broadcast %cst_6 : f32 to vector<2x128xf32>
    %cst_7 = arith.constant 0.000000e+00 : f32
    %14 = vector.broadcast %cst_7 : f32 to vector<2x128xf32>
    %c0_i32 = arith.constant 0 : i32
    %15 = vector.broadcast %c0_i32 : i32 to vector<2x128xi32>
    %16 = arith.cmpi eq, %12, %15 : vector<2x128xi32>
    %c0_8 = arith.constant 0 : index
    %c0_9 = arith.constant 0 : index
    %c0_10 = arith.constant 0 : index
    %17 = vector.load %arg4[%c0_8, %c0_9, %c0_10] : memref<1x1x128xf32, #tpu.memory_space<vmem>>, vector<1x1x1xf32>
    %18 = vector.extract %17[0, 0, 0] : f32 from vector<1x1x1xf32>
    %19 = vector.broadcast %18 : f32 to vector<2x128xf32>
    %20 = arith.select %16, %19, %13 : vector<2x128xi1>, vector<2x128xf32>
    %c0_11 = arith.constant 0 : index
    %c0_12 = arith.constant 0 : index
    %c0_13 = arith.constant 0 : index
    %21 = vector.load %arg5[%c0_11, %c0_12, %c0_13] : memref<1x1x128xf32, #tpu.memory_space<vmem>>, vector<1x1x1xf32>
    %22 = vector.extract %21[0, 0, 0] : f32 from vector<1x1x1xf32>
    %23 = vector.broadcast %22 : f32 to vector<2x128xf32>
    %24 = arith.select %16, %23, %14 : vector<2x128xi1>, vector<2x128xf32>
    %c1_i32 = arith.constant 1 : i32
    %25 = vector.broadcast %c1_i32 : i32 to vector<2x128xi32>
    %26 = arith.cmpi eq, %12, %25 : vector<2x128xi32>
    %c0_14 = arith.constant 0 : index
    %c0_15 = arith.constant 0 : index
    %c1 = arith.constant 1 : index
    %27 = vector.load %arg4[%c0_14, %c0_15, %c1] : memref<1x1x128xf32, #tpu.memory_space<vmem>>, vector<1x1x1xf32>
    %28 = vector.extract %27[0, 0, 0] : f32 from vector<1x1x1xf32>
    %29 = vector.broadcast %28 : f32 to vector<2x128xf32>
    %30 = arith.select %26, %29, %20 : vector<2x128xi1>, vector<2x128xf32>
    %c0_16 = arith.constant 0 : index
    %c0_17 = arith.constant 0 : index
    %c1_18 = arith.constant 1 : index
    %31 = vector.load %arg5[%c0_16, %c0_17, %c1_18] : memref<1x1x128xf32, #tpu.memory_space<vmem>>, vector<1x1x1xf32>
    %32 = vector.extract %31[0, 0, 0] : f32 from vector<1x1x1xf32>
    %33 = vector.broadcast %32 : f32 to vector<2x128xf32>
    %34 = arith.select %26, %33, %24 : vector<2x128xi1>, vector<2x128xf32>
    %c2_i32 = arith.constant 2 : i32
    %35 = vector.broadcast %c2_i32 : i32 to vector<2x128xi32>
    %36 = arith.cmpi eq, %12, %35 : vector<2x128xi32>
    %c0_19 = arith.constant 0 : index
    %c0_20 = arith.constant 0 : index
    %c2 = arith.constant 2 : index
    %37 = vector.load %arg4[%c0_19, %c0_20, %c2] : memref<1x1x128xf32, #tpu.memory_space<vmem>>, vector<1x1x1xf32>
    %38 = vector.extract %37[0, 0, 0] : f32 from vector<1x1x1xf32>
    %39 = vector.broadcast %38 : f32 to vector<2x128xf32>
    %40 = arith.select %36, %39, %30 : vector<2x128xi1>, vector<2x128xf32>
    %c0_21 = arith.constant 0 : index
    %c0_22 = arith.constant 0 : index
    %c2_23 = arith.constant 2 : index
    %41 = vector.load %arg5[%c0_21, %c0_22, %c2_23] : memref<1x1x128xf32, #tpu.memory_space<vmem>>, vector<1x1x1xf32>
    %42 = vector.extract %41[0, 0, 0] : f32 from vector<1x1x1xf32>
    %43 = vector.broadcast %42 : f32 to vector<2x128xf32>
    %44 = arith.select %36, %43, %34 : vector<2x128xi1>, vector<2x128xf32>
    %c3_i32 = arith.constant 3 : i32
    %45 = vector.broadcast %c3_i32 : i32 to vector<2x128xi32>
    %46 = arith.cmpi eq, %12, %45 : vector<2x128xi32>
    %c0_24 = arith.constant 0 : index
    %c0_25 = arith.constant 0 : index
    %c3 = arith.constant 3 : index
    %47 = vector.load %arg4[%c0_24, %c0_25, %c3] : memref<1x1x128xf32, #tpu.memory_space<vmem>>, vector<1x1x1xf32>
    %48 = vector.extract %47[0, 0, 0] : f32 from vector<1x1x1xf32>
    %49 = vector.broadcast %48 : f32 to vector<2x128xf32>
    %50 = arith.select %46, %49, %40 : vector<2x128xi1>, vector<2x128xf32>
    %c0_26 = arith.constant 0 : index
    %c0_27 = arith.constant 0 : index
    %c3_28 = arith.constant 3 : index
    %51 = vector.load %arg5[%c0_26, %c0_27, %c3_28] : memref<1x1x128xf32, #tpu.memory_space<vmem>>, vector<1x1x1xf32>
    %52 = vector.extract %51[0, 0, 0] : f32 from vector<1x1x1xf32>
    %53 = vector.broadcast %52 : f32 to vector<2x128xf32>
    %54 = arith.select %46, %53, %44 : vector<2x128xi1>, vector<2x128xf32>
    %c4_i32 = arith.constant 4 : i32
    %55 = vector.broadcast %c4_i32 : i32 to vector<2x128xi32>
    %56 = arith.cmpi eq, %12, %55 : vector<2x128xi32>
    %c0_29 = arith.constant 0 : index
    %c0_30 = arith.constant 0 : index
    %c4 = arith.constant 4 : index
    %57 = vector.load %arg4[%c0_29, %c0_30, %c4] : memref<1x1x128xf32, #tpu.memory_space<vmem>>, vector<1x1x1xf32>
    %58 = vector.extract %57[0, 0, 0] : f32 from vector<1x1x1xf32>
    %59 = vector.broadcast %58 : f32 to vector<2x128xf32>
    %60 = arith.select %56, %59, %50 : vector<2x128xi1>, vector<2x128xf32>
    %c0_31 = arith.constant 0 : index
    %c0_32 = arith.constant 0 : index
    %c4_33 = arith.constant 4 : index
    %61 = vector.load %arg5[%c0_31, %c0_32, %c4_33] : memref<1x1x128xf32, #tpu.memory_space<vmem>>, vector<1x1x1xf32>
    %62 = vector.extract %61[0, 0, 0] : f32 from vector<1x1x1xf32>
    %63 = vector.broadcast %62 : f32 to vector<2x128xf32>
    %64 = arith.select %56, %63, %54 : vector<2x128xi1>, vector<2x128xf32>
    %c5_i32 = arith.constant 5 : i32
    %65 = vector.broadcast %c5_i32 : i32 to vector<2x128xi32>
    %66 = arith.cmpi eq, %12, %65 : vector<2x128xi32>
    %c0_34 = arith.constant 0 : index
    %c0_35 = arith.constant 0 : index
    %c5 = arith.constant 5 : index
    %67 = vector.load %arg4[%c0_34, %c0_35, %c5] : memref<1x1x128xf32, #tpu.memory_space<vmem>>, vector<1x1x1xf32>
    %68 = vector.extract %67[0, 0, 0] : f32 from vector<1x1x1xf32>
    %69 = vector.broadcast %68 : f32 to vector<2x128xf32>
    %70 = arith.select %66, %69, %60 : vector<2x128xi1>, vector<2x128xf32>
    %c0_36 = arith.constant 0 : index
    %c0_37 = arith.constant 0 : index
    %c5_38 = arith.constant 5 : index
    %71 = vector.load %arg5[%c0_36, %c0_37, %c5_38] : memref<1x1x128xf32, #tpu.memory_space<vmem>>, vector<1x1x1xf32>
    %72 = vector.extract %71[0, 0, 0] : f32 from vector<1x1x1xf32>
    %73 = vector.broadcast %72 : f32 to vector<2x128xf32>
    %74 = arith.select %66, %73, %64 : vector<2x128xi1>, vector<2x128xf32>
    %c6_i32 = arith.constant 6 : i32
    %75 = vector.broadcast %c6_i32 : i32 to vector<2x128xi32>
    %76 = arith.cmpi eq, %12, %75 : vector<2x128xi32>
    %c0_39 = arith.constant 0 : index
    %c0_40 = arith.constant 0 : index
    %c6 = arith.constant 6 : index
    %77 = vector.load %arg4[%c0_39, %c0_40, %c6] : memref<1x1x128xf32, #tpu.memory_space<vmem>>, vector<1x1x1xf32>
    %78 = vector.extract %77[0, 0, 0] : f32 from vector<1x1x1xf32>
    %79 = vector.broadcast %78 : f32 to vector<2x128xf32>
    %80 = arith.select %76, %79, %70 : vector<2x128xi1>, vector<2x128xf32>
    %c0_41 = arith.constant 0 : index
    %c0_42 = arith.constant 0 : index
    %c6_43 = arith.constant 6 : index
    %81 = vector.load %arg5[%c0_41, %c0_42, %c6_43] : memref<1x1x128xf32, #tpu.memory_space<vmem>>, vector<1x1x1xf32>
    %82 = vector.extract %81[0, 0, 0] : f32 from vector<1x1x1xf32>
    %83 = vector.broadcast %82 : f32 to vector<2x128xf32>
    %84 = arith.select %76, %83, %74 : vector<2x128xi1>, vector<2x128xf32>
    %c7_i32 = arith.constant 7 : i32
    %85 = vector.broadcast %c7_i32 : i32 to vector<2x128xi32>
    %86 = arith.cmpi eq, %12, %85 : vector<2x128xi32>
    %c0_44 = arith.constant 0 : index
    %c0_45 = arith.constant 0 : index
    %c7 = arith.constant 7 : index
    %87 = vector.load %arg4[%c0_44, %c0_45, %c7] : memref<1x1x128xf32, #tpu.memory_space<vmem>>, vector<1x1x1xf32>
    %88 = vector.extract %87[0, 0, 0] : f32 from vector<1x1x1xf32>
    %89 = vector.broadcast %88 : f32 to vector<2x128xf32>
    %90 = arith.select %86, %89, %80 : vector<2x128xi1>, vector<2x128xf32>
    %c0_46 = arith.constant 0 : index
    %c0_47 = arith.constant 0 : index
    %c7_48 = arith.constant 7 : index
    %91 = vector.load %arg5[%c0_46, %c0_47, %c7_48] : memref<1x1x128xf32, #tpu.memory_space<vmem>>, vector<1x1x1xf32>
    %92 = vector.extract %91[0, 0, 0] : f32 from vector<1x1x1xf32>
    %93 = vector.broadcast %92 : f32 to vector<2x128xf32>
    %94 = arith.select %86, %93, %84 : vector<2x128xi1>, vector<2x128xf32>
    %c8_i32 = arith.constant 8 : i32
    %95 = vector.broadcast %c8_i32 : i32 to vector<2x128xi32>
    %96 = arith.cmpi eq, %12, %95 : vector<2x128xi32>
    %c0_49 = arith.constant 0 : index
    %c0_50 = arith.constant 0 : index
    %c8 = arith.constant 8 : index
    %97 = vector.load %arg4[%c0_49, %c0_50, %c8] : memref<1x1x128xf32, #tpu.memory_space<vmem>>, vector<1x1x1xf32>
    %98 = vector.extract %97[0, 0, 0] : f32 from vector<1x1x1xf32>
    %99 = vector.broadcast %98 : f32 to vector<2x128xf32>
    %100 = arith.select %96, %99, %90 : vector<2x128xi1>, vector<2x128xf32>
    %c0_51 = arith.constant 0 : index
    %c0_52 = arith.constant 0 : index
    %c8_53 = arith.constant 8 : index
    %101 = vector.load %arg5[%c0_51, %c0_52, %c8_53] : memref<1x1x128xf32, #tpu.memory_space<vmem>>, vector<1x1x1xf32>
    %102 = vector.extract %101[0, 0, 0] : f32 from vector<1x1x1xf32>
    %103 = vector.broadcast %102 : f32 to vector<2x128xf32>
    %104 = arith.select %96, %103, %94 : vector<2x128xi1>, vector<2x128xf32>
    %c9_i32 = arith.constant 9 : i32
    %105 = vector.broadcast %c9_i32 : i32 to vector<2x128xi32>
    %106 = arith.cmpi eq, %12, %105 : vector<2x128xi32>
    %c0_54 = arith.constant 0 : index
    %c0_55 = arith.constant 0 : index
    %c9 = arith.constant 9 : index
    %107 = vector.load %arg4[%c0_54, %c0_55, %c9] : memref<1x1x128xf32, #tpu.memory_space<vmem>>, vector<1x1x1xf32>
    %108 = vector.extract %107[0, 0, 0] : f32 from vector<1x1x1xf32>
    %109 = vector.broadcast %108 : f32 to vector<2x128xf32>
    %110 = arith.select %106, %109, %100 : vector<2x128xi1>, vector<2x128xf32>
    %c0_56 = arith.constant 0 : index
    %c0_57 = arith.constant 0 : index
    %c9_58 = arith.constant 9 : index
    %111 = vector.load %arg5[%c0_56, %c0_57, %c9_58] : memref<1x1x128xf32, #tpu.memory_space<vmem>>, vector<1x1x1xf32>
    %112 = vector.extract %111[0, 0, 0] : f32 from vector<1x1x1xf32>
    %113 = vector.broadcast %112 : f32 to vector<2x128xf32>
    %114 = arith.select %106, %113, %104 : vector<2x128xi1>, vector<2x128xf32>
    %c10_i32 = arith.constant 10 : i32
    %115 = vector.broadcast %c10_i32 : i32 to vector<2x128xi32>
    %116 = arith.cmpi eq, %12, %115 : vector<2x128xi32>
    %c0_59 = arith.constant 0 : index
    %c0_60 = arith.constant 0 : index
    %c10 = arith.constant 10 : index
    %117 = vector.load %arg4[%c0_59, %c0_60, %c10] : memref<1x1x128xf32, #tpu.memory_space<vmem>>, vector<1x1x1xf32>
    %118 = vector.extract %117[0, 0, 0] : f32 from vector<1x1x1xf32>
    %119 = vector.broadcast %118 : f32 to vector<2x128xf32>
    %120 = arith.select %116, %119, %110 : vector<2x128xi1>, vector<2x128xf32>
    %c0_61 = arith.constant 0 : index
    %c0_62 = arith.constant 0 : index
    %c10_63 = arith.constant 10 : index
    %121 = vector.load %arg5[%c0_61, %c0_62, %c10_63] : memref<1x1x128xf32, #tpu.memory_space<vmem>>, vector<1x1x1xf32>
    %122 = vector.extract %121[0, 0, 0] : f32 from vector<1x1x1xf32>
    %123 = vector.broadcast %122 : f32 to vector<2x128xf32>
    %124 = arith.select %116, %123, %114 : vector<2x128xi1>, vector<2x128xf32>
    %c11_i32 = arith.constant 11 : i32
    %125 = vector.broadcast %c11_i32 : i32 to vector<2x128xi32>
    %126 = arith.cmpi eq, %12, %125 : vector<2x128xi32>
    %c0_64 = arith.constant 0 : index
    %c0_65 = arith.constant 0 : index
    %c11 = arith.constant 11 : index
    %127 = vector.load %arg4[%c0_64, %c0_65, %c11] : memref<1x1x128xf32, #tpu.memory_space<vmem>>, vector<1x1x1xf32>
    %128 = vector.extract %127[0, 0, 0] : f32 from vector<1x1x1xf32>
    %129 = vector.broadcast %128 : f32 to vector<2x128xf32>
    %130 = arith.select %126, %129, %120 : vector<2x128xi1>, vector<2x128xf32>
    %c0_66 = arith.constant 0 : index
    %c0_67 = arith.constant 0 : index
    %c11_68 = arith.constant 11 : index
    %131 = vector.load %arg5[%c0_66, %c0_67, %c11_68] : memref<1x1x128xf32, #tpu.memory_space<vmem>>, vector<1x1x1xf32>
    %132 = vector.extract %131[0, 0, 0] : f32 from vector<1x1x1xf32>
    %133 = vector.broadcast %132 : f32 to vector<2x128xf32>
    %134 = arith.select %126, %133, %124 : vector<2x128xi1>, vector<2x128xf32>
    %c12_i32 = arith.constant 12 : i32
    %135 = vector.broadcast %c12_i32 : i32 to vector<2x128xi32>
    %136 = arith.cmpi eq, %12, %135 : vector<2x128xi32>
    %c0_69 = arith.constant 0 : index
    %c0_70 = arith.constant 0 : index
    %c12 = arith.constant 12 : index
    %137 = vector.load %arg4[%c0_69, %c0_70, %c12] : memref<1x1x128xf32, #tpu.memory_space<vmem>>, vector<1x1x1xf32>
    %138 = vector.extract %137[0, 0, 0] : f32 from vector<1x1x1xf32>
    %139 = vector.broadcast %138 : f32 to vector<2x128xf32>
    %140 = arith.select %136, %139, %130 : vector<2x128xi1>, vector<2x128xf32>
    %c0_71 = arith.constant 0 : index
    %c0_72 = arith.constant 0 : index
    %c12_73 = arith.constant 12 : index
    %141 = vector.load %arg5[%c0_71, %c0_72, %c12_73] : memref<1x1x128xf32, #tpu.memory_space<vmem>>, vector<1x1x1xf32>
    %142 = vector.extract %141[0, 0, 0] : f32 from vector<1x1x1xf32>
    %143 = vector.broadcast %142 : f32 to vector<2x128xf32>
    %144 = arith.select %136, %143, %134 : vector<2x128xi1>, vector<2x128xf32>
    %c13_i32 = arith.constant 13 : i32
    %145 = vector.broadcast %c13_i32 : i32 to vector<2x128xi32>
    %146 = arith.cmpi eq, %12, %145 : vector<2x128xi32>
    %c0_74 = arith.constant 0 : index
    %c0_75 = arith.constant 0 : index
    %c13 = arith.constant 13 : index
    %147 = vector.load %arg4[%c0_74, %c0_75, %c13] : memref<1x1x128xf32, #tpu.memory_space<vmem>>, vector<1x1x1xf32>
    %148 = vector.extract %147[0, 0, 0] : f32 from vector<1x1x1xf32>
    %149 = vector.broadcast %148 : f32 to vector<2x128xf32>
    %150 = arith.select %146, %149, %140 : vector<2x128xi1>, vector<2x128xf32>
    %c0_76 = arith.constant 0 : index
    %c0_77 = arith.constant 0 : index
    %c13_78 = arith.constant 13 : index
    %151 = vector.load %arg5[%c0_76, %c0_77, %c13_78] : memref<1x1x128xf32, #tpu.memory_space<vmem>>, vector<1x1x1xf32>
    %152 = vector.extract %151[0, 0, 0] : f32 from vector<1x1x1xf32>
    %153 = vector.broadcast %152 : f32 to vector<2x128xf32>
    %154 = arith.select %146, %153, %144 : vector<2x128xi1>, vector<2x128xf32>
    %c14_i32 = arith.constant 14 : i32
    %155 = vector.broadcast %c14_i32 : i32 to vector<2x128xi32>
    %156 = arith.cmpi eq, %12, %155 : vector<2x128xi32>
    %c0_79 = arith.constant 0 : index
    %c0_80 = arith.constant 0 : index
    %c14 = arith.constant 14 : index
    %157 = vector.load %arg4[%c0_79, %c0_80, %c14] : memref<1x1x128xf32, #tpu.memory_space<vmem>>, vector<1x1x1xf32>
    %158 = vector.extract %157[0, 0, 0] : f32 from vector<1x1x1xf32>
    %159 = vector.broadcast %158 : f32 to vector<2x128xf32>
    %160 = arith.select %156, %159, %150 : vector<2x128xi1>, vector<2x128xf32>
    %c0_81 = arith.constant 0 : index
    %c0_82 = arith.constant 0 : index
    %c14_83 = arith.constant 14 : index
    %161 = vector.load %arg5[%c0_81, %c0_82, %c14_83] : memref<1x1x128xf32, #tpu.memory_space<vmem>>, vector<1x1x1xf32>
    %162 = vector.extract %161[0, 0, 0] : f32 from vector<1x1x1xf32>
    %163 = vector.broadcast %162 : f32 to vector<2x128xf32>
    %164 = arith.select %156, %163, %154 : vector<2x128xi1>, vector<2x128xf32>
    %c15_i32 = arith.constant 15 : i32
    %165 = vector.broadcast %c15_i32 : i32 to vector<2x128xi32>
    %166 = arith.cmpi eq, %12, %165 : vector<2x128xi32>
    %c0_84 = arith.constant 0 : index
    %c0_85 = arith.constant 0 : index
    %c15 = arith.constant 15 : index
    %167 = vector.load %arg4[%c0_84, %c0_85, %c15] : memref<1x1x128xf32, #tpu.memory_space<vmem>>, vector<1x1x1xf32>
    %168 = vector.extract %167[0, 0, 0] : f32 from vector<1x1x1xf32>
    %169 = vector.broadcast %168 : f32 to vector<2x128xf32>
    %170 = arith.select %166, %169, %160 : vector<2x128xi1>, vector<2x128xf32>
    %c0_86 = arith.constant 0 : index
    %c0_87 = arith.constant 0 : index
    %c15_88 = arith.constant 15 : index
    %171 = vector.load %arg5[%c0_86, %c0_87, %c15_88] : memref<1x1x128xf32, #tpu.memory_space<vmem>>, vector<1x1x1xf32>
    %172 = vector.extract %171[0, 0, 0] : f32 from vector<1x1x1xf32>
    %173 = vector.broadcast %172 : f32 to vector<2x128xf32>
    %174 = arith.select %166, %173, %164 : vector<2x128xi1>, vector<2x128xf32>
    %c16_i32 = arith.constant 16 : i32
    %175 = vector.broadcast %c16_i32 : i32 to vector<2x128xi32>
    %176 = arith.cmpi eq, %12, %175 : vector<2x128xi32>
    %c0_89 = arith.constant 0 : index
    %c0_90 = arith.constant 0 : index
    %c16 = arith.constant 16 : index
    %177 = vector.load %arg4[%c0_89, %c0_90, %c16] : memref<1x1x128xf32, #tpu.memory_space<vmem>>, vector<1x1x1xf32>
    %178 = vector.extract %177[0, 0, 0] : f32 from vector<1x1x1xf32>
    %179 = vector.broadcast %178 : f32 to vector<2x128xf32>
    %180 = arith.select %176, %179, %170 : vector<2x128xi1>, vector<2x128xf32>
    %c0_91 = arith.constant 0 : index
    %c0_92 = arith.constant 0 : index
    %c16_93 = arith.constant 16 : index
    %181 = vector.load %arg5[%c0_91, %c0_92, %c16_93] : memref<1x1x128xf32, #tpu.memory_space<vmem>>, vector<1x1x1xf32>
    %182 = vector.extract %181[0, 0, 0] : f32 from vector<1x1x1xf32>
    %183 = vector.broadcast %182 : f32 to vector<2x128xf32>
    %184 = arith.select %176, %183, %174 : vector<2x128xi1>, vector<2x128xf32>
    %c17_i32 = arith.constant 17 : i32
    %185 = vector.broadcast %c17_i32 : i32 to vector<2x128xi32>
    %186 = arith.cmpi eq, %12, %185 : vector<2x128xi32>
    %c0_94 = arith.constant 0 : index
    %c0_95 = arith.constant 0 : index
    %c17 = arith.constant 17 : index
    %187 = vector.load %arg4[%c0_94, %c0_95, %c17] : memref<1x1x128xf32, #tpu.memory_space<vmem>>, vector<1x1x1xf32>
    %188 = vector.extract %187[0, 0, 0] : f32 from vector<1x1x1xf32>
    %189 = vector.broadcast %188 : f32 to vector<2x128xf32>
    %190 = arith.select %186, %189, %180 : vector<2x128xi1>, vector<2x128xf32>
    %c0_96 = arith.constant 0 : index
    %c0_97 = arith.constant 0 : index
    %c17_98 = arith.constant 17 : index
    %191 = vector.load %arg5[%c0_96, %c0_97, %c17_98] : memref<1x1x128xf32, #tpu.memory_space<vmem>>, vector<1x1x1xf32>
    %192 = vector.extract %191[0, 0, 0] : f32 from vector<1x1x1xf32>
    %193 = vector.broadcast %192 : f32 to vector<2x128xf32>
    %194 = arith.select %186, %193, %184 : vector<2x128xi1>, vector<2x128xf32>
    %c18_i32 = arith.constant 18 : i32
    %195 = vector.broadcast %c18_i32 : i32 to vector<2x128xi32>
    %196 = arith.cmpi eq, %12, %195 : vector<2x128xi32>
    %c0_99 = arith.constant 0 : index
    %c0_100 = arith.constant 0 : index
    %c18 = arith.constant 18 : index
    %197 = vector.load %arg4[%c0_99, %c0_100, %c18] : memref<1x1x128xf32, #tpu.memory_space<vmem>>, vector<1x1x1xf32>
    %198 = vector.extract %197[0, 0, 0] : f32 from vector<1x1x1xf32>
    %199 = vector.broadcast %198 : f32 to vector<2x128xf32>
    %200 = arith.select %196, %199, %190 : vector<2x128xi1>, vector<2x128xf32>
    %c0_101 = arith.constant 0 : index
    %c0_102 = arith.constant 0 : index
    %c18_103 = arith.constant 18 : index
    %201 = vector.load %arg5[%c0_101, %c0_102, %c18_103] : memref<1x1x128xf32, #tpu.memory_space<vmem>>, vector<1x1x1xf32>
    %202 = vector.extract %201[0, 0, 0] : f32 from vector<1x1x1xf32>
    %203 = vector.broadcast %202 : f32 to vector<2x128xf32>
    %204 = arith.select %196, %203, %194 : vector<2x128xi1>, vector<2x128xf32>
    %c19_i32 = arith.constant 19 : i32
    %205 = vector.broadcast %c19_i32 : i32 to vector<2x128xi32>
    %206 = arith.cmpi eq, %12, %205 : vector<2x128xi32>
    %c0_104 = arith.constant 0 : index
    %c0_105 = arith.constant 0 : index
    %c19 = arith.constant 19 : index
    %207 = vector.load %arg4[%c0_104, %c0_105, %c19] : memref<1x1x128xf32, #tpu.memory_space<vmem>>, vector<1x1x1xf32>
    %208 = vector.extract %207[0, 0, 0] : f32 from vector<1x1x1xf32>
    %209 = vector.broadcast %208 : f32 to vector<2x128xf32>
    %210 = arith.select %206, %209, %200 : vector<2x128xi1>, vector<2x128xf32>
    %c0_106 = arith.constant 0 : index
    %c0_107 = arith.constant 0 : index
    %c19_108 = arith.constant 19 : index
    %211 = vector.load %arg5[%c0_106, %c0_107, %c19_108] : memref<1x1x128xf32, #tpu.memory_space<vmem>>, vector<1x1x1xf32>
    %212 = vector.extract %211[0, 0, 0] : f32 from vector<1x1x1xf32>
    %213 = vector.broadcast %212 : f32 to vector<2x128xf32>
    %214 = arith.select %206, %213, %204 : vector<2x128xi1>, vector<2x128xf32>
    %c20_i32 = arith.constant 20 : i32
    %215 = vector.broadcast %c20_i32 : i32 to vector<2x128xi32>
    %216 = arith.cmpi eq, %12, %215 : vector<2x128xi32>
    %c0_109 = arith.constant 0 : index
    %c0_110 = arith.constant 0 : index
    %c20 = arith.constant 20 : index
    %217 = vector.load %arg4[%c0_109, %c0_110, %c20] : memref<1x1x128xf32, #tpu.memory_space<vmem>>, vector<1x1x1xf32>
    %218 = vector.extract %217[0, 0, 0] : f32 from vector<1x1x1xf32>
    %219 = vector.broadcast %218 : f32 to vector<2x128xf32>
    %220 = arith.select %216, %219, %210 : vector<2x128xi1>, vector<2x128xf32>
    %c0_111 = arith.constant 0 : index
    %c0_112 = arith.constant 0 : index
    %c20_113 = arith.constant 20 : index
    %221 = vector.load %arg5[%c0_111, %c0_112, %c20_113] : memref<1x1x128xf32, #tpu.memory_space<vmem>>, vector<1x1x1xf32>
    %222 = vector.extract %221[0, 0, 0] : f32 from vector<1x1x1xf32>
    %223 = vector.broadcast %222 : f32 to vector<2x128xf32>
    %224 = arith.select %216, %223, %214 : vector<2x128xi1>, vector<2x128xf32>
    %c21_i32 = arith.constant 21 : i32
    %225 = vector.broadcast %c21_i32 : i32 to vector<2x128xi32>
    %226 = arith.cmpi eq, %12, %225 : vector<2x128xi32>
    %c0_114 = arith.constant 0 : index
    %c0_115 = arith.constant 0 : index
    %c21 = arith.constant 21 : index
    %227 = vector.load %arg4[%c0_114, %c0_115, %c21] : memref<1x1x128xf32, #tpu.memory_space<vmem>>, vector<1x1x1xf32>
    %228 = vector.extract %227[0, 0, 0] : f32 from vector<1x1x1xf32>
    %229 = vector.broadcast %228 : f32 to vector<2x128xf32>
    %230 = arith.select %226, %229, %220 : vector<2x128xi1>, vector<2x128xf32>
    %c0_116 = arith.constant 0 : index
    %c0_117 = arith.constant 0 : index
    %c21_118 = arith.constant 21 : index
    %231 = vector.load %arg5[%c0_116, %c0_117, %c21_118] : memref<1x1x128xf32, #tpu.memory_space<vmem>>, vector<1x1x1xf32>
    %232 = vector.extract %231[0, 0, 0] : f32 from vector<1x1x1xf32>
    %233 = vector.broadcast %232 : f32 to vector<2x128xf32>
    %234 = arith.select %226, %233, %224 : vector<2x128xi1>, vector<2x128xf32>
    %c22_i32 = arith.constant 22 : i32
    %235 = vector.broadcast %c22_i32 : i32 to vector<2x128xi32>
    %236 = arith.cmpi eq, %12, %235 : vector<2x128xi32>
    %c0_119 = arith.constant 0 : index
    %c0_120 = arith.constant 0 : index
    %c22 = arith.constant 22 : index
    %237 = vector.load %arg4[%c0_119, %c0_120, %c22] : memref<1x1x128xf32, #tpu.memory_space<vmem>>, vector<1x1x1xf32>
    %238 = vector.extract %237[0, 0, 0] : f32 from vector<1x1x1xf32>
    %239 = vector.broadcast %238 : f32 to vector<2x128xf32>
    %240 = arith.select %236, %239, %230 : vector<2x128xi1>, vector<2x128xf32>
    %c0_121 = arith.constant 0 : index
    %c0_122 = arith.constant 0 : index
    %c22_123 = arith.constant 22 : index
    %241 = vector.load %arg5[%c0_121, %c0_122, %c22_123] : memref<1x1x128xf32, #tpu.memory_space<vmem>>, vector<1x1x1xf32>
    %242 = vector.extract %241[0, 0, 0] : f32 from vector<1x1x1xf32>
    %243 = vector.broadcast %242 : f32 to vector<2x128xf32>
    %244 = arith.select %236, %243, %234 : vector<2x128xi1>, vector<2x128xf32>
    %c23_i32 = arith.constant 23 : i32
    %245 = vector.broadcast %c23_i32 : i32 to vector<2x128xi32>
    %246 = arith.cmpi eq, %12, %245 : vector<2x128xi32>
    %c0_124 = arith.constant 0 : index
    %c0_125 = arith.constant 0 : index
    %c23 = arith.constant 23 : index
    %247 = vector.load %arg4[%c0_124, %c0_125, %c23] : memref<1x1x128xf32, #tpu.memory_space<vmem>>, vector<1x1x1xf32>
    %248 = vector.extract %247[0, 0, 0] : f32 from vector<1x1x1xf32>
    %249 = vector.broadcast %248 : f32 to vector<2x128xf32>
    %250 = arith.select %246, %249, %240 : vector<2x128xi1>, vector<2x128xf32>
    %c0_126 = arith.constant 0 : index
    %c0_127 = arith.constant 0 : index
    %c23_128 = arith.constant 23 : index
    %251 = vector.load %arg5[%c0_126, %c0_127, %c23_128] : memref<1x1x128xf32, #tpu.memory_space<vmem>>, vector<1x1x1xf32>
    %252 = vector.extract %251[0, 0, 0] : f32 from vector<1x1x1xf32>
    %253 = vector.broadcast %252 : f32 to vector<2x128xf32>
    %254 = arith.select %246, %253, %244 : vector<2x128xi1>, vector<2x128xf32>
    %c24_i32 = arith.constant 24 : i32
    %255 = vector.broadcast %c24_i32 : i32 to vector<2x128xi32>
    %256 = arith.cmpi eq, %12, %255 : vector<2x128xi32>
    %c0_129 = arith.constant 0 : index
    %c0_130 = arith.constant 0 : index
    %c24 = arith.constant 24 : index
    %257 = vector.load %arg4[%c0_129, %c0_130, %c24] : memref<1x1x128xf32, #tpu.memory_space<vmem>>, vector<1x1x1xf32>
    %258 = vector.extract %257[0, 0, 0] : f32 from vector<1x1x1xf32>
    %259 = vector.broadcast %258 : f32 to vector<2x128xf32>
    %260 = arith.select %256, %259, %250 : vector<2x128xi1>, vector<2x128xf32>
    %c0_131 = arith.constant 0 : index
    %c0_132 = arith.constant 0 : index
    %c24_133 = arith.constant 24 : index
    %261 = vector.load %arg5[%c0_131, %c0_132, %c24_133] : memref<1x1x128xf32, #tpu.memory_space<vmem>>, vector<1x1x1xf32>
    %262 = vector.extract %261[0, 0, 0] : f32 from vector<1x1x1xf32>
    %263 = vector.broadcast %262 : f32 to vector<2x128xf32>
    %264 = arith.select %256, %263, %254 : vector<2x128xi1>, vector<2x128xf32>
    %c25_i32 = arith.constant 25 : i32
    %265 = vector.broadcast %c25_i32 : i32 to vector<2x128xi32>
    %266 = arith.cmpi eq, %12, %265 : vector<2x128xi32>
    %c0_134 = arith.constant 0 : index
    %c0_135 = arith.constant 0 : index
    %c25 = arith.constant 25 : index
    %267 = vector.load %arg4[%c0_134, %c0_135, %c25] : memref<1x1x128xf32, #tpu.memory_space<vmem>>, vector<1x1x1xf32>
    %268 = vector.extract %267[0, 0, 0] : f32 from vector<1x1x1xf32>
    %269 = vector.broadcast %268 : f32 to vector<2x128xf32>
    %270 = arith.select %266, %269, %260 : vector<2x128xi1>, vector<2x128xf32>
    %c0_136 = arith.constant 0 : index
    %c0_137 = arith.constant 0 : index
    %c25_138 = arith.constant 25 : index
    %271 = vector.load %arg5[%c0_136, %c0_137, %c25_138] : memref<1x1x128xf32, #tpu.memory_space<vmem>>, vector<1x1x1xf32>
    %272 = vector.extract %271[0, 0, 0] : f32 from vector<1x1x1xf32>
    %273 = vector.broadcast %272 : f32 to vector<2x128xf32>
    %274 = arith.select %266, %273, %264 : vector<2x128xi1>, vector<2x128xf32>
    %c26_i32 = arith.constant 26 : i32
    %275 = vector.broadcast %c26_i32 : i32 to vector<2x128xi32>
    %276 = arith.cmpi eq, %12, %275 : vector<2x128xi32>
    %c0_139 = arith.constant 0 : index
    %c0_140 = arith.constant 0 : index
    %c26 = arith.constant 26 : index
    %277 = vector.load %arg4[%c0_139, %c0_140, %c26] : memref<1x1x128xf32, #tpu.memory_space<vmem>>, vector<1x1x1xf32>
    %278 = vector.extract %277[0, 0, 0] : f32 from vector<1x1x1xf32>
    %279 = vector.broadcast %278 : f32 to vector<2x128xf32>
    %280 = arith.select %276, %279, %270 : vector<2x128xi1>, vector<2x128xf32>
    %c0_141 = arith.constant 0 : index
    %c0_142 = arith.constant 0 : index
    %c26_143 = arith.constant 26 : index
    %281 = vector.load %arg5[%c0_141, %c0_142, %c26_143] : memref<1x1x128xf32, #tpu.memory_space<vmem>>, vector<1x1x1xf32>
    %282 = vector.extract %281[0, 0, 0] : f32 from vector<1x1x1xf32>
    %283 = vector.broadcast %282 : f32 to vector<2x128xf32>
    %284 = arith.select %276, %283, %274 : vector<2x128xi1>, vector<2x128xf32>
    %c27_i32 = arith.constant 27 : i32
    %285 = vector.broadcast %c27_i32 : i32 to vector<2x128xi32>
    %286 = arith.cmpi eq, %12, %285 : vector<2x128xi32>
    %c0_144 = arith.constant 0 : index
    %c0_145 = arith.constant 0 : index
    %c27 = arith.constant 27 : index
    %287 = vector.load %arg4[%c0_144, %c0_145, %c27] : memref<1x1x128xf32, #tpu.memory_space<vmem>>, vector<1x1x1xf32>
    %288 = vector.extract %287[0, 0, 0] : f32 from vector<1x1x1xf32>
    %289 = vector.broadcast %288 : f32 to vector<2x128xf32>
    %290 = arith.select %286, %289, %280 : vector<2x128xi1>, vector<2x128xf32>
    %c0_146 = arith.constant 0 : index
    %c0_147 = arith.constant 0 : index
    %c27_148 = arith.constant 27 : index
    %291 = vector.load %arg5[%c0_146, %c0_147, %c27_148] : memref<1x1x128xf32, #tpu.memory_space<vmem>>, vector<1x1x1xf32>
    %292 = vector.extract %291[0, 0, 0] : f32 from vector<1x1x1xf32>
    %293 = vector.broadcast %292 : f32 to vector<2x128xf32>
    %294 = arith.select %286, %293, %284 : vector<2x128xi1>, vector<2x128xf32>
    %c28_i32 = arith.constant 28 : i32
    %295 = vector.broadcast %c28_i32 : i32 to vector<2x128xi32>
    %296 = arith.cmpi eq, %12, %295 : vector<2x128xi32>
    %c0_149 = arith.constant 0 : index
    %c0_150 = arith.constant 0 : index
    %c28 = arith.constant 28 : index
    %297 = vector.load %arg4[%c0_149, %c0_150, %c28] : memref<1x1x128xf32, #tpu.memory_space<vmem>>, vector<1x1x1xf32>
    %298 = vector.extract %297[0, 0, 0] : f32 from vector<1x1x1xf32>
    %299 = vector.broadcast %298 : f32 to vector<2x128xf32>
    %300 = arith.select %296, %299, %290 : vector<2x128xi1>, vector<2x128xf32>
    %c0_151 = arith.constant 0 : index
    %c0_152 = arith.constant 0 : index
    %c28_153 = arith.constant 28 : index
    %301 = vector.load %arg5[%c0_151, %c0_152, %c28_153] : memref<1x1x128xf32, #tpu.memory_space<vmem>>, vector<1x1x1xf32>
    %302 = vector.extract %301[0, 0, 0] : f32 from vector<1x1x1xf32>
    %303 = vector.broadcast %302 : f32 to vector<2x128xf32>
    %304 = arith.select %296, %303, %294 : vector<2x128xi1>, vector<2x128xf32>
    %c29_i32 = arith.constant 29 : i32
    %305 = vector.broadcast %c29_i32 : i32 to vector<2x128xi32>
    %306 = arith.cmpi eq, %12, %305 : vector<2x128xi32>
    %c0_154 = arith.constant 0 : index
    %c0_155 = arith.constant 0 : index
    %c29 = arith.constant 29 : index
    %307 = vector.load %arg4[%c0_154, %c0_155, %c29] : memref<1x1x128xf32, #tpu.memory_space<vmem>>, vector<1x1x1xf32>
    %308 = vector.extract %307[0, 0, 0] : f32 from vector<1x1x1xf32>
    %309 = vector.broadcast %308 : f32 to vector<2x128xf32>
    %310 = arith.select %306, %309, %300 : vector<2x128xi1>, vector<2x128xf32>
    %c0_156 = arith.constant 0 : index
    %c0_157 = arith.constant 0 : index
    %c29_158 = arith.constant 29 : index
    %311 = vector.load %arg5[%c0_156, %c0_157, %c29_158] : memref<1x1x128xf32, #tpu.memory_space<vmem>>, vector<1x1x1xf32>
    %312 = vector.extract %311[0, 0, 0] : f32 from vector<1x1x1xf32>
    %313 = vector.broadcast %312 : f32 to vector<2x128xf32>
    %314 = arith.select %306, %313, %304 : vector<2x128xi1>, vector<2x128xf32>
    %c30_i32 = arith.constant 30 : i32
    %315 = vector.broadcast %c30_i32 : i32 to vector<2x128xi32>
    %316 = arith.cmpi eq, %12, %315 : vector<2x128xi32>
    %c0_159 = arith.constant 0 : index
    %c0_160 = arith.constant 0 : index
    %c30 = arith.constant 30 : index
    %317 = vector.load %arg4[%c0_159, %c0_160, %c30] : memref<1x1x128xf32, #tpu.memory_space<vmem>>, vector<1x1x1xf32>
    %318 = vector.extract %317[0, 0, 0] : f32 from vector<1x1x1xf32>
    %319 = vector.broadcast %318 : f32 to vector<2x128xf32>
    %320 = arith.select %316, %319, %310 : vector<2x128xi1>, vector<2x128xf32>
    %c0_161 = arith.constant 0 : index
    %c0_162 = arith.constant 0 : index
    %c30_163 = arith.constant 30 : index
    %321 = vector.load %arg5[%c0_161, %c0_162, %c30_163] : memref<1x1x128xf32, #tpu.memory_space<vmem>>, vector<1x1x1xf32>
    %322 = vector.extract %321[0, 0, 0] : f32 from vector<1x1x1xf32>
    %323 = vector.broadcast %322 : f32 to vector<2x128xf32>
    %324 = arith.select %316, %323, %314 : vector<2x128xi1>, vector<2x128xf32>
    %c31_i32 = arith.constant 31 : i32
    %325 = vector.broadcast %c31_i32 : i32 to vector<2x128xi32>
    %326 = arith.cmpi eq, %12, %325 : vector<2x128xi32>
    %c0_164 = arith.constant 0 : index
    %c0_165 = arith.constant 0 : index
    %c31 = arith.constant 31 : index
    %327 = vector.load %arg4[%c0_164, %c0_165, %c31] : memref<1x1x128xf32, #tpu.memory_space<vmem>>, vector<1x1x1xf32>
    %328 = vector.extract %327[0, 0, 0] : f32 from vector<1x1x1xf32>
    %329 = vector.broadcast %328 : f32 to vector<2x128xf32>
    %330 = arith.select %326, %329, %320 : vector<2x128xi1>, vector<2x128xf32>
    %c0_166 = arith.constant 0 : index
    %c0_167 = arith.constant 0 : index
    %c31_168 = arith.constant 31 : index
    %331 = vector.load %arg5[%c0_166, %c0_167, %c31_168] : memref<1x1x128xf32, #tpu.memory_space<vmem>>, vector<1x1x1xf32>
    %332 = vector.extract %331[0, 0, 0] : f32 from vector<1x1x1xf32>
    %333 = vector.broadcast %332 : f32 to vector<2x128xf32>
    %334 = arith.select %326, %333, %324 : vector<2x128xi1>, vector<2x128xf32>
    %c32_i32 = arith.constant 32 : i32
    %335 = vector.broadcast %c32_i32 : i32 to vector<2x128xi32>
    %336 = arith.cmpi eq, %12, %335 : vector<2x128xi32>
    %c0_169 = arith.constant 0 : index
    %c0_170 = arith.constant 0 : index
    %c32 = arith.constant 32 : index
    %337 = vector.load %arg4[%c0_169, %c0_170, %c32] : memref<1x1x128xf32, #tpu.memory_space<vmem>>, vector<1x1x1xf32>
    %338 = vector.extract %337[0, 0, 0] : f32 from vector<1x1x1xf32>
    %339 = vector.broadcast %338 : f32 to vector<2x128xf32>
    %340 = arith.select %336, %339, %330 : vector<2x128xi1>, vector<2x128xf32>
    %c0_171 = arith.constant 0 : index
    %c0_172 = arith.constant 0 : index
    %c32_173 = arith.constant 32 : index
    %341 = vector.load %arg5[%c0_171, %c0_172, %c32_173] : memref<1x1x128xf32, #tpu.memory_space<vmem>>, vector<1x1x1xf32>
    %342 = vector.extract %341[0, 0, 0] : f32 from vector<1x1x1xf32>
    %343 = vector.broadcast %342 : f32 to vector<2x128xf32>
    %344 = arith.select %336, %343, %334 : vector<2x128xi1>, vector<2x128xf32>
    %c33_i32 = arith.constant 33 : i32
    %345 = vector.broadcast %c33_i32 : i32 to vector<2x128xi32>
    %346 = arith.cmpi eq, %12, %345 : vector<2x128xi32>
    %c0_174 = arith.constant 0 : index
    %c0_175 = arith.constant 0 : index
    %c33 = arith.constant 33 : index
    %347 = vector.load %arg4[%c0_174, %c0_175, %c33] : memref<1x1x128xf32, #tpu.memory_space<vmem>>, vector<1x1x1xf32>
    %348 = vector.extract %347[0, 0, 0] : f32 from vector<1x1x1xf32>
    %349 = vector.broadcast %348 : f32 to vector<2x128xf32>
    %350 = arith.select %346, %349, %340 : vector<2x128xi1>, vector<2x128xf32>
    %c0_176 = arith.constant 0 : index
    %c0_177 = arith.constant 0 : index
    %c33_178 = arith.constant 33 : index
    %351 = vector.load %arg5[%c0_176, %c0_177, %c33_178] : memref<1x1x128xf32, #tpu.memory_space<vmem>>, vector<1x1x1xf32>
    %352 = vector.extract %351[0, 0, 0] : f32 from vector<1x1x1xf32>
    %353 = vector.broadcast %352 : f32 to vector<2x128xf32>
    %354 = arith.select %346, %353, %344 : vector<2x128xi1>, vector<2x128xf32>
    %c34_i32 = arith.constant 34 : i32
    %355 = vector.broadcast %c34_i32 : i32 to vector<2x128xi32>
    %356 = arith.cmpi eq, %12, %355 : vector<2x128xi32>
    %c0_179 = arith.constant 0 : index
    %c0_180 = arith.constant 0 : index
    %c34 = arith.constant 34 : index
    %357 = vector.load %arg4[%c0_179, %c0_180, %c34] : memref<1x1x128xf32, #tpu.memory_space<vmem>>, vector<1x1x1xf32>
    %358 = vector.extract %357[0, 0, 0] : f32 from vector<1x1x1xf32>
    %359 = vector.broadcast %358 : f32 to vector<2x128xf32>
    %360 = arith.select %356, %359, %350 : vector<2x128xi1>, vector<2x128xf32>
    %c0_181 = arith.constant 0 : index
    %c0_182 = arith.constant 0 : index
    %c34_183 = arith.constant 34 : index
    %361 = vector.load %arg5[%c0_181, %c0_182, %c34_183] : memref<1x1x128xf32, #tpu.memory_space<vmem>>, vector<1x1x1xf32>
    %362 = vector.extract %361[0, 0, 0] : f32 from vector<1x1x1xf32>
    %363 = vector.broadcast %362 : f32 to vector<2x128xf32>
    %364 = arith.select %356, %363, %354 : vector<2x128xi1>, vector<2x128xf32>
    %c35_i32 = arith.constant 35 : i32
    %365 = vector.broadcast %c35_i32 : i32 to vector<2x128xi32>
    %366 = arith.cmpi eq, %12, %365 : vector<2x128xi32>
    %c0_184 = arith.constant 0 : index
    %c0_185 = arith.constant 0 : index
    %c35 = arith.constant 35 : index
    %367 = vector.load %arg4[%c0_184, %c0_185, %c35] : memref<1x1x128xf32, #tpu.memory_space<vmem>>, vector<1x1x1xf32>
    %368 = vector.extract %367[0, 0, 0] : f32 from vector<1x1x1xf32>
    %369 = vector.broadcast %368 : f32 to vector<2x128xf32>
    %370 = arith.select %366, %369, %360 : vector<2x128xi1>, vector<2x128xf32>
    %c0_186 = arith.constant 0 : index
    %c0_187 = arith.constant 0 : index
    %c35_188 = arith.constant 35 : index
    %371 = vector.load %arg5[%c0_186, %c0_187, %c35_188] : memref<1x1x128xf32, #tpu.memory_space<vmem>>, vector<1x1x1xf32>
    %372 = vector.extract %371[0, 0, 0] : f32 from vector<1x1x1xf32>
    %373 = vector.broadcast %372 : f32 to vector<2x128xf32>
    %374 = arith.select %366, %373, %364 : vector<2x128xi1>, vector<2x128xf32>
    %c36_i32 = arith.constant 36 : i32
    %375 = vector.broadcast %c36_i32 : i32 to vector<2x128xi32>
    %376 = arith.cmpi eq, %12, %375 : vector<2x128xi32>
    %c0_189 = arith.constant 0 : index
    %c0_190 = arith.constant 0 : index
    %c36 = arith.constant 36 : index
    %377 = vector.load %arg4[%c0_189, %c0_190, %c36] : memref<1x1x128xf32, #tpu.memory_space<vmem>>, vector<1x1x1xf32>
    %378 = vector.extract %377[0, 0, 0] : f32 from vector<1x1x1xf32>
    %379 = vector.broadcast %378 : f32 to vector<2x128xf32>
    %380 = arith.select %376, %379, %370 : vector<2x128xi1>, vector<2x128xf32>
    %c0_191 = arith.constant 0 : index
    %c0_192 = arith.constant 0 : index
    %c36_193 = arith.constant 36 : index
    %381 = vector.load %arg5[%c0_191, %c0_192, %c36_193] : memref<1x1x128xf32, #tpu.memory_space<vmem>>, vector<1x1x1xf32>
    %382 = vector.extract %381[0, 0, 0] : f32 from vector<1x1x1xf32>
    %383 = vector.broadcast %382 : f32 to vector<2x128xf32>
    %384 = arith.select %376, %383, %374 : vector<2x128xi1>, vector<2x128xf32>
    %c37_i32 = arith.constant 37 : i32
    %385 = vector.broadcast %c37_i32 : i32 to vector<2x128xi32>
    %386 = arith.cmpi eq, %12, %385 : vector<2x128xi32>
    %c0_194 = arith.constant 0 : index
    %c0_195 = arith.constant 0 : index
    %c37 = arith.constant 37 : index
    %387 = vector.load %arg4[%c0_194, %c0_195, %c37] : memref<1x1x128xf32, #tpu.memory_space<vmem>>, vector<1x1x1xf32>
    %388 = vector.extract %387[0, 0, 0] : f32 from vector<1x1x1xf32>
    %389 = vector.broadcast %388 : f32 to vector<2x128xf32>
    %390 = arith.select %386, %389, %380 : vector<2x128xi1>, vector<2x128xf32>
    %c0_196 = arith.constant 0 : index
    %c0_197 = arith.constant 0 : index
    %c37_198 = arith.constant 37 : index
    %391 = vector.load %arg5[%c0_196, %c0_197, %c37_198] : memref<1x1x128xf32, #tpu.memory_space<vmem>>, vector<1x1x1xf32>
    %392 = vector.extract %391[0, 0, 0] : f32 from vector<1x1x1xf32>
    %393 = vector.broadcast %392 : f32 to vector<2x128xf32>
    %394 = arith.select %386, %393, %384 : vector<2x128xi1>, vector<2x128xf32>
    %c38_i32 = arith.constant 38 : i32
    %395 = vector.broadcast %c38_i32 : i32 to vector<2x128xi32>
    %396 = arith.cmpi eq, %12, %395 : vector<2x128xi32>
    %c0_199 = arith.constant 0 : index
    %c0_200 = arith.constant 0 : index
    %c38 = arith.constant 38 : index
    %397 = vector.load %arg4[%c0_199, %c0_200, %c38] : memref<1x1x128xf32, #tpu.memory_space<vmem>>, vector<1x1x1xf32>
    %398 = vector.extract %397[0, 0, 0] : f32 from vector<1x1x1xf32>
    %399 = vector.broadcast %398 : f32 to vector<2x128xf32>
    %400 = arith.select %396, %399, %390 : vector<2x128xi1>, vector<2x128xf32>
    %c0_201 = arith.constant 0 : index
    %c0_202 = arith.constant 0 : index
    %c38_203 = arith.constant 38 : index
    %401 = vector.load %arg5[%c0_201, %c0_202, %c38_203] : memref<1x1x128xf32, #tpu.memory_space<vmem>>, vector<1x1x1xf32>
    %402 = vector.extract %401[0, 0, 0] : f32 from vector<1x1x1xf32>
    %403 = vector.broadcast %402 : f32 to vector<2x128xf32>
    %404 = arith.select %396, %403, %394 : vector<2x128xi1>, vector<2x128xf32>
    %c39_i32 = arith.constant 39 : i32
    %405 = vector.broadcast %c39_i32 : i32 to vector<2x128xi32>
    %406 = arith.cmpi eq, %12, %405 : vector<2x128xi32>
    %c0_204 = arith.constant 0 : index
    %c0_205 = arith.constant 0 : index
    %c39 = arith.constant 39 : index
    %407 = vector.load %arg4[%c0_204, %c0_205, %c39] : memref<1x1x128xf32, #tpu.memory_space<vmem>>, vector<1x1x1xf32>
    %408 = vector.extract %407[0, 0, 0] : f32 from vector<1x1x1xf32>
    %409 = vector.broadcast %408 : f32 to vector<2x128xf32>
    %410 = arith.select %406, %409, %400 : vector<2x128xi1>, vector<2x128xf32>
    %c0_206 = arith.constant 0 : index
    %c0_207 = arith.constant 0 : index
    %c39_208 = arith.constant 39 : index
    %411 = vector.load %arg5[%c0_206, %c0_207, %c39_208] : memref<1x1x128xf32, #tpu.memory_space<vmem>>, vector<1x1x1xf32>
    %412 = vector.extract %411[0, 0, 0] : f32 from vector<1x1x1xf32>
    %413 = vector.broadcast %412 : f32 to vector<2x128xf32>
    %414 = arith.select %406, %413, %404 : vector<2x128xi1>, vector<2x128xf32>
    %415 = arith.mulf %2, %410 : vector<2x128xf32>
    %416 = arith.addf %415, %414 : vector<2x128xf32>
    %c0_209 = arith.constant 0 : index
    %c0_210 = arith.constant 0 : index
    %c0_211 = arith.constant 0 : index
    %c0_212 = arith.constant 0 : index
    %417 = vector.load %arg7[%c0_209, %c0_210, %c0_211, %c0_212] : memref<2x1x2x128xf32, #tpu.memory_space<vmem>>, vector<1x1x2x128xf32>
    %418 = vector.shape_cast %417 : vector<1x1x2x128xf32> to vector<2x128xf32>
    %419 = vector.shape_cast %416 : vector<2x128xf32> to vector<1x1x2x128xf32>
    tpu.vector_store %arg7[%c0_209, %c0_210, %c0_211, %c0_212], %419 {strides = array<i32>} : memref<2x1x2x128xf32, #tpu.memory_space<vmem>>, vector<1x1x2x128xf32>,
    %c1_213 = arith.constant 1 : index
    %c0_214 = arith.constant 0 : index
    %c0_215 = arith.constant 0 : index
    %c0_216 = arith.constant 0 : index
    %420 = vector.load %arg3[%c1_213, %c0_214, %c0_215, %c0_216] : memref<2x1x2x128xf32, #tpu.memory_space<vmem>>, vector<1x1x2x128xf32>
    %421 = vector.shape_cast %420 : vector<1x1x2x128xf32> to vector<2x128xf32>
    %422 = vector.broadcast %0 : f32 to vector<2x128xf32>
    %423 = arith.mulf %421, %422 : vector<2x128xf32>
    %424 = math.floor %423 : vector<2x128xf32>
    %cst_217 = arith.constant 2.000000e+01 : f32
    %425 = vector.broadcast %cst_217 : f32 to vector<2x128xf32>
    %426 = arith.addf %424, %425 : vector<2x128xf32>
    %cst_218 = arith.constant 0.000000e+00 : f32
    %cst_219 = arith.constant 3.900000e+01 : f32
    %427 = vector.broadcast %cst_218 : f32 to vector<2x128xf32>
    %428 = arith.maximumf %427, %426 : vector<2x128xf32>
    %429 = vector.broadcast %cst_219 : f32 to vector<2x128xf32>
    %430 = arith.minimumf %429, %428 : vector<2x128xf32>
    %431 = arith.fptosi %430 : vector<2x128xf32> to vector<2x128xi32>
    %cst_220 = arith.constant 0.000000e+00 : f32
    %432 = vector.broadcast %cst_220 : f32 to vector<2x128xf32>
    %cst_221 = arith.constant 0.000000e+00 : f32
    %433 = vector.broadcast %cst_221 : f32 to vector<2x128xf32>
    %c0_i32_222 = arith.constant 0 : i32
    %434 = vector.broadcast %c0_i32_222 : i32 to vector<2x128xi32>
    %435 = arith.cmpi eq, %431, %434 : vector<2x128xi32>
    %c0_223 = arith.constant 0 : index
    %c0_224 = arith.constant 0 : index
    %c0_225 = arith.constant 0 : index
    %436 = vector.load %arg4[%c0_223, %c0_224, %c0_225] : memref<1x1x128xf32, #tpu.memory_space<vmem>>, vector<1x1x1xf32>
    %437 = vector.extract %436[0, 0, 0] : f32 from vector<1x1x1xf32>
    %438 = vector.broadcast %437 : f32 to vector<2x128xf32>
    %439 = arith.select %435, %438, %432 : vector<2x128xi1>, vector<2x128xf32>
    %c0_226 = arith.constant 0 : index
    %c0_227 = arith.constant 0 : index
    %c0_228 = arith.constant 0 : index
    %440 = vector.load %arg5[%c0_226, %c0_227, %c0_228] : memref<1x1x128xf32, #tpu.memory_space<vmem>>, vector<1x1x1xf32>
    %441 = vector.extract %440[0, 0, 0] : f32 from vector<1x1x1xf32>
    %442 = vector.broadcast %441 : f32 to vector<2x128xf32>
    %443 = arith.select %435, %442, %433 : vector<2x128xi1>, vector<2x128xf32>
    %c1_i32_229 = arith.constant 1 : i32
    %444 = vector.broadcast %c1_i32_229 : i32 to vector<2x128xi32>
    %445 = arith.cmpi eq, %431, %444 : vector<2x128xi32>
    %c0_230 = arith.constant 0 : index
    %c0_231 = arith.constant 0 : index
    %c1_232 = arith.constant 1 : index
    %446 = vector.load %arg4[%c0_230, %c0_231, %c1_232] : memref<1x1x128xf32, #tpu.memory_space<vmem>>, vector<1x1x1xf32>
    %447 = vector.extract %446[0, 0, 0] : f32 from vector<1x1x1xf32>
    %448 = vector.broadcast %447 : f32 to vector<2x128xf32>
    %449 = arith.select %445, %448, %439 : vector<2x128xi1>, vector<2x128xf32>
    %c0_233 = arith.constant 0 : index
    %c0_234 = arith.constant 0 : index
    %c1_235 = arith.constant 1 : index
    %450 = vector.load %arg5[%c0_233, %c0_234, %c1_235] : memref<1x1x128xf32, #tpu.memory_space<vmem>>, vector<1x1x1xf32>
    %451 = vector.extract %450[0, 0, 0] : f32 from vector<1x1x1xf32>
    %452 = vector.broadcast %451 : f32 to vector<2x128xf32>
    %453 = arith.select %445, %452, %443 : vector<2x128xi1>, vector<2x128xf32>
    %c2_i32_236 = arith.constant 2 : i32
    %454 = vector.broadcast %c2_i32_236 : i32 to vector<2x128xi32>
    %455 = arith.cmpi eq, %431, %454 : vector<2x128xi32>
    %c0_237 = arith.constant 0 : index
    %c0_238 = arith.constant 0 : index
    %c2_239 = arith.constant 2 : index
    %456 = vector.load %arg4[%c0_237, %c0_238, %c2_239] : memref<1x1x128xf32, #tpu.memory_space<vmem>>, vector<1x1x1xf32>
    %457 = vector.extract %456[0, 0, 0] : f32 from vector<1x1x1xf32>
    %458 = vector.broadcast %457 : f32 to vector<2x128xf32>
    %459 = arith.select %455, %458, %449 : vector<2x128xi1>, vector<2x128xf32>
    %c0_240 = arith.constant 0 : index
    %c0_241 = arith.constant 0 : index
    %c2_242 = arith.constant 2 : index
    %460 = vector.load %arg5[%c0_240, %c0_241, %c2_242] : memref<1x1x128xf32, #tpu.memory_space<vmem>>, vector<1x1x1xf32>
    %461 = vector.extract %460[0, 0, 0] : f32 from vector<1x1x1xf32>
    %462 = vector.broadcast %461 : f32 to vector<2x128xf32>
    %463 = arith.select %455, %462, %453 : vector<2x128xi1>, vector<2x128xf32>
    %c3_i32_243 = arith.constant 3 : i32
    %464 = vector.broadcast %c3_i32_243 : i32 to vector<2x128xi32>
    %465 = arith.cmpi eq, %431, %464 : vector<2x128xi32>
    %c0_244 = arith.constant 0 : index
    %c0_245 = arith.constant 0 : index
    %c3_246 = arith.constant 3 : index
    %466 = vector.load %arg4[%c0_244, %c0_245, %c3_246] : memref<1x1x128xf32, #tpu.memory_space<vmem>>, vector<1x1x1xf32>
    %467 = vector.extract %466[0, 0, 0] : f32 from vector<1x1x1xf32>
    %468 = vector.broadcast %467 : f32 to vector<2x128xf32>
    %469 = arith.select %465, %468, %459 : vector<2x128xi1>, vector<2x128xf32>
    %c0_247 = arith.constant 0 : index
    %c0_248 = arith.constant 0 : index
    %c3_249 = arith.constant 3 : index
    %470 = vector.load %arg5[%c0_247, %c0_248, %c3_249] : memref<1x1x128xf32, #tpu.memory_space<vmem>>, vector<1x1x1xf32>
    %471 = vector.extract %470[0, 0, 0] : f32 from vector<1x1x1xf32>
    %472 = vector.broadcast %471 : f32 to vector<2x128xf32>
    %473 = arith.select %465, %472, %463 : vector<2x128xi1>, vector<2x128xf32>
    %c4_i32_250 = arith.constant 4 : i32
    %474 = vector.broadcast %c4_i32_250 : i32 to vector<2x128xi32>
    %475 = arith.cmpi eq, %431, %474 : vector<2x128xi32>
    %c0_251 = arith.constant 0 : index
    %c0_252 = arith.constant 0 : index
    %c4_253 = arith.constant 4 : index
    %476 = vector.load %arg4[%c0_251, %c0_252, %c4_253] : memref<1x1x128xf32, #tpu.memory_space<vmem>>, vector<1x1x1xf32>
    %477 = vector.extract %476[0, 0, 0] : f32 from vector<1x1x1xf32>
    %478 = vector.broadcast %477 : f32 to vector<2x128xf32>
    %479 = arith.select %475, %478, %469 : vector<2x128xi1>, vector<2x128xf32>
    %c0_254 = arith.constant 0 : index
    %c0_255 = arith.constant 0 : index
    %c4_256 = arith.constant 4 : index
    %480 = vector.load %arg5[%c0_254, %c0_255, %c4_256] : memref<1x1x128xf32, #tpu.memory_space<vmem>>, vector<1x1x1xf32>
    %481 = vector.extract %480[0, 0, 0] : f32 from vector<1x1x1xf32>
    %482 = vector.broadcast %481 : f32 to vector<2x128xf32>
    %483 = arith.select %475, %482, %473 : vector<2x128xi1>, vector<2x128xf32>
    %c5_i32_257 = arith.constant 5 : i32
    %484 = vector.broadcast %c5_i32_257 : i32 to vector<2x128xi32>
    %485 = arith.cmpi eq, %431, %484 : vector<2x128xi32>
    %c0_258 = arith.constant 0 : index
    %c0_259 = arith.constant 0 : index
    %c5_260 = arith.constant 5 : index
    %486 = vector.load %arg4[%c0_258, %c0_259, %c5_260] : memref<1x1x128xf32, #tpu.memory_space<vmem>>, vector<1x1x1xf32>
    %487 = vector.extract %486[0, 0, 0] : f32 from vector<1x1x1xf32>
    %488 = vector.broadcast %487 : f32 to vector<2x128xf32>
    %489 = arith.select %485, %488, %479 : vector<2x128xi1>, vector<2x128xf32>
    %c0_261 = arith.constant 0 : index
    %c0_262 = arith.constant 0 : index
    %c5_263 = arith.constant 5 : index
    %490 = vector.load %arg5[%c0_261, %c0_262, %c5_263] : memref<1x1x128xf32, #tpu.memory_space<vmem>>, vector<1x1x1xf32>
    %491 = vector.extract %490[0, 0, 0] : f32 from vector<1x1x1xf32>
    %492 = vector.broadcast %491 : f32 to vector<2x128xf32>
    %493 = arith.select %485, %492, %483 : vector<2x128xi1>, vector<2x128xf32>
    %c6_i32_264 = arith.constant 6 : i32
    %494 = vector.broadcast %c6_i32_264 : i32 to vector<2x128xi32>
    %495 = arith.cmpi eq, %431, %494 : vector<2x128xi32>
    %c0_265 = arith.constant 0 : index
    %c0_266 = arith.constant 0 : index
    %c6_267 = arith.constant 6 : index
    %496 = vector.load %arg4[%c0_265, %c0_266, %c6_267] : memref<1x1x128xf32, #tpu.memory_space<vmem>>, vector<1x1x1xf32>
    %497 = vector.extract %496[0, 0, 0] : f32 from vector<1x1x1xf32>
    %498 = vector.broadcast %497 : f32 to vector<2x128xf32>
    %499 = arith.select %495, %498, %489 : vector<2x128xi1>, vector<2x128xf32>
    %c0_268 = arith.constant 0 : index
    %c0_269 = arith.constant 0 : index
    %c6_270 = arith.constant 6 : index
    %500 = vector.load %arg5[%c0_268, %c0_269, %c6_270] : memref<1x1x128xf32, #tpu.memory_space<vmem>>, vector<1x1x1xf32>
    %501 = vector.extract %500[0, 0, 0] : f32 from vector<1x1x1xf32>
    %502 = vector.broadcast %501 : f32 to vector<2x128xf32>
    %503 = arith.select %495, %502, %493 : vector<2x128xi1>, vector<2x128xf32>
    %c7_i32_271 = arith.constant 7 : i32
    %504 = vector.broadcast %c7_i32_271 : i32 to vector<2x128xi32>
    %505 = arith.cmpi eq, %431, %504 : vector<2x128xi32>
    %c0_272 = arith.constant 0 : index
    %c0_273 = arith.constant 0 : index
    %c7_274 = arith.constant 7 : index
    %506 = vector.load %arg4[%c0_272, %c0_273, %c7_274] : memref<1x1x128xf32, #tpu.memory_space<vmem>>, vector<1x1x1xf32>
    %507 = vector.extract %506[0, 0, 0] : f32 from vector<1x1x1xf32>
    %508 = vector.broadcast %507 : f32 to vector<2x128xf32>
    %509 = arith.select %505, %508, %499 : vector<2x128xi1>, vector<2x128xf32>
    %c0_275 = arith.constant 0 : index
    %c0_276 = arith.constant 0 : index
    %c7_277 = arith.constant 7 : index
    %510 = vector.load %arg5[%c0_275, %c0_276, %c7_277] : memref<1x1x128xf32, #tpu.memory_space<vmem>>, vector<1x1x1xf32>
    %511 = vector.extract %510[0, 0, 0] : f32 from vector<1x1x1xf32>
    %512 = vector.broadcast %511 : f32 to vector<2x128xf32>
    %513 = arith.select %505, %512, %503 : vector<2x128xi1>, vector<2x128xf32>
    %c8_i32_278 = arith.constant 8 : i32
    %514 = vector.broadcast %c8_i32_278 : i32 to vector<2x128xi32>
    %515 = arith.cmpi eq, %431, %514 : vector<2x128xi32>
    %c0_279 = arith.constant 0 : index
    %c0_280 = arith.constant 0 : index
    %c8_281 = arith.constant 8 : index
    %516 = vector.load %arg4[%c0_279, %c0_280, %c8_281] : memref<1x1x128xf32, #tpu.memory_space<vmem>>, vector<1x1x1xf32>
    %517 = vector.extract %516[0, 0, 0] : f32 from vector<1x1x1xf32>
    %518 = vector.broadcast %517 : f32 to vector<2x128xf32>
    %519 = arith.select %515, %518, %509 : vector<2x128xi1>, vector<2x128xf32>
    %c0_282 = arith.constant 0 : index
    %c0_283 = arith.constant 0 : index
    %c8_284 = arith.constant 8 : index
    %520 = vector.load %arg5[%c0_282, %c0_283, %c8_284] : memref<1x1x128xf32, #tpu.memory_space<vmem>>, vector<1x1x1xf32>
    %521 = vector.extract %520[0, 0, 0] : f32 from vector<1x1x1xf32>
    %522 = vector.broadcast %521 : f32 to vector<2x128xf32>
    %523 = arith.select %515, %522, %513 : vector<2x128xi1>, vector<2x128xf32>
    %c9_i32_285 = arith.constant 9 : i32
    %524 = vector.broadcast %c9_i32_285 : i32 to vector<2x128xi32>
    %525 = arith.cmpi eq, %431, %524 : vector<2x128xi32>
    %c0_286 = arith.constant 0 : index
    %c0_287 = arith.constant 0 : index
    %c9_288 = arith.constant 9 : index
    %526 = vector.load %arg4[%c0_286, %c0_287, %c9_288] : memref<1x1x128xf32, #tpu.memory_space<vmem>>, vector<1x1x1xf32>
    %527 = vector.extract %526[0, 0, 0] : f32 from vector<1x1x1xf32>
    %528 = vector.broadcast %527 : f32 to vector<2x128xf32>
    %529 = arith.select %525, %528, %519 : vector<2x128xi1>, vector<2x128xf32>
    %c0_289 = arith.constant 0 : index
    %c0_290 = arith.constant 0 : index
    %c9_291 = arith.constant 9 : index
    %530 = vector.load %arg5[%c0_289, %c0_290, %c9_291] : memref<1x1x128xf32, #tpu.memory_space<vmem>>, vector<1x1x1xf32>
    %531 = vector.extract %530[0, 0, 0] : f32 from vector<1x1x1xf32>
    %532 = vector.broadcast %531 : f32 to vector<2x128xf32>
    %533 = arith.select %525, %532, %523 : vector<2x128xi1>, vector<2x128xf32>
    %c10_i32_292 = arith.constant 10 : i32
    %534 = vector.broadcast %c10_i32_292 : i32 to vector<2x128xi32>
    %535 = arith.cmpi eq, %431, %534 : vector<2x128xi32>
    %c0_293 = arith.constant 0 : index
    %c0_294 = arith.constant 0 : index
    %c10_295 = arith.constant 10 : index
    %536 = vector.load %arg4[%c0_293, %c0_294, %c10_295] : memref<1x1x128xf32, #tpu.memory_space<vmem>>, vector<1x1x1xf32>
    %537 = vector.extract %536[0, 0, 0] : f32 from vector<1x1x1xf32>
    %538 = vector.broadcast %537 : f32 to vector<2x128xf32>
    %539 = arith.select %535, %538, %529 : vector<2x128xi1>, vector<2x128xf32>
    %c0_296 = arith.constant 0 : index
    %c0_297 = arith.constant 0 : index
    %c10_298 = arith.constant 10 : index
    %540 = vector.load %arg5[%c0_296, %c0_297, %c10_298] : memref<1x1x128xf32, #tpu.memory_space<vmem>>, vector<1x1x1xf32>
    %541 = vector.extract %540[0, 0, 0] : f32 from vector<1x1x1xf32>
    %542 = vector.broadcast %541 : f32 to vector<2x128xf32>
    %543 = arith.select %535, %542, %533 : vector<2x128xi1>, vector<2x128xf32>
    %c11_i32_299 = arith.constant 11 : i32
    %544 = vector.broadcast %c11_i32_299 : i32 to vector<2x128xi32>
    %545 = arith.cmpi eq, %431, %544 : vector<2x128xi32>
    %c0_300 = arith.constant 0 : index
    %c0_301 = arith.constant 0 : index
    %c11_302 = arith.constant 11 : index
    %546 = vector.load %arg4[%c0_300, %c0_301, %c11_302] : memref<1x1x128xf32, #tpu.memory_space<vmem>>, vector<1x1x1xf32>
    %547 = vector.extract %546[0, 0, 0] : f32 from vector<1x1x1xf32>
    %548 = vector.broadcast %547 : f32 to vector<2x128xf32>
    %549 = arith.select %545, %548, %539 : vector<2x128xi1>, vector<2x128xf32>
    %c0_303 = arith.constant 0 : index
    %c0_304 = arith.constant 0 : index
    %c11_305 = arith.constant 11 : index
    %550 = vector.load %arg5[%c0_303, %c0_304, %c11_305] : memref<1x1x128xf32, #tpu.memory_space<vmem>>, vector<1x1x1xf32>
    %551 = vector.extract %550[0, 0, 0] : f32 from vector<1x1x1xf32>
    %552 = vector.broadcast %551 : f32 to vector<2x128xf32>
    %553 = arith.select %545, %552, %543 : vector<2x128xi1>, vector<2x128xf32>
    %c12_i32_306 = arith.constant 12 : i32
    %554 = vector.broadcast %c12_i32_306 : i32 to vector<2x128xi32>
    %555 = arith.cmpi eq, %431, %554 : vector<2x128xi32>
    %c0_307 = arith.constant 0 : index
    %c0_308 = arith.constant 0 : index
    %c12_309 = arith.constant 12 : index
    %556 = vector.load %arg4[%c0_307, %c0_308, %c12_309] : memref<1x1x128xf32, #tpu.memory_space<vmem>>, vector<1x1x1xf32>
    %557 = vector.extract %556[0, 0, 0] : f32 from vector<1x1x1xf32>
    %558 = vector.broadcast %557 : f32 to vector<2x128xf32>
    %559 = arith.select %555, %558, %549 : vector<2x128xi1>, vector<2x128xf32>
    %c0_310 = arith.constant 0 : index
    %c0_311 = arith.constant 0 : index
    %c12_312 = arith.constant 12 : index
    %560 = vector.load %arg5[%c0_310, %c0_311, %c12_312] : memref<1x1x128xf32, #tpu.memory_space<vmem>>, vector<1x1x1xf32>
    %561 = vector.extract %560[0, 0, 0] : f32 from vector<1x1x1xf32>
    %562 = vector.broadcast %561 : f32 to vector<2x128xf32>
    %563 = arith.select %555, %562, %553 : vector<2x128xi1>, vector<2x128xf32>
    %c13_i32_313 = arith.constant 13 : i32
    %564 = vector.broadcast %c13_i32_313 : i32 to vector<2x128xi32>
    %565 = arith.cmpi eq, %431, %564 : vector<2x128xi32>
    %c0_314 = arith.constant 0 : index
    %c0_315 = arith.constant 0 : index
    %c13_316 = arith.constant 13 : index
    %566 = vector.load %arg4[%c0_314, %c0_315, %c13_316] : memref<1x1x128xf32, #tpu.memory_space<vmem>>, vector<1x1x1xf32>
    %567 = vector.extract %566[0, 0, 0] : f32 from vector<1x1x1xf32>
    %568 = vector.broadcast %567 : f32 to vector<2x128xf32>
    %569 = arith.select %565, %568, %559 : vector<2x128xi1>, vector<2x128xf32>
    %c0_317 = arith.constant 0 : index
    %c0_318 = arith.constant 0 : index
    %c13_319 = arith.constant 13 : index
    %570 = vector.load %arg5[%c0_317, %c0_318, %c13_319] : memref<1x1x128xf32, #tpu.memory_space<vmem>>, vector<1x1x1xf32>
    %571 = vector.extract %570[0, 0, 0] : f32 from vector<1x1x1xf32>
    %572 = vector.broadcast %571 : f32 to vector<2x128xf32>
    %573 = arith.select %565, %572, %563 : vector<2x128xi1>, vector<2x128xf32>
    %c14_i32_320 = arith.constant 14 : i32
    %574 = vector.broadcast %c14_i32_320 : i32 to vector<2x128xi32>
    %575 = arith.cmpi eq, %431, %574 : vector<2x128xi32>
    %c0_321 = arith.constant 0 : index
    %c0_322 = arith.constant 0 : index
    %c14_323 = arith.constant 14 : index
    %576 = vector.load %arg4[%c0_321, %c0_322, %c14_323] : memref<1x1x128xf32, #tpu.memory_space<vmem>>, vector<1x1x1xf32>
    %577 = vector.extract %576[0, 0, 0] : f32 from vector<1x1x1xf32>
    %578 = vector.broadcast %577 : f32 to vector<2x128xf32>
    %579 = arith.select %575, %578, %569 : vector<2x128xi1>, vector<2x128xf32>
    %c0_324 = arith.constant 0 : index
    %c0_325 = arith.constant 0 : index
    %c14_326 = arith.constant 14 : index
    %580 = vector.load %arg5[%c0_324, %c0_325, %c14_326] : memref<1x1x128xf32, #tpu.memory_space<vmem>>, vector<1x1x1xf32>
    %581 = vector.extract %580[0, 0, 0] : f32 from vector<1x1x1xf32>
    %582 = vector.broadcast %581 : f32 to vector<2x128xf32>
    %583 = arith.select %575, %582, %573 : vector<2x128xi1>, vector<2x128xf32>
    %c15_i32_327 = arith.constant 15 : i32
    %584 = vector.broadcast %c15_i32_327 : i32 to vector<2x128xi32>
    %585 = arith.cmpi eq, %431, %584 : vector<2x128xi32>
    %c0_328 = arith.constant 0 : index
    %c0_329 = arith.constant 0 : index
    %c15_330 = arith.constant 15 : index
    %586 = vector.load %arg4[%c0_328, %c0_329, %c15_330] : memref<1x1x128xf32, #tpu.memory_space<vmem>>, vector<1x1x1xf32>
    %587 = vector.extract %586[0, 0, 0] : f32 from vector<1x1x1xf32>
    %588 = vector.broadcast %587 : f32 to vector<2x128xf32>
    %589 = arith.select %585, %588, %579 : vector<2x128xi1>, vector<2x128xf32>
    %c0_331 = arith.constant 0 : index
    %c0_332 = arith.constant 0 : index
    %c15_333 = arith.constant 15 : index
    %590 = vector.load %arg5[%c0_331, %c0_332, %c15_333] : memref<1x1x128xf32, #tpu.memory_space<vmem>>, vector<1x1x1xf32>
    %591 = vector.extract %590[0, 0, 0] : f32 from vector<1x1x1xf32>
    %592 = vector.broadcast %591 : f32 to vector<2x128xf32>
    %593 = arith.select %585, %592, %583 : vector<2x128xi1>, vector<2x128xf32>
    %c16_i32_334 = arith.constant 16 : i32
    %594 = vector.broadcast %c16_i32_334 : i32 to vector<2x128xi32>
    %595 = arith.cmpi eq, %431, %594 : vector<2x128xi32>
    %c0_335 = arith.constant 0 : index
    %c0_336 = arith.constant 0 : index
    %c16_337 = arith.constant 16 : index
    %596 = vector.load %arg4[%c0_335, %c0_336, %c16_337] : memref<1x1x128xf32, #tpu.memory_space<vmem>>, vector<1x1x1xf32>
    %597 = vector.extract %596[0, 0, 0] : f32 from vector<1x1x1xf32>
    %598 = vector.broadcast %597 : f32 to vector<2x128xf32>
    %599 = arith.select %595, %598, %589 : vector<2x128xi1>, vector<2x128xf32>
    %c0_338 = arith.constant 0 : index
    %c0_339 = arith.constant 0 : index
    %c16_340 = arith.constant 16 : index
    %600 = vector.load %arg5[%c0_338, %c0_339, %c16_340] : memref<1x1x128xf32, #tpu.memory_space<vmem>>, vector<1x1x1xf32>
    %601 = vector.extract %600[0, 0, 0] : f32 from vector<1x1x1xf32>
    %602 = vector.broadcast %601 : f32 to vector<2x128xf32>
    %603 = arith.select %595, %602, %593 : vector<2x128xi1>, vector<2x128xf32>
    %c17_i32_341 = arith.constant 17 : i32
    %604 = vector.broadcast %c17_i32_341 : i32 to vector<2x128xi32>
    %605 = arith.cmpi eq, %431, %604 : vector<2x128xi32>
    %c0_342 = arith.constant 0 : index
    %c0_343 = arith.constant 0 : index
    %c17_344 = arith.constant 17 : index
    %606 = vector.load %arg4[%c0_342, %c0_343, %c17_344] : memref<1x1x128xf32, #tpu.memory_space<vmem>>, vector<1x1x1xf32>
    %607 = vector.extract %606[0, 0, 0] : f32 from vector<1x1x1xf32>
    %608 = vector.broadcast %607 : f32 to vector<2x128xf32>
    %609 = arith.select %605, %608, %599 : vector<2x128xi1>, vector<2x128xf32>
    %c0_345 = arith.constant 0 : index
    %c0_346 = arith.constant 0 : index
    %c17_347 = arith.constant 17 : index
    %610 = vector.load %arg5[%c0_345, %c0_346, %c17_347] : memref<1x1x128xf32, #tpu.memory_space<vmem>>, vector<1x1x1xf32>
    %611 = vector.extract %610[0, 0, 0] : f32 from vector<1x1x1xf32>
    %612 = vector.broadcast %611 : f32 to vector<2x128xf32>
    %613 = arith.select %605, %612, %603 : vector<2x128xi1>, vector<2x128xf32>
    %c18_i32_348 = arith.constant 18 : i32
    %614 = vector.broadcast %c18_i32_348 : i32 to vector<2x128xi32>
    %615 = arith.cmpi eq, %431, %614 : vector<2x128xi32>
    %c0_349 = arith.constant 0 : index
    %c0_350 = arith.constant 0 : index
    %c18_351 = arith.constant 18 : index
    %616 = vector.load %arg4[%c0_349, %c0_350, %c18_351] : memref<1x1x128xf32, #tpu.memory_space<vmem>>, vector<1x1x1xf32>
    %617 = vector.extract %616[0, 0, 0] : f32 from vector<1x1x1xf32>
    %618 = vector.broadcast %617 : f32 to vector<2x128xf32>
    %619 = arith.select %615, %618, %609 : vector<2x128xi1>, vector<2x128xf32>
    %c0_352 = arith.constant 0 : index
    %c0_353 = arith.constant 0 : index
    %c18_354 = arith.constant 18 : index
    %620 = vector.load %arg5[%c0_352, %c0_353, %c18_354] : memref<1x1x128xf32, #tpu.memory_space<vmem>>, vector<1x1x1xf32>
    %621 = vector.extract %620[0, 0, 0] : f32 from vector<1x1x1xf32>
    %622 = vector.broadcast %621 : f32 to vector<2x128xf32>
    %623 = arith.select %615, %622, %613 : vector<2x128xi1>, vector<2x128xf32>
    %c19_i32_355 = arith.constant 19 : i32
    %624 = vector.broadcast %c19_i32_355 : i32 to vector<2x128xi32>
    %625 = arith.cmpi eq, %431, %624 : vector<2x128xi32>
    %c0_356 = arith.constant 0 : index
    %c0_357 = arith.constant 0 : index
    %c19_358 = arith.constant 19 : index
    %626 = vector.load %arg4[%c0_356, %c0_357, %c19_358] : memref<1x1x128xf32, #tpu.memory_space<vmem>>, vector<1x1x1xf32>
    %627 = vector.extract %626[0, 0, 0] : f32 from vector<1x1x1xf32>
    %628 = vector.broadcast %627 : f32 to vector<2x128xf32>
    %629 = arith.select %625, %628, %619 : vector<2x128xi1>, vector<2x128xf32>
    %c0_359 = arith.constant 0 : index
    %c0_360 = arith.constant 0 : index
    %c19_361 = arith.constant 19 : index
    %630 = vector.load %arg5[%c0_359, %c0_360, %c19_361] : memref<1x1x128xf32, #tpu.memory_space<vmem>>, vector<1x1x1xf32>
    %631 = vector.extract %630[0, 0, 0] : f32 from vector<1x1x1xf32>
    %632 = vector.broadcast %631 : f32 to vector<2x128xf32>
    %633 = arith.select %625, %632, %623 : vector<2x128xi1>, vector<2x128xf32>
    %c20_i32_362 = arith.constant 20 : i32
    %634 = vector.broadcast %c20_i32_362 : i32 to vector<2x128xi32>
    %635 = arith.cmpi eq, %431, %634 : vector<2x128xi32>
    %c0_363 = arith.constant 0 : index
    %c0_364 = arith.constant 0 : index
    %c20_365 = arith.constant 20 : index
    %636 = vector.load %arg4[%c0_363, %c0_364, %c20_365] : memref<1x1x128xf32, #tpu.memory_space<vmem>>, vector<1x1x1xf32>
    %637 = vector.extract %636[0, 0, 0] : f32 from vector<1x1x1xf32>
    %638 = vector.broadcast %637 : f32 to vector<2x128xf32>
    %639 = arith.select %635, %638, %629 : vector<2x128xi1>, vector<2x128xf32>
    %c0_366 = arith.constant 0 : index
    %c0_367 = arith.constant 0 : index
    %c20_368 = arith.constant 20 : index
    %640 = vector.load %arg5[%c0_366, %c0_367, %c20_368] : memref<1x1x128xf32, #tpu.memory_space<vmem>>, vector<1x1x1xf32>
    %641 = vector.extract %640[0, 0, 0] : f32 from vector<1x1x1xf32>
    %642 = vector.broadcast %641 : f32 to vector<2x128xf32>
    %643 = arith.select %635, %642, %633 : vector<2x128xi1>, vector<2x128xf32>
    %c21_i32_369 = arith.constant 21 : i32
    %644 = vector.broadcast %c21_i32_369 : i32 to vector<2x128xi32>
    %645 = arith.cmpi eq, %431, %644 : vector<2x128xi32>
    %c0_370 = arith.constant 0 : index
    %c0_371 = arith.constant 0 : index
    %c21_372 = arith.constant 21 : index
    %646 = vector.load %arg4[%c0_370, %c0_371, %c21_372] : memref<1x1x128xf32, #tpu.memory_space<vmem>>, vector<1x1x1xf32>
    %647 = vector.extract %646[0, 0, 0] : f32 from vector<1x1x1xf32>
    %648 = vector.broadcast %647 : f32 to vector<2x128xf32>
    %649 = arith.select %645, %648, %639 : vector<2x128xi1>, vector<2x128xf32>
    %c0_373 = arith.constant 0 : index
    %c0_374 = arith.constant 0 : index
    %c21_375 = arith.constant 21 : index
    %650 = vector.load %arg5[%c0_373, %c0_374, %c21_375] : memref<1x1x128xf32, #tpu.memory_space<vmem>>, vector<1x1x1xf32>
    %651 = vector.extract %650[0, 0, 0] : f32 from vector<1x1x1xf32>
    %652 = vector.broadcast %651 : f32 to vector<2x128xf32>
    %653 = arith.select %645, %652, %643 : vector<2x128xi1>, vector<2x128xf32>
    %c22_i32_376 = arith.constant 22 : i32
    %654 = vector.broadcast %c22_i32_376 : i32 to vector<2x128xi32>
    %655 = arith.cmpi eq, %431, %654 : vector<2x128xi32>
    %c0_377 = arith.constant 0 : index
    %c0_378 = arith.constant 0 : index
    %c22_379 = arith.constant 22 : index
    %656 = vector.load %arg4[%c0_377, %c0_378, %c22_379] : memref<1x1x128xf32, #tpu.memory_space<vmem>>, vector<1x1x1xf32>
    %657 = vector.extract %656[0, 0, 0] : f32 from vector<1x1x1xf32>
    %658 = vector.broadcast %657 : f32 to vector<2x128xf32>
    %659 = arith.select %655, %658, %649 : vector<2x128xi1>, vector<2x128xf32>
    %c0_380 = arith.constant 0 : index
    %c0_381 = arith.constant 0 : index
    %c22_382 = arith.constant 22 : index
    %660 = vector.load %arg5[%c0_380, %c0_381, %c22_382] : memref<1x1x128xf32, #tpu.memory_space<vmem>>, vector<1x1x1xf32>
    %661 = vector.extract %660[0, 0, 0] : f32 from vector<1x1x1xf32>
    %662 = vector.broadcast %661 : f32 to vector<2x128xf32>
    %663 = arith.select %655, %662, %653 : vector<2x128xi1>, vector<2x128xf32>
    %c23_i32_383 = arith.constant 23 : i32
    %664 = vector.broadcast %c23_i32_383 : i32 to vector<2x128xi32>
    %665 = arith.cmpi eq, %431, %664 : vector<2x128xi32>
    %c0_384 = arith.constant 0 : index
    %c0_385 = arith.constant 0 : index
    %c23_386 = arith.constant 23 : index
    %666 = vector.load %arg4[%c0_384, %c0_385, %c23_386] : memref<1x1x128xf32, #tpu.memory_space<vmem>>, vector<1x1x1xf32>
    %667 = vector.extract %666[0, 0, 0] : f32 from vector<1x1x1xf32>
    %668 = vector.broadcast %667 : f32 to vector<2x128xf32>
    %669 = arith.select %665, %668, %659 : vector<2x128xi1>, vector<2x128xf32>
    %c0_387 = arith.constant 0 : index
    %c0_388 = arith.constant 0 : index
    %c23_389 = arith.constant 23 : index
    %670 = vector.load %arg5[%c0_387, %c0_388, %c23_389] : memref<1x1x128xf32, #tpu.memory_space<vmem>>, vector<1x1x1xf32>
    %671 = vector.extract %670[0, 0, 0] : f32 from vector<1x1x1xf32>
    %672 = vector.broadcast %671 : f32 to vector<2x128xf32>
    %673 = arith.select %665, %672, %663 : vector<2x128xi1>, vector<2x128xf32>
    %c24_i32_390 = arith.constant 24 : i32
    %674 = vector.broadcast %c24_i32_390 : i32 to vector<2x128xi32>
    %675 = arith.cmpi eq, %431, %674 : vector<2x128xi32>
    %c0_391 = arith.constant 0 : index
    %c0_392 = arith.constant 0 : index
    %c24_393 = arith.constant 24 : index
    %676 = vector.load %arg4[%c0_391, %c0_392, %c24_393] : memref<1x1x128xf32, #tpu.memory_space<vmem>>, vector<1x1x1xf32>
    %677 = vector.extract %676[0, 0, 0] : f32 from vector<1x1x1xf32>
    %678 = vector.broadcast %677 : f32 to vector<2x128xf32>
    %679 = arith.select %675, %678, %669 : vector<2x128xi1>, vector<2x128xf32>
    %c0_394 = arith.constant 0 : index
    %c0_395 = arith.constant 0 : index
    %c24_396 = arith.constant 24 : index
    %680 = vector.load %arg5[%c0_394, %c0_395, %c24_396] : memref<1x1x128xf32, #tpu.memory_space<vmem>>, vector<1x1x1xf32>
    %681 = vector.extract %680[0, 0, 0] : f32 from vector<1x1x1xf32>
    %682 = vector.broadcast %681 : f32 to vector<2x128xf32>
    %683 = arith.select %675, %682, %673 : vector<2x128xi1>, vector<2x128xf32>
    %c25_i32_397 = arith.constant 25 : i32
    %684 = vector.broadcast %c25_i32_397 : i32 to vector<2x128xi32>
    %685 = arith.cmpi eq, %431, %684 : vector<2x128xi32>
    %c0_398 = arith.constant 0 : index
    %c0_399 = arith.constant 0 : index
    %c25_400 = arith.constant 25 : index
    %686 = vector.load %arg4[%c0_398, %c0_399, %c25_400] : memref<1x1x128xf32, #tpu.memory_space<vmem>>, vector<1x1x1xf32>
    %687 = vector.extract %686[0, 0, 0] : f32 from vector<1x1x1xf32>
    %688 = vector.broadcast %687 : f32 to vector<2x128xf32>
    %689 = arith.select %685, %688, %679 : vector<2x128xi1>, vector<2x128xf32>
    %c0_401 = arith.constant 0 : index
    %c0_402 = arith.constant 0 : index
    %c25_403 = arith.constant 25 : index
    %690 = vector.load %arg5[%c0_401, %c0_402, %c25_403] : memref<1x1x128xf32, #tpu.memory_space<vmem>>, vector<1x1x1xf32>
    %691 = vector.extract %690[0, 0, 0] : f32 from vector<1x1x1xf32>
    %692 = vector.broadcast %691 : f32 to vector<2x128xf32>
    %693 = arith.select %685, %692, %683 : vector<2x128xi1>, vector<2x128xf32>
    %c26_i32_404 = arith.constant 26 : i32
    %694 = vector.broadcast %c26_i32_404 : i32 to vector<2x128xi32>
    %695 = arith.cmpi eq, %431, %694 : vector<2x128xi32>
    %c0_405 = arith.constant 0 : index
    %c0_406 = arith.constant 0 : index
    %c26_407 = arith.constant 26 : index
    %696 = vector.load %arg4[%c0_405, %c0_406, %c26_407] : memref<1x1x128xf32, #tpu.memory_space<vmem>>, vector<1x1x1xf32>
    %697 = vector.extract %696[0, 0, 0] : f32 from vector<1x1x1xf32>
    %698 = vector.broadcast %697 : f32 to vector<2x128xf32>
    %699 = arith.select %695, %698, %689 : vector<2x128xi1>, vector<2x128xf32>
    %c0_408 = arith.constant 0 : index
    %c0_409 = arith.constant 0 : index
    %c26_410 = arith.constant 26 : index
    %700 = vector.load %arg5[%c0_408, %c0_409, %c26_410] : memref<1x1x128xf32, #tpu.memory_space<vmem>>, vector<1x1x1xf32>
    %701 = vector.extract %700[0, 0, 0] : f32 from vector<1x1x1xf32>
    %702 = vector.broadcast %701 : f32 to vector<2x128xf32>
    %703 = arith.select %695, %702, %693 : vector<2x128xi1>, vector<2x128xf32>
    %c27_i32_411 = arith.constant 27 : i32
    %704 = vector.broadcast %c27_i32_411 : i32 to vector<2x128xi32>
    %705 = arith.cmpi eq, %431, %704 : vector<2x128xi32>
    %c0_412 = arith.constant 0 : index
    %c0_413 = arith.constant 0 : index
    %c27_414 = arith.constant 27 : index
    %706 = vector.load %arg4[%c0_412, %c0_413, %c27_414] : memref<1x1x128xf32, #tpu.memory_space<vmem>>, vector<1x1x1xf32>
    %707 = vector.extract %706[0, 0, 0] : f32 from vector<1x1x1xf32>
    %708 = vector.broadcast %707 : f32 to vector<2x128xf32>
    %709 = arith.select %705, %708, %699 : vector<2x128xi1>, vector<2x128xf32>
    %c0_415 = arith.constant 0 : index
    %c0_416 = arith.constant 0 : index
    %c27_417 = arith.constant 27 : index
    %710 = vector.load %arg5[%c0_415, %c0_416, %c27_417] : memref<1x1x128xf32, #tpu.memory_space<vmem>>, vector<1x1x1xf32>
    %711 = vector.extract %710[0, 0, 0] : f32 from vector<1x1x1xf32>
    %712 = vector.broadcast %711 : f32 to vector<2x128xf32>
    %713 = arith.select %705, %712, %703 : vector<2x128xi1>, vector<2x128xf32>
    %c28_i32_418 = arith.constant 28 : i32
    %714 = vector.broadcast %c28_i32_418 : i32 to vector<2x128xi32>
    %715 = arith.cmpi eq, %431, %714 : vector<2x128xi32>
    %c0_419 = arith.constant 0 : index
    %c0_420 = arith.constant 0 : index
    %c28_421 = arith.constant 28 : index
    %716 = vector.load %arg4[%c0_419, %c0_420, %c28_421] : memref<1x1x128xf32, #tpu.memory_space<vmem>>, vector<1x1x1xf32>
    %717 = vector.extract %716[0, 0, 0] : f32 from vector<1x1x1xf32>
    %718 = vector.broadcast %717 : f32 to vector<2x128xf32>
    %719 = arith.select %715, %718, %709 : vector<2x128xi1>, vector<2x128xf32>
    %c0_422 = arith.constant 0 : index
    %c0_423 = arith.constant 0 : index
    %c28_424 = arith.constant 28 : index
    %720 = vector.load %arg5[%c0_422, %c0_423, %c28_424] : memref<1x1x128xf32, #tpu.memory_space<vmem>>, vector<1x1x1xf32>
    %721 = vector.extract %720[0, 0, 0] : f32 from vector<1x1x1xf32>
    %722 = vector.broadcast %721 : f32 to vector<2x128xf32>
    %723 = arith.select %715, %722, %713 : vector<2x128xi1>, vector<2x128xf32>
    %c29_i32_425 = arith.constant 29 : i32
    %724 = vector.broadcast %c29_i32_425 : i32 to vector<2x128xi32>
    %725 = arith.cmpi eq, %431, %724 : vector<2x128xi32>
    %c0_426 = arith.constant 0 : index
    %c0_427 = arith.constant 0 : index
    %c29_428 = arith.constant 29 : index
    %726 = vector.load %arg4[%c0_426, %c0_427, %c29_428] : memref<1x1x128xf32, #tpu.memory_space<vmem>>, vector<1x1x1xf32>
    %727 = vector.extract %726[0, 0, 0] : f32 from vector<1x1x1xf32>
    %728 = vector.broadcast %727 : f32 to vector<2x128xf32>
    %729 = arith.select %725, %728, %719 : vector<2x128xi1>, vector<2x128xf32>
    %c0_429 = arith.constant 0 : index
    %c0_430 = arith.constant 0 : index
    %c29_431 = arith.constant 29 : index
    %730 = vector.load %arg5[%c0_429, %c0_430, %c29_431] : memref<1x1x128xf32, #tpu.memory_space<vmem>>, vector<1x1x1xf32>
    %731 = vector.extract %730[0, 0, 0] : f32 from vector<1x1x1xf32>
    %732 = vector.broadcast %731 : f32 to vector<2x128xf32>
    %733 = arith.select %725, %732, %723 : vector<2x128xi1>, vector<2x128xf32>
    %c30_i32_432 = arith.constant 30 : i32
    %734 = vector.broadcast %c30_i32_432 : i32 to vector<2x128xi32>
    %735 = arith.cmpi eq, %431, %734 : vector<2x128xi32>
    %c0_433 = arith.constant 0 : index
    %c0_434 = arith.constant 0 : index
    %c30_435 = arith.constant 30 : index
    %736 = vector.load %arg4[%c0_433, %c0_434, %c30_435] : memref<1x1x128xf32, #tpu.memory_space<vmem>>, vector<1x1x1xf32>
    %737 = vector.extract %736[0, 0, 0] : f32 from vector<1x1x1xf32>
    %738 = vector.broadcast %737 : f32 to vector<2x128xf32>
    %739 = arith.select %735, %738, %729 : vector<2x128xi1>, vector<2x128xf32>
    %c0_436 = arith.constant 0 : index
    %c0_437 = arith.constant 0 : index
    %c30_438 = arith.constant 30 : index
    %740 = vector.load %arg5[%c0_436, %c0_437, %c30_438] : memref<1x1x128xf32, #tpu.memory_space<vmem>>, vector<1x1x1xf32>
    %741 = vector.extract %740[0, 0, 0] : f32 from vector<1x1x1xf32>
    %742 = vector.broadcast %741 : f32 to vector<2x128xf32>
    %743 = arith.select %735, %742, %733 : vector<2x128xi1>, vector<2x128xf32>
    %c31_i32_439 = arith.constant 31 : i32
    %744 = vector.broadcast %c31_i32_439 : i32 to vector<2x128xi32>
    %745 = arith.cmpi eq, %431, %744 : vector<2x128xi32>
    %c0_440 = arith.constant 0 : index
    %c0_441 = arith.constant 0 : index
    %c31_442 = arith.constant 31 : index
    %746 = vector.load %arg4[%c0_440, %c0_441, %c31_442] : memref<1x1x128xf32, #tpu.memory_space<vmem>>, vector<1x1x1xf32>
    %747 = vector.extract %746[0, 0, 0] : f32 from vector<1x1x1xf32>
    %748 = vector.broadcast %747 : f32 to vector<2x128xf32>
    %749 = arith.select %745, %748, %739 : vector<2x128xi1>, vector<2x128xf32>
    %c0_443 = arith.constant 0 : index
    %c0_444 = arith.constant 0 : index
    %c31_445 = arith.constant 31 : index
    %750 = vector.load %arg5[%c0_443, %c0_444, %c31_445] : memref<1x1x128xf32, #tpu.memory_space<vmem>>, vector<1x1x1xf32>
    %751 = vector.extract %750[0, 0, 0] : f32 from vector<1x1x1xf32>
    %752 = vector.broadcast %751 : f32 to vector<2x128xf32>
    %753 = arith.select %745, %752, %743 : vector<2x128xi1>, vector<2x128xf32>
    %c32_i32_446 = arith.constant 32 : i32
    %754 = vector.broadcast %c32_i32_446 : i32 to vector<2x128xi32>
    %755 = arith.cmpi eq, %431, %754 : vector<2x128xi32>
    %c0_447 = arith.constant 0 : index
    %c0_448 = arith.constant 0 : index
    %c32_449 = arith.constant 32 : index
    %756 = vector.load %arg4[%c0_447, %c0_448, %c32_449] : memref<1x1x128xf32, #tpu.memory_space<vmem>>, vector<1x1x1xf32>
    %757 = vector.extract %756[0, 0, 0] : f32 from vector<1x1x1xf32>
    %758 = vector.broadcast %757 : f32 to vector<2x128xf32>
    %759 = arith.select %755, %758, %749 : vector<2x128xi1>, vector<2x128xf32>
    %c0_450 = arith.constant 0 : index
    %c0_451 = arith.constant 0 : index
    %c32_452 = arith.constant 32 : index
    %760 = vector.load %arg5[%c0_450, %c0_451, %c32_452] : memref<1x1x128xf32, #tpu.memory_space<vmem>>, vector<1x1x1xf32>
    %761 = vector.extract %760[0, 0, 0] : f32 from vector<1x1x1xf32>
    %762 = vector.broadcast %761 : f32 to vector<2x128xf32>
    %763 = arith.select %755, %762, %753 : vector<2x128xi1>, vector<2x128xf32>
    %c33_i32_453 = arith.constant 33 : i32
    %764 = vector.broadcast %c33_i32_453 : i32 to vector<2x128xi32>
    %765 = arith.cmpi eq, %431, %764 : vector<2x128xi32>
    %c0_454 = arith.constant 0 : index
    %c0_455 = arith.constant 0 : index
    %c33_456 = arith.constant 33 : index
    %766 = vector.load %arg4[%c0_454, %c0_455, %c33_456] : memref<1x1x128xf32, #tpu.memory_space<vmem>>, vector<1x1x1xf32>
    %767 = vector.extract %766[0, 0, 0] : f32 from vector<1x1x1xf32>
    %768 = vector.broadcast %767 : f32 to vector<2x128xf32>
    %769 = arith.select %765, %768, %759 : vector<2x128xi1>, vector<2x128xf32>
    %c0_457 = arith.constant 0 : index
    %c0_458 = arith.constant 0 : index
    %c33_459 = arith.constant 33 : index
    %770 = vector.load %arg5[%c0_457, %c0_458, %c33_459] : memref<1x1x128xf32, #tpu.memory_space<vmem>>, vector<1x1x1xf32>
    %771 = vector.extract %770[0, 0, 0] : f32 from vector<1x1x1xf32>
    %772 = vector.broadcast %771 : f32 to vector<2x128xf32>
    %773 = arith.select %765, %772, %763 : vector<2x128xi1>, vector<2x128xf32>
    %c34_i32_460 = arith.constant 34 : i32
    %774 = vector.broadcast %c34_i32_460 : i32 to vector<2x128xi32>
    %775 = arith.cmpi eq, %431, %774 : vector<2x128xi32>
    %c0_461 = arith.constant 0 : index
    %c0_462 = arith.constant 0 : index
    %c34_463 = arith.constant 34 : index
    %776 = vector.load %arg4[%c0_461, %c0_462, %c34_463] : memref<1x1x128xf32, #tpu.memory_space<vmem>>, vector<1x1x1xf32>
    %777 = vector.extract %776[0, 0, 0] : f32 from vector<1x1x1xf32>
    %778 = vector.broadcast %777 : f32 to vector<2x128xf32>
    %779 = arith.select %775, %778, %769 : vector<2x128xi1>, vector<2x128xf32>
    %c0_464 = arith.constant 0 : index
    %c0_465 = arith.constant 0 : index
    %c34_466 = arith.constant 34 : index
    %780 = vector.load %arg5[%c0_464, %c0_465, %c34_466] : memref<1x1x128xf32, #tpu.memory_space<vmem>>, vector<1x1x1xf32>
    %781 = vector.extract %780[0, 0, 0] : f32 from vector<1x1x1xf32>
    %782 = vector.broadcast %781 : f32 to vector<2x128xf32>
    %783 = arith.select %775, %782, %773 : vector<2x128xi1>, vector<2x128xf32>
    %c35_i32_467 = arith.constant 35 : i32
    %784 = vector.broadcast %c35_i32_467 : i32 to vector<2x128xi32>
    %785 = arith.cmpi eq, %431, %784 : vector<2x128xi32>
    %c0_468 = arith.constant 0 : index
    %c0_469 = arith.constant 0 : index
    %c35_470 = arith.constant 35 : index
    %786 = vector.load %arg4[%c0_468, %c0_469, %c35_470] : memref<1x1x128xf32, #tpu.memory_space<vmem>>, vector<1x1x1xf32>
    %787 = vector.extract %786[0, 0, 0] : f32 from vector<1x1x1xf32>
    %788 = vector.broadcast %787 : f32 to vector<2x128xf32>
    %789 = arith.select %785, %788, %779 : vector<2x128xi1>, vector<2x128xf32>
    %c0_471 = arith.constant 0 : index
    %c0_472 = arith.constant 0 : index
    %c35_473 = arith.constant 35 : index
    %790 = vector.load %arg5[%c0_471, %c0_472, %c35_473] : memref<1x1x128xf32, #tpu.memory_space<vmem>>, vector<1x1x1xf32>
    %791 = vector.extract %790[0, 0, 0] : f32 from vector<1x1x1xf32>
    %792 = vector.broadcast %791 : f32 to vector<2x128xf32>
    %793 = arith.select %785, %792, %783 : vector<2x128xi1>, vector<2x128xf32>
    %c36_i32_474 = arith.constant 36 : i32
    %794 = vector.broadcast %c36_i32_474 : i32 to vector<2x128xi32>
    %795 = arith.cmpi eq, %431, %794 : vector<2x128xi32>
    %c0_475 = arith.constant 0 : index
    %c0_476 = arith.constant 0 : index
    %c36_477 = arith.constant 36 : index
    %796 = vector.load %arg4[%c0_475, %c0_476, %c36_477] : memref<1x1x128xf32, #tpu.memory_space<vmem>>, vector<1x1x1xf32>
    %797 = vector.extract %796[0, 0, 0] : f32 from vector<1x1x1xf32>
    %798 = vector.broadcast %797 : f32 to vector<2x128xf32>
    %799 = arith.select %795, %798, %789 : vector<2x128xi1>, vector<2x128xf32>
    %c0_478 = arith.constant 0 : index
    %c0_479 = arith.constant 0 : index
    %c36_480 = arith.constant 36 : index
    %800 = vector.load %arg5[%c0_478, %c0_479, %c36_480] : memref<1x1x128xf32, #tpu.memory_space<vmem>>, vector<1x1x1xf32>
    %801 = vector.extract %800[0, 0, 0] : f32 from vector<1x1x1xf32>
    %802 = vector.broadcast %801 : f32 to vector<2x128xf32>
    %803 = arith.select %795, %802, %793 : vector<2x128xi1>, vector<2x128xf32>
    %c37_i32_481 = arith.constant 37 : i32
    %804 = vector.broadcast %c37_i32_481 : i32 to vector<2x128xi32>
    %805 = arith.cmpi eq, %431, %804 : vector<2x128xi32>
    %c0_482 = arith.constant 0 : index
    %c0_483 = arith.constant 0 : index
    %c37_484 = arith.constant 37 : index
    %806 = vector.load %arg4[%c0_482, %c0_483, %c37_484] : memref<1x1x128xf32, #tpu.memory_space<vmem>>, vector<1x1x1xf32>
    %807 = vector.extract %806[0, 0, 0] : f32 from vector<1x1x1xf32>
    %808 = vector.broadcast %807 : f32 to vector<2x128xf32>
    %809 = arith.select %805, %808, %799 : vector<2x128xi1>, vector<2x128xf32>
    %c0_485 = arith.constant 0 : index
    %c0_486 = arith.constant 0 : index
    %c37_487 = arith.constant 37 : index
    %810 = vector.load %arg5[%c0_485, %c0_486, %c37_487] : memref<1x1x128xf32, #tpu.memory_space<vmem>>, vector<1x1x1xf32>
    %811 = vector.extract %810[0, 0, 0] : f32 from vector<1x1x1xf32>
    %812 = vector.broadcast %811 : f32 to vector<2x128xf32>
    %813 = arith.select %805, %812, %803 : vector<2x128xi1>, vector<2x128xf32>
    %c38_i32_488 = arith.constant 38 : i32
    %814 = vector.broadcast %c38_i32_488 : i32 to vector<2x128xi32>
    %815 = arith.cmpi eq, %431, %814 : vector<2x128xi32>
    %c0_489 = arith.constant 0 : index
    %c0_490 = arith.constant 0 : index
    %c38_491 = arith.constant 38 : index
    %816 = vector.load %arg4[%c0_489, %c0_490, %c38_491] : memref<1x1x128xf32, #tpu.memory_space<vmem>>, vector<1x1x1xf32>
    %817 = vector.extract %816[0, 0, 0] : f32 from vector<1x1x1xf32>
    %818 = vector.broadcast %817 : f32 to vector<2x128xf32>
    %819 = arith.select %815, %818, %809 : vector<2x128xi1>, vector<2x128xf32>
    %c0_492 = arith.constant 0 : index
    %c0_493 = arith.constant 0 : index
    %c38_494 = arith.constant 38 : index
    %820 = vector.load %arg5[%c0_492, %c0_493, %c38_494] : memref<1x1x128xf32, #tpu.memory_space<vmem>>, vector<1x1x1xf32>
    %821 = vector.extract %820[0, 0, 0] : f32 from vector<1x1x1xf32>
    %822 = vector.broadcast %821 : f32 to vector<2x128xf32>
    %823 = arith.select %815, %822, %813 : vector<2x128xi1>, vector<2x128xf32>
    %c39_i32_495 = arith.constant 39 : i32
    %824 = vector.broadcast %c39_i32_495 : i32 to vector<2x128xi32>
    %825 = arith.cmpi eq, %431, %824 : vector<2x128xi32>
    %c0_496 = arith.constant 0 : index
    %c0_497 = arith.constant 0 : index
    %c39_498 = arith.constant 39 : index
    %826 = vector.load %arg4[%c0_496, %c0_497, %c39_498] : memref<1x1x128xf32, #tpu.memory_space<vmem>>, vector<1x1x1xf32>
    %827 = vector.extract %826[0, 0, 0] : f32 from vector<1x1x1xf32>
    %828 = vector.broadcast %827 : f32 to vector<2x128xf32>
    %829 = arith.select %825, %828, %819 : vector<2x128xi1>, vector<2x128xf32>
    %c0_499 = arith.constant 0 : index
    %c0_500 = arith.constant 0 : index
    %c39_501 = arith.constant 39 : index
    %830 = vector.load %arg5[%c0_499, %c0_500, %c39_501] : memref<1x1x128xf32, #tpu.memory_space<vmem>>, vector<1x1x1xf32>
    %831 = vector.extract %830[0, 0, 0] : f32 from vector<1x1x1xf32>
    %832 = vector.broadcast %831 : f32 to vector<2x128xf32>
    %833 = arith.select %825, %832, %823 : vector<2x128xi1>, vector<2x128xf32>
    %834 = arith.mulf %421, %829 : vector<2x128xf32>
    %835 = arith.addf %834, %833 : vector<2x128xf32>
    %c1_502 = arith.constant 1 : index
    %c0_503 = arith.constant 0 : index
    %c0_504 = arith.constant 0 : index
    %c0_505 = arith.constant 0 : index
    %836 = vector.load %arg7[%c1_502, %c0_503, %c0_504, %c0_505] : memref<2x1x2x128xf32, #tpu.memory_space<vmem>>, vector<1x1x2x128xf32>
    %837 = vector.shape_cast %836 : vector<1x1x2x128xf32> to vector<2x128xf32>
    %838 = vector.shape_cast %835 : vector<2x128xf32> to vector<1x1x2x128xf32>
    tpu.vector_store %arg7[%c1_502, %c0_503, %c0_504, %c0_505], %838 {strides = array<i32>} : memref<2x1x2x128xf32, #tpu.memory_space<vmem>>, vector<1x1x2x128xf32>,
    return
  }
  func.func @transform_0(%arg0: i32, %arg1: i32, %arg2: i32) -> (i32, i32, i32, i32) {
    %c0_i32 = arith.constant 0 : i32
    %c0_i32_0 = arith.constant 0 : i32
    return %arg1, %arg0, %arg2, %c0_i32 : i32, i32, i32, i32
  }
  func.func @transform_1(%arg0: i32, %arg1: i32, %arg2: i32) -> (i32, i32, i32) {
    %c0_i32 = arith.constant 0 : i32
    %c0_i32_0 = arith.constant 0 : i32
    %c0_i32_1 = arith.constant 0 : i32
    return %arg0, %c0_i32, %c0_i32_0 : i32, i32, i32
  }
  func.func @transform_2(%arg0: i32, %arg1: i32, %arg2: i32) -> (i32, i32, i32) {
    %c0_i32 = arith.constant 0 : i32
    %c0_i32_0 = arith.constant 0 : i32
    %c0_i32_1 = arith.constant 0 : i32
    return %arg0, %c0_i32, %c0_i32_0 : i32, i32, i32
  }
  func.func @transform_3(%arg0: i32, %arg1: i32, %arg2: i32) -> i32 {
    %c0_i32 = arith.constant 0 : i32
    %c0_i32_0 = arith.constant 0 : i32
    return %c0_i32 : i32
  }
  func.func @transform_4(%arg0: i32, %arg1: i32, %arg2: i32) -> (i32, i32, i32, i32) {
    %c0_i32 = arith.constant 0 : i32
    %c0_i32_0 = arith.constant 0 : i32
    return %arg1, %arg0, %arg2, %c0_i32 : i32, i32, i32, i32
  }
}

</mosaic_0001>

<llo_original>
// kernel: tpu_custom_call.1
$region0: #{tpu_custom_call.1}
  #allocation0 [shape = 'u32[]', space=smem, size = 0x4, offset = 0x4, fixed_abs, tag = 'smem constant byte address 0x4 - core index']
  #allocation1 [shape = 'u32[144,128]{1,0:T(1,128)}', space=vmem, size = 0x12000, scoped, tag = 'internal scratch']
  #allocation2 [shape = 'f32[1]{0:T(128)S(6)}', space=smem, size = 0x200, scoped, tag = 'scoped memory for tpu_custom_call.1']
  %s0 = inlined_call_operand.hbm [shape: f32[1,1,8,128], index: 0, kind: input, shape index: {}]
  %s1 = inlined_call_operand.vmem [shape: f32[1,1,128], index: 1, kind: input, shape index: {}]
  %s2 = inlined_call_operand.vmem [shape: f32[1,1,128], index: 2, kind: input, shape index: {}]
  %s3 = inlined_call_operand.<no memory space> [shape: f32[1], index: 3, kind: input, shape index: {}]
  %s4 = inlined_call_operand.hbm [shape: f32[1,1,8,128], index: 4, kind: output, shape index: {}]
  %s5 = sld [smem:[#allocation0]]
  $region30: #{tpu_custom_call.1} parent=0
    _
  %s7 = ssub.s32 1, %s5
  %s8 = scalar_select 0, %s7, %s5
  %9 = sst [smem:[#allocation2]] %s3
  $region1: #{tpu_custom_call.1} parent=0
    #allocation3 [shape = 'u8[4096]{0}', space=vmem, size = 0x1000, scoped, tag = 'input window, operand 0, single buffered']
    #allocation4 [shape = 's32[1]{0}', space=sflag, size = 0x4, scoped, tag = 'scoped memory for tpu_custom_call.1']
    #allocation5 [shape = 's32[1]{0}', space=sflag, size = 0x4, scoped, tag = 'scoped memory for tpu_custom_call.1']
    #allocation6 [shape = 'u8[4096]{0}', space=vmem, size = 0x1000, scoped, tag = 'output window, operand 0, single buffered']
    %10 = vsyncpa [#allocation4], 0
    %11 = vsyncpa [#allocation5], 0
    // Predicated region
    $region2: #{tpu_custom_call.1} parent=1 // pred_check
      _
    $region3: #{tpu_custom_call.1} parent=1 // pred_check_branch
      %13 = sbr.rel (0) target = $region5
    $region4: #{tpu_custom_call.1} parent=1 // pred_region
      %s15 = ssub.s32 128, 128
      %16 = vsyncadd [#allocation4], %s15
      %s18 = sshll.u32 [#allocation3], 4
      %s19 = int_to_ptr.vmem [resolvable:$true] %s18
      %21 = dma.hbm_to_vmem [thread:$0]  %s0, 128, %s19, [#allocation4]
    $region5: #{tpu_custom_call.1} parent=1 // pred_fallthru
      _
    // Predicated region
    $region6: #{tpu_custom_call.1} parent=1 // pred_check
      _
    $region7: #{tpu_custom_call.1} parent=1 // pred_check_branch
      %23 = sbr.rel (0) target = $region9
    $region8: #{tpu_custom_call.1} parent=1 // pred_region
      _
    $region9: #{tpu_custom_call.1} parent=1 // pred_fallthru
      _
    // Predicated region
    $region10: #{tpu_custom_call.1} parent=1 // pred_check
      _
    $region11: #{tpu_custom_call.1} parent=1 // pred_check_branch
      %25 = sbr.rel (0) target = $region13
    $region12: #{tpu_custom_call.1} parent=1 // pred_region
      _
    $region13: #{tpu_custom_call.1} parent=1 // pred_fallthru
      _
    // Predicated region
    $region14: #{tpu_custom_call.1} parent=1 // pred_check
      _
    $region15: #{tpu_custom_call.1} parent=1 // pred_check_branch
      %27 = sbr.rel (0) target = $region17
    $region16: #{tpu_custom_call.1} parent=1 // pred_region
      _
    $region17: #{tpu_custom_call.1} parent=1 // pred_fallthru
      _
    // Predicated region
    $region18: #{tpu_custom_call.1} parent=1 // pred_check
      _
    $region19: #{tpu_custom_call.1} parent=1 // pred_check_branch
      %29 = sbr.rel (0) target = $region21
    $region20: #{tpu_custom_call.1} parent=1 // pred_region
      %30 = dma.done [#allocation4], 128
    $region21: #{tpu_custom_call.1} parent=1 // pred_fallthru
      _
    %s31 = sld [smem:[#allocation2]]
    %v32 = vld [vmem:[%s1] sm:$0x1]
    %v34 = vlaneseq
    %v35 = vshrl.u32 %v34, 7
    %v36 = vsub.s32 0, %v35
    %v37 = vrot.slane %v32, %v36
    %v39 = vld [vmem:[%s2] sm:$0x1]
    %v41 = vlaneseq
    %v42 = vshrl.u32 %v41, 7
    %v43 = vsub.s32 0, %v42
    %v44 = vrot.slane %v39, %v43
    %v46 = vld [vmem:[#allocation3] sm:$0xff]
    %v47 = vstv %s31
    %v48 = vmul.f32 %v46, %v47
    %v49 = vfloor.f32 %v48
    %v50 = vadd.f32 %v49, 2.0
    %v51 = vmax.f32 %v50, 0.0
    %v52 = vmin.f32 %v51, 3.0
    %v53 = vcvt.f32.s32.to.zero.pseudo %v52
    %vm54 = vcmp.lt.s32.totalorder %v53, 0
    %v55 = vadd.s32 %v53, 128
    %v56 = vsel %vm54, %v55, %v53
    %57 = vset.pattern.permute.xlu0 %v56
    %58 = vperm.xlu0 %57, %v37
    %v59 = vpop.permute.xlu0 %58
    %60 = vset.pattern.permute.xlu0 %v56
    %61 = vperm.xlu0 %60, %v44
    %v62 = vpop.permute.xlu0 %61
    %v63 = vmul.f32 %v46, %v59
    %v64 = vadd.f32 %v63, %v62
    %65 = vst [vmem:[#allocation6] sm:$0xff] %v64
    // Predicated region
    $region22: #{tpu_custom_call.1} parent=1 // pred_check
      _
    $region23: #{tpu_custom_call.1} parent=1 // pred_check_branch
      %67 = sbr.rel (0) target = $region25
    $region24: #{tpu_custom_call.1} parent=1 // pred_region
      %s69 = ssub.s32 128, 128
      %70 = vsyncadd [#allocation5], %s69
      %s72 = sshll.u32 [#allocation6], 4
      %s73 = int_to_ptr.vmem [resolvable:$true] %s72
      %75 = dma.vmem_to_hbm [thread:$0]  %s73, 128, %s4, [#allocation5]
    $region25: #{tpu_custom_call.1} parent=1 // pred_fallthru
      _
    // Predicated region
    $region26: #{tpu_custom_call.1} parent=1 // pred_check
      _
    $region27: #{tpu_custom_call.1} parent=1 // pred_check_branch
      %77 = sbr.rel (0) target = $region29
    $region28: #{tpu_custom_call.1} parent=1 // pred_region
      %78 = dma.done [#allocation5], 128
    $region29: #{tpu_custom_call.1} parent=1 // pred_fallthru
      _
    %79 = vsyncpa [#allocation4], 1
    %80 = vsyncpa [#allocation5], 1

// kernel: tpu_custom_call.1
$region0: #{tpu_custom_call.1}
  #allocation0 [shape = 'u32[]', space=smem, size = 0x4, offset = 0x4, fixed_abs, tag = 'smem constant byte address 0x4 - core index']
  #allocation1 [shape = 'u32[144,128]{1,0:T(1,128)}', space=vmem, size = 0x12000, scoped, tag = 'internal scratch']
  #allocation2 [shape = 'f32[1]{0:T(128)S(6)}', space=smem, size = 0x200, scoped, tag = 'scoped memory for tpu_custom_call.1']
  %s0 = inlined_call_operand.hbm [shape: f32[2,8,2,128], index: 0, kind: input, shape index: {}]
  %s1 = inlined_call_operand.hbm [shape: f32[8,1,128], index: 1, kind: input, shape index: {}]
  %s2 = inlined_call_operand.vmem [shape: f32[8,1,128], index: 2, kind: input, shape index: {}]
  %s3 = inlined_call_operand.<no memory space> [shape: f32[1], index: 3, kind: input, shape index: {}]
  %s4 = inlined_call_operand.hbm [shape: f32[2,8,2,128], index: 4, kind: output, shape index: {}]
  %s5 = sld [smem:[#allocation0]]
  $region57: #{tpu_custom_call.1} parent=0
    _
  %s7 = ssub.s32 1, %s5
  %s8 = scalar_select 0, %s7, %s5
  %9 = sst [smem:[#allocation2]] %s3
  $region1: #{tpu_custom_call.1} parent=0
    #allocation3 [shape = 'u8[4096]{0}', space=vmem, size = 0x1000, scoped, tag = 'input window, operand 0']
    #allocation4 [shape = 's32[2]{0}', space=sflag, size = 0x8, scoped, tag = 'scoped memory for tpu_custom_call.1']
    #allocation5 [shape = 's32[2]{0}', space=sflag, size = 0x8, scoped, tag = 'scoped memory for tpu_custom_call.1']
    #allocation6 [shape = 'u8[1024]{0}', space=vmem, size = 0x400, scoped, tag = 'input window, operand 1']
    #allocation7 [shape = 's32[2]{0}', space=sflag, size = 0x8, scoped, tag = 'scoped memory for tpu_custom_call.1']
    #allocation8 [shape = 'u8[4096]{0}', space=vmem, size = 0x1000, scoped, tag = 'output window, operand 0']
    %10 = vsyncpa [#allocation4], 0
    %s11 = scalar_lea.sflag [#allocation4], 1
    %12 = vsyncpa %s11, 0
    %13 = vsyncpa [#allocation7], 0
    %s14 = scalar_lea.sflag [#allocation7], 1
    %15 = vsyncpa %s14, 0
    %16 = vsyncpa [#allocation5], 0
    %s17 = scalar_lea.sflag [#allocation5], 1
    %18 = vsyncpa %s17, 0
    loop: start=0, step=1, limit=10
    $region2: #{tpu_custom_call.1} parent=1 // loop_pre_header
      _
    $region3: #{tpu_custom_call.1} parent=1 // loop_header
      %s20 = sphi 0, %s24
      %p21 = scmp.ge.s32.totalorder %s20, 10
      %s27 = sphi 0, %s46
      %s28 = sphi 0, %s42
      %s29 = sphi 0, %s38
      %s30 = sphi 0, %s27
      %s31 = sphi 0, %s28
      %s32 = sphi 0, %s29
      %s33 = sphi 0, %s30
      %s34 = sphi 0, %s31
      %s35 = sphi 0, %s32
      %s53 = sphi 0, %s55
      %s56 = sphi 0, %s53
      %s57 = sphi 0, %s56
      %s73 = sphi 0, %s57
      %s79 = sphi 0, %s81
      %s82 = sphi 0, %s79
      %s83 = sphi 0, %s82
      %s99 = sphi 0, %s83
      %s105 = sphi 0, %s107
      %s108 = sphi 0, %s105
      %s109 = sphi 0, %s108
      %s125 = sphi 0, %s109
      %s129 = sphi 0, %s129
      %s131 = sphi 0, %s129
      %s132 = sphi 0, %s131
      %s146 = sphi 0, %s132
      %s156 = sphi 0, %s158
      %s159 = sphi 0, %s156
      %s160 = sphi 0, %s159
      %s176 = sphi 0, %s160
    $region4: #{tpu_custom_call.1} parent=1 // loop_header_branch
      %23 = sbr.rel (%p21) target = $region8
    $region5: #{tpu_custom_call.1} parent=1 // loop_body
      %s25 = ssub.s32 %s20, 1
      %s26 = ssub.s32 %s20, 2
      %s36 = sadd.s32 1, %s29
      %p37 = scmp.ge.s32.totalorder %s36, 1
      %s38 = scalar_select %p37, 0, %s36
      %s39 = sadd.s32 1, %s28
      %s40 = scalar_select %p37, %s39, %s28
      %p41 = scmp.ge.s32.totalorder %s40, 1
      %s42 = scalar_select %p41, 0, %s40
      %s43 = sadd.s32 1, %s27
      %s44 = scalar_select %p41, %s43, %s27
      %p45 = scmp.ge.s32.totalorder %s44, 8
      %s46 = scalar_select %p45, 0, %s44
      %s47 = ssub.s32 %s28, %s42
      %s48 = ssub.s32 %s27, %s46
      %s49 = sor.u32 %s47, %s48
      %s50 = ssub.s32 %s29, %s38
      %s51 = sor.u32 %s49, %s50
      %p52 = scmp.eq.s32.totalorder %s51, 0
      %s54 = sadd.s32 %s53, 1
      %s55 = scalar_select %p52, %s53, %s54
      %p58 = pneg %p52
      %p59 = scmp.eq.s32.totalorder %s20, 7
      %p60 = por %p58, %p59
      %p61 = scmp.ne.s32.totalorder %s53, %s56
      %p62 = scmp.eq.s32.totalorder %s20, 0
      %p63 = por %p61, %p62
      %p64 = scmp.ne.s32.totalorder %s53, %s56
      %p65 = scmp.eq.s32.totalorder %s25, 7
      %p66 = por %p64, %p65
      %p67 = scmp.ne.s32.totalorder %s56, %s57
      %p68 = scmp.eq.s32.totalorder %s25, 0
      %p69 = por %p67, %p68
      %p70 = scmp.ne.s32.totalorder %s56, %s57
      %p71 = scmp.eq.s32.totalorder %s26, 7
      %p72 = por %p70, %p71
      %p74 = scmp.ne.s32.totalorder %s57, %s73
      %p75 = scmp.eq.s32.totalorder %s26, 0
      %p76 = por %p74, %p75
      %s77 = ssub.s32 %s27, %s46
      %p78 = scmp.eq.s32.totalorder %s77, 0
      %s80 = sadd.s32 %s79, 1
      %s81 = scalar_select %p78, %s79, %s80
      %p84 = pneg %p78
      %p85 = scmp.eq.s32.totalorder %s20, 7
      %p86 = por %p84, %p85
      %p87 = scmp.ne.s32.totalorder %s79, %s82
      %p88 = scmp.eq.s32.totalorder %s20, 0
      %p89 = por %p87, %p88
      %p90 = scmp.ne.s32.totalorder %s79, %s82
      %p91 = scmp.eq.s32.totalorder %s25, 7
      %p92 = por %p90, %p91
      %p93 = scmp.ne.s32.totalorder %s82, %s83
      %p94 = scmp.eq.s32.totalorder %s25, 0
      %p95 = por %p93, %p94
      %p96 = scmp.ne.s32.totalorder %s82, %s83
      %p97 = scmp.eq.s32.totalorder %s26, 7
      %p98 = por %p96, %p97
      %p100 = scmp.ne.s32.totalorder %s83, %s99
      %p101 = scmp.eq.s32.totalorder %s26, 0
      %p102 = por %p100, %p101
      %s103 = ssub.s32 %s27, %s46
      %p104 = scmp.eq.s32.totalorder %s103, 0
      %s106 = sadd.s32 %s105, 1
      %s107 = scalar_select %p104, %s105, %s106
      %p110 = pneg %p104
      %p111 = scmp.eq.s32.totalorder %s20, 7
      %p112 = por %p110, %p111
      %p113 = scmp.ne.s32.totalorder %s105, %s108
      %p114 = scmp.eq.s32.totalorder %s20, 0
      %p115 = por %p113, %p114
      %p116 = scmp.ne.s32.totalorder %s105, %s108
      %p117 = scmp.eq.s32.totalorder %s25, 7
      %p118 = por %p116, %p117
      %p119 = scmp.ne.s32.totalorder %s108, %s109
      %p120 = scmp.eq.s32.totalorder %s25, 0
      %p121 = por %p119, %p120
      %p122 = scmp.ne.s32.totalorder %s108, %s109
      %p123 = scmp.eq.s32.totalorder %s26, 7
      %p124 = por %p122, %p123
      %p126 = scmp.ne.s32.totalorder %s109, %s125
      %p127 = scmp.eq.s32.totalorder %s26, 0
      %p128 = por %p126, %p127
      %s130 = sadd.s32 %s129, 1
      %p133 = scmp.eq.s32.totalorder %s20, 7
      %p134 = scmp.ne.s32.totalorder %s129, %s131
      %p135 = scmp.eq.s32.totalorder %s20, 0
      %p136 = por %p134, %p135
      %p137 = scmp.ne.s32.totalorder %s129, %s131
      %p138 = scmp.eq.s32.totalorder %s25, 7
      %p139 = por %p137, %p138
      %p140 = scmp.ne.s32.totalorder %s131, %s132
      %p141 = scmp.eq.s32.totalorder %s25, 0
      %p142 = por %p140, %p141
      %p143 = scmp.ne.s32.totalorder %s131, %s132
      %p144 = scmp.eq.s32.totalorder %s26, 7
      %p145 = por %p143, %p144
      %p147 = scmp.ne.s32.totalorder %s132, %s146
      %p148 = scmp.eq.s32.totalorder %s26, 0
      %p149 = por %p147, %p148
      %s150 = ssub.s32 %s28, %s42
      %s151 = ssub.s32 %s27, %s46
      %s152 = sor.u32 %s150, %s151
      %s153 = ssub.s32 %s29, %s38
      %s154 = sor.u32 %s152, %s153
      %p155 = scmp.eq.s32.totalorder %s154, 0
      %s157 = sadd.s32 %s156, 1
      %s158 = scalar_select %p155, %s156, %s157
      %p161 = pneg %p155
      %p162 = scmp.eq.s32.totalorder %s20, 7
      %p163 = por %p161, %p162
      %p164 = scmp.ne.s32.totalorder %s156, %s159
      %p165 = scmp.eq.s32.totalorder %s20, 0
      %p166 = por %p164, %p165
      %p167 = scmp.ne.s32.totalorder %s156, %s159
      %p168 = scmp.eq.s32.totalorder %s25, 7
      %p169 = por %p167, %p168
      %p170 = scmp.ne.s32.totalorder %s159, %s160
      %p171 = scmp.eq.s32.totalorder %s25, 0
      %p172 = por %p170, %p171
      %p173 = scmp.ne.s32.totalorder %s159, %s160
      %p174 = scmp.eq.s32.totalorder %s26, 7
      %p175 = por %p173, %p174
      %p177 = scmp.ne.s32.totalorder %s160, %s176
      %p178 = scmp.eq.s32.totalorder %s26, 0
      %p179 = por %p177, %p178
      %p180 = scmp.le.s32.totalorder 1, %s20
      %p181 = scmp.lt.s32.totalorder %s20, 9
      %p182 = pnand %p180, %p181
      %p183 = pneg %p182
      // Predicated region
      $region9: #{tpu_custom_call.1} parent=5 // pred_check
        _
      $region10: #{tpu_custom_call.1} parent=5 // pred_check_branch
        %185 = sbr.rel (%p182) target = $region12
      $region11: #{tpu_custom_call.1} parent=5 // pred_region
        %s186 = ssub.s32 %s20, 1
        // Predicated region
        $region13: #{tpu_custom_call.1} parent=11 // pred_check
          %p187 = pneg %p142
        $region14: #{tpu_custom_call.1} parent=11 // pred_check_branch
          %189 = sbr.rel (%p187) target = $region16
        $region15: #{tpu_custom_call.1} parent=11 // pred_region
          _
        $region16: #{tpu_custom_call.1} parent=11 // pred_fallthru
          _
      $region12: #{tpu_custom_call.1} parent=5 // pred_fallthru
        _
      %p190 = scmp.lt.s32.totalorder %s20, 8
      // Predicated region
      $region17: #{tpu_custom_call.1} parent=5 // pred_check
        %p191 = pneg %p190
      $region18: #{tpu_custom_call.1} parent=5 // pred_check_branch
        %193 = sbr.rel (%p191) target = $region20
      $region19: #{tpu_custom_call.1} parent=5 // pred_region
        // Predicated region
        $region21: #{tpu_custom_call.1} parent=19 // pred_check
          %p194 = pneg %p63
        $region22: #{tpu_custom_call.1} parent=19 // pred_check_branch
          %196 = sbr.rel (%p194) target = $region24
        $region23: #{tpu_custom_call.1} parent=19 // pred_region
          %s197 = sand.u32 %s53, 1
          %s198 = scalar_lea.sflag [#allocation4], %s197
          %s199 = sand.u32 %s53, 1
          %s200 = smul.addr %s199, 4
          %s201 = scalar_lea.vmem [#allocation3], %s200
          %s202 = smul.u32 2, %s28
          %s204 = ssub.s32 64, 64
          %205 = vsyncadd %s198, %s204
          %s206 = sadd.s32 %s29, %s27
          %s207 = smul.addr %s202, 8
          %s208 = sadd.s32 %s206, %s207
          %s209 = smul.addr %s208, 32
          %s210 = scalar_lea.hbm %s0, %s209
          %s211 = sshll.u32 %s201, 4
          %s212 = int_to_ptr.vmem [resolvable:$true] %s211
          %217 = dma.hbm_to_vmem [thread:$0]  %s210, 64, %s212, %s198, 256, 32, 2
        $region24: #{tpu_custom_call.1} parent=19 // pred_fallthru
          _
        // Predicated region
        $region25: #{tpu_custom_call.1} parent=19 // pred_check
          %p218 = pneg %p89
        $region26: #{tpu_custom_call.1} parent=19 // pred_check_branch
          %220 = sbr.rel (%p218) target = $region28
        $region27: #{tpu_custom_call.1} parent=19 // pred_region
          %s221 = sand.u32 %s79, 1
          %s222 = scalar_lea.sflag [#allocation7], %s221
          %s223 = sand.u32 %s79, 1
          %s224 = scalar_lea.vmem [#allocation6], %s223
          %s226 = ssub.s32 16, 16
          %227 = vsyncadd %s222, %s226
          %s228 = smul.addr %s27, 16
          %s229 = scalar_lea.hbm %s1, %s228
          %s231 = sshll.u32 %s224, 4
          %s232 = int_to_ptr.vmem [resolvable:$true] %s231
          %234 = dma.hbm_to_vmem [thread:$0]  %s229, 16, %s232, %s222
        $region28: #{tpu_custom_call.1} parent=19 // pred_fallthru
          _
        // Predicated region
        $region29: #{tpu_custom_call.1} parent=19 // pred_check
          %p235 = pneg %p115
        $region30: #{tpu_custom_call.1} parent=19 // pred_check_branch
          %237 = sbr.rel (%p235) target = $region32
        $region31: #{tpu_custom_call.1} parent=19 // pred_region
          %p238 = scmp.lt.s32.totalorder %s27, 7
          %s239 = scalar_select %p238, %s27, 7
          %s240 = scalar_lea.vmem %s2, %s239
        $region32: #{tpu_custom_call.1} parent=19 // pred_fallthru
          _
      $region20: #{tpu_custom_call.1} parent=5 // pred_fallthru
        _
      %p241 = scmp.le.s32.totalorder 1, %s20
      %p242 = scmp.lt.s32.totalorder %s20, 9
      %p243 = pnand %p241, %p242
      %p244 = pneg %p243
      // Predicated region
      $region33: #{tpu_custom_call.1} parent=5 // pred_check
        _
      $region34: #{tpu_custom_call.1} parent=5 // pred_check_branch
        %246 = sbr.rel (%p243) target = $region36
      $region35: #{tpu_custom_call.1} parent=5 // pred_region
        %s247 = ssub.s32 %s20, 1
        %s248 = sand.u32 %s56, 1
        %s249 = scalar_lea.sflag [#allocation4], %s248
        %s250 = sand.u32 %s56, 1
        %s251 = smul.addr %s250, 4
        %s252 = scalar_lea.vmem [#allocation3], %s251
        // Predicated region
        $region37: #{tpu_custom_call.1} parent=35 // pred_check
          %p253 = pneg %p69
        $region38: #{tpu_custom_call.1} parent=35 // pred_check_branch
          %255 = sbr.rel (%p253) target = $region40
        $region39: #{tpu_custom_call.1} parent=35 // pred_region
          %256 = dma.done %s249, 64
        $region40: #{tpu_custom_call.1} parent=35 // pred_fallthru
          _
        %s257 = sand.u32 %s82, 1
        %s258 = scalar_lea.sflag [#allocation7], %s257
        %s259 = sand.u32 %s82, 1
        %s260 = scalar_lea.vmem [#allocation6], %s259
        // Predicated region
        $region41: #{tpu_custom_call.1} parent=35 // pred_check
          %p261 = pneg %p95
        $region42: #{tpu_custom_call.1} parent=35 // pred_check_branch
          %263 = sbr.rel (%p261) target = $region44
        $region43: #{tpu_custom_call.1} parent=35 // pred_region
          %264 = dma.done %s258, 16
        $region44: #{tpu_custom_call.1} parent=35 // pred_fallthru
          _
        %s265 = sand.u32 %s56, 1
        %s266 = scalar_lea.sflag [#allocation4], %s265
        %s267 = sand.u32 %s56, 1
        %s268 = smul.addr %s267, 4
        %s269 = scalar_lea.vmem [#allocation3], %s268
        %p270 = pneg %p69
        %p271 = pneg %p66
        %s272 = sand.u32 %s82, 1
        %s273 = scalar_lea.sflag [#allocation7], %s272
        %s274 = sand.u32 %s82, 1
        %s275 = scalar_lea.vmem [#allocation6], %s274
        %p276 = pneg %p95
        %p277 = pneg %p92
        %p278 = scmp.lt.s32.totalorder %s30, 7
        %s279 = scalar_select %p278, %s30, 7
        %s280 = scalar_lea.vmem %s2, %s279
        %p281 = pneg %p121
        %p282 = pneg %p118
        %p283 = pneg %p142
        %p284 = pneg %p139
        %p285 = pneg %p172
        %p286 = pneg %p169
        %s287 = sand.u32 %s159, 1
        %s288 = scalar_lea.sflag [#allocation5], %s287
        %s289 = sand.u32 %s159, 1
        %s290 = smul.addr %s289, 4
        %s291 = scalar_lea.vmem [#allocation8], %s290
        %s292 = smul.u32 2, %s31
        %p293 = scmp.lt.s32.totalorder %s30, 7
        %s294 = scalar_select %p293, %s30, 7
        %s295 = scalar_lea.vmem %s2, %s294
        %s296 = smul.u32 2, %s31
        %s297 = sld [smem:[#allocation2]]
        %v298 = vld [vmem:[%s252] sm:$0x3]
        %v299 = vstv %s297
        %v300 = vmul.f32 %v298, %v299
        %v301 = vfloor.f32 %v300
        %v302 = vadd.f32 %v301, 20.0
        %v303 = vmax.f32 %v302, 0.0
        %v304 = vmin.f32 %v303, 39.0
        %v305 = vcvt.f32.s32.to.zero.pseudo %v304
        %vm306 = vcmp.eq.s32.totalorder %v305, 0
        %v307 = vld [vmem:[%s260] sm:$0x1]
        %s308 = vtos %v307
        %v309 = vstv %s308
        %v310 = vsel %vm306, %v309, 0.0
        %v311 = vld [vmem:[%s295] sm:$0x1]
        %s312 = vtos %v311
        %v313 = vstv %s312
        %v314 = vsel %vm306, %v313, 0.0
        %vm315 = vcmp.eq.s32.totalorder %v305, 1
        %317 = vrot.lane.b32.xlu0 %v307, 127
        %v318 = vpop.permute.xlu0 %317
        %s320 = vtos %v318
        %v321 = vstv %s320
        %v322 = vsel %vm315, %v321, %v310
        %324 = vrot.lane.b32.xlu0 %v311, 127
        %v325 = vpop.permute.xlu0 %324
        %s327 = vtos %v325
        %v328 = vstv %s327
        %v329 = vsel %vm315, %v328, %v314
        %vm330 = vcmp.eq.s32.totalorder %v305, 2
        %331 = vrot.lane.b32.xlu0 %v307, 126
        %v332 = vpop.permute.xlu0 %331
        %s334 = vtos %v332
        %v335 = vstv %s334
        %v336 = vsel %vm330, %v335, %v322
        %337 = vrot.lane.b32.xlu0 %v311, 126
        %v338 = vpop.permute.xlu0 %337
        %s340 = vtos %v338
        %v341 = vstv %s340
        %v342 = vsel %vm330, %v341, %v329
        %vm343 = vcmp.eq.s32.totalorder %v305, 3
        %344 = vrot.lane.b32.xlu0 %v307, 125
        %v345 = vpop.permute.xlu0 %344
        %s347 = vtos %v345
        %v348 = vstv %s347
        %v349 = vsel %vm343, %v348, %v336
        %350 = vrot.lane.b32.xlu0 %v311, 125
        %v351 = vpop.permute.xlu0 %350
        %s353 = vtos %v351
        %v354 = vstv %s353
        %v355 = vsel %vm343, %v354, %v342
        %vm356 = vcmp.eq.s32.totalorder %v305, 4
        %357 = vrot.lane.b32.xlu0 %v307, 124
        %v358 = vpop.permute.xlu0 %357
        %s360 = vtos %v358
        %v361 = vstv %s360
        %v362 = vsel %vm356, %v361, %v349
        %363 = vrot.lane.b32.xlu0 %v311, 124
        %v364 = vpop.permute.xlu0 %363
        %s366 = vtos %v364
        %v367 = vstv %s366
        %v368 = vsel %vm356, %v367, %v355
        %vm369 = vcmp.eq.s32.totalorder %v305, 5
        %370 = vrot.lane.b32.xlu0 %v307, 123
        %v371 = vpop.permute.xlu0 %370
        %s373 = vtos %v371
        %v374 = vstv %s373
        %v375 = vsel %vm369, %v374, %v362
        %376 = vrot.lane.b32.xlu0 %v311, 123
        %v377 = vpop.permute.xlu0 %376
        %s379 = vtos %v377
        %v380 = vstv %s379
        %v381 = vsel %vm369, %v380, %v368
        %vm382 = vcmp.eq.s32.totalorder %v305, 6
        %383 = vrot.lane.b32.xlu0 %v307, 122
        %v384 = vpop.permute.xlu0 %383
        %s386 = vtos %v384
        %v387 = vstv %s386
        %v388 = vsel %vm382, %v387, %v375
        %389 = vrot.lane.b32.xlu0 %v311, 122
        %v390 = vpop.permute.xlu0 %389
        %s392 = vtos %v390
        %v393 = vstv %s392
        %v394 = vsel %vm382, %v393, %v381
        %vm395 = vcmp.eq.s32.totalorder %v305, 7
        %396 = vrot.lane.b32.xlu0 %v307, 121
        %v397 = vpop.permute.xlu0 %396
        %s399 = vtos %v397
        %v400 = vstv %s399
        %v401 = vsel %vm395, %v400, %v388
        %402 = vrot.lane.b32.xlu0 %v311, 121
        %v403 = vpop.permute.xlu0 %402
        %s405 = vtos %v403
        %v406 = vstv %s405
        %v407 = vsel %vm395, %v406, %v394
        %vm408 = vcmp.eq.s32.totalorder %v305, 8
        %409 = vrot.lane.b32.xlu0 %v307, 120
        %v410 = vpop.permute.xlu0 %409
        %s412 = vtos %v410
        %v413 = vstv %s412
        %v414 = vsel %vm408, %v413, %v401
        %415 = vrot.lane.b32.xlu0 %v311, 120
        %v416 = vpop.permute.xlu0 %415
        %s418 = vtos %v416
        %v419 = vstv %s418
        %v420 = vsel %vm408, %v419, %v407
        %vm421 = vcmp.eq.s32.totalorder %v305, 9
        %422 = vrot.lane.b32.xlu0 %v307, 119
        %v423 = vpop.permute.xlu0 %422
        %s425 = vtos %v423
        %v426 = vstv %s425
        %v427 = vsel %vm421, %v426, %v414
        %428 = vrot.lane.b32.xlu0 %v311, 119
        %v429 = vpop.permute.xlu0 %428
        %s431 = vtos %v429
        %v432 = vstv %s431
        %v433 = vsel %vm421, %v432, %v420
        %vm434 = vcmp.eq.s32.totalorder %v305, 10
        %435 = vrot.lane.b32.xlu0 %v307, 118
        %v436 = vpop.permute.xlu0 %435
        %s438 = vtos %v436
        %v439 = vstv %s438
        %v440 = vsel %vm434, %v439, %v427
        %441 = vrot.lane.b32.xlu0 %v311, 118
        %v442 = vpop.permute.xlu0 %441
        %s444 = vtos %v442
        %v445 = vstv %s444
        %v446 = vsel %vm434, %v445, %v433
        %vm447 = vcmp.eq.s32.totalorder %v305, 11
        %448 = vrot.lane.b32.xlu0 %v307, 117
        %v449 = vpop.permute.xlu0 %448
        %s451 = vtos %v449
        %v452 = vstv %s451
        %v453 = vsel %vm447, %v452, %v440
        %454 = vrot.lane.b32.xlu0 %v311, 117
        %v455 = vpop.permute.xlu0 %454
        %s457 = vtos %v455
        %v458 = vstv %s457
        %v459 = vsel %vm447, %v458, %v446
        %vm460 = vcmp.eq.s32.totalorder %v305, 12
        %461 = vrot.lane.b32.xlu0 %v307, 116
        %v462 = vpop.permute.xlu0 %461
        %s464 = vtos %v462
        %v465 = vstv %s464
        %v466 = vsel %vm460, %v465, %v453
        %467 = vrot.lane.b32.xlu0 %v311, 116
        %v468 = vpop.permute.xlu0 %467
        %s470 = vtos %v468
        %v471 = vstv %s470
        %v472 = vsel %vm460, %v471, %v459
        %vm473 = vcmp.eq.s32.totalorder %v305, 13
        %474 = vrot.lane.b32.xlu0 %v307, 115
        %v475 = vpop.permute.xlu0 %474
        %s477 = vtos %v475
        %v478 = vstv %s477
        %v479 = vsel %vm473, %v478, %v466
        %480 = vrot.lane.b32.xlu0 %v311, 115
        %v481 = vpop.permute.xlu0 %480
        %s483 = vtos %v481
        %v484 = vstv %s483
        %v485 = vsel %vm473, %v484, %v472
        %vm486 = vcmp.eq.s32.totalorder %v305, 14
        %487 = vrot.lane.b32.xlu0 %v307, 114
        %v488 = vpop.permute.xlu0 %487
        %s490 = vtos %v488
        %v491 = vstv %s490
        %v492 = vsel %vm486, %v491, %v479
        %493 = vrot.lane.b32.xlu0 %v311, 114
        %v494 = vpop.permute.xlu0 %493
        %s496 = vtos %v494
        %v497 = vstv %s496
        %v498 = vsel %vm486, %v497, %v485
        %vm499 = vcmp.eq.s32.totalorder %v305, 15
        %500 = vrot.lane.b32.xlu0 %v307, 113
        %v501 = vpop.permute.xlu0 %500
        %s503 = vtos %v501
        %v504 = vstv %s503
        %v505 = vsel %vm499, %v504, %v492
        %506 = vrot.lane.b32.xlu0 %v311, 113
        %v507 = vpop.permute.xlu0 %506
        %s509 = vtos %v507
        %v510 = vstv %s509
        %v511 = vsel %vm499, %v510, %v498
        %vm512 = vcmp.eq.s32.totalorder %v305, 16
        %513 = vrot.lane.b32.xlu0 %v307, 112
        %v514 = vpop.permute.xlu0 %513
        %s516 = vtos %v514
        %v517 = vstv %s516
        %v518 = vsel %vm512, %v517, %v505
        %519 = vrot.lane.b32.xlu0 %v311, 112
        %v520 = vpop.permute.xlu0 %519
        %s522 = vtos %v520
        %v523 = vstv %s522
        %v524 = vsel %vm512, %v523, %v511
        %vm525 = vcmp.eq.s32.totalorder %v305, 17
        %526 = vrot.lane.b32.xlu0 %v307, 111
        %v527 = vpop.permute.xlu0 %526
        %s529 = vtos %v527
        %v530 = vstv %s529
        %v531 = vsel %vm525, %v530, %v518
        %532 = vrot.lane.b32.xlu0 %v311, 111
        %v533 = vpop.permute.xlu0 %532
        %s535 = vtos %v533
        %v536 = vstv %s535
        %v537 = vsel %vm525, %v536, %v524
        %vm538 = vcmp.eq.s32.totalorder %v305, 18
        %539 = vrot.lane.b32.xlu0 %v307, 110
        %v540 = vpop.permute.xlu0 %539
        %s542 = vtos %v540
        %v543 = vstv %s542
        %v544 = vsel %vm538, %v543, %v531
        %545 = vrot.lane.b32.xlu0 %v311, 110
        %v546 = vpop.permute.xlu0 %545
        %s548 = vtos %v546
        %v549 = vstv %s548
        %v550 = vsel %vm538, %v549, %v537
        %vm551 = vcmp.eq.s32.totalorder %v305, 19
        %552 = vrot.lane.b32.xlu0 %v307, 109
        %v553 = vpop.permute.xlu0 %552
        %s555 = vtos %v553
        %v556 = vstv %s555
        %v557 = vsel %vm551, %v556, %v544
        %558 = vrot.lane.b32.xlu0 %v311, 109
        %v559 = vpop.permute.xlu0 %558
        %s561 = vtos %v559
        %v562 = vstv %s561
        %v563 = vsel %vm551, %v562, %v550
        %vm564 = vcmp.eq.s32.totalorder %v305, 20
        %565 = vrot.lane.b32.xlu0 %v307, 108
        %v566 = vpop.permute.xlu0 %565
        %s568 = vtos %v566
        %v569 = vstv %s568
        %v570 = vsel %vm564, %v569, %v557
        %571 = vrot.lane.b32.xlu0 %v311, 108
        %v572 = vpop.permute.xlu0 %571
        %s574 = vtos %v572
        %v575 = vstv %s574
        %v576 = vsel %vm564, %v575, %v563
        %vm577 = vcmp.eq.s32.totalorder %v305, 21
        %578 = vrot.lane.b32.xlu0 %v307, 107
        %v579 = vpop.permute.xlu0 %578
        %s581 = vtos %v579
        %v582 = vstv %s581
        %v583 = vsel %vm577, %v582, %v570
        %584 = vrot.lane.b32.xlu0 %v311, 107
        %v585 = vpop.permute.xlu0 %584
        %s587 = vtos %v585
        %v588 = vstv %s587
        %v589 = vsel %vm577, %v588, %v576
        %vm590 = vcmp.eq.s32.totalorder %v305, 22
        %591 = vrot.lane.b32.xlu0 %v307, 106
        %v592 = vpop.permute.xlu0 %591
        %s594 = vtos %v592
        %v595 = vstv %s594
        %v596 = vsel %vm590, %v595, %v583
        %597 = vrot.lane.b32.xlu0 %v311, 106
        %v598 = vpop.permute.xlu0 %597
        %s600 = vtos %v598
        %v601 = vstv %s600
        %v602 = vsel %vm590, %v601, %v589
        %vm603 = vcmp.eq.s32.totalorder %v305, 23
        %604 = vrot.lane.b32.xlu0 %v307, 105
        %v605 = vpop.permute.xlu0 %604
        %s607 = vtos %v605
        %v608 = vstv %s607
        %v609 = vsel %vm603, %v608, %v596
        %610 = vrot.lane.b32.xlu0 %v311, 105
        %v611 = vpop.permute.xlu0 %610
        %s613 = vtos %v611
        %v614 = vstv %s613
        %v615 = vsel %vm603, %v614, %v602
        %vm616 = vcmp.eq.s32.totalorder %v305, 24
        %617 = vrot.lane.b32.xlu0 %v307, 104
        %v618 = vpop.permute.xlu0 %617
        %s620 = vtos %v618
        %v621 = vstv %s620
        %v622 = vsel %vm616, %v621, %v609
        %623 = vrot.lane.b32.xlu0 %v311, 104
        %v624 = vpop.permute.xlu0 %623
        %s626 = vtos %v624
        %v627 = vstv %s626
        %v628 = vsel %vm616, %v627, %v615
        %vm629 = vcmp.eq.s32.totalorder %v305, 25
        %630 = vrot.lane.b32.xlu0 %v307, 103
        %v631 = vpop.permute.xlu0 %630
        %s633 = vtos %v631
        %v634 = vstv %s633
        %v635 = vsel %vm629, %v634, %v622
        %636 = vrot.lane.b32.xlu0 %v311, 103
        %v637 = vpop.permute.xlu0 %636
        %s639 = vtos %v637
        %v640 = vstv %s639
        %v641 = vsel %vm629, %v640, %v628
        %vm642 = vcmp.eq.s32.totalorder %v305, 26
        %643 = vrot.lane.b32.xlu0 %v307, 102
        %v644 = vpop.permute.xlu0 %643
        %s646 = vtos %v644
        %v647 = vstv %s646
        %v648 = vsel %vm642, %v647, %v635
        %649 = vrot.lane.b32.xlu0 %v311, 102
        %v650 = vpop.permute.xlu0 %649
        %s652 = vtos %v650
        %v653 = vstv %s652
        %v654 = vsel %vm642, %v653, %v641
        %vm655 = vcmp.eq.s32.totalorder %v305, 27
        %656 = vrot.lane.b32.xlu0 %v307, 101
        %v657 = vpop.permute.xlu0 %656
        %s659 = vtos %v657
        %v660 = vstv %s659
        %v661 = vsel %vm655, %v660, %v648
        %662 = vrot.lane.b32.xlu0 %v311, 101
        %v663 = vpop.permute.xlu0 %662
        %s665 = vtos %v663
        %v666 = vstv %s665
        %v667 = vsel %vm655, %v666, %v654
        %vm668 = vcmp.eq.s32.totalorder %v305, 28
        %669 = vrot.lane.b32.xlu0 %v307, 100
        %v670 = vpop.permute.xlu0 %669
        %s672 = vtos %v670
        %v673 = vstv %s672
        %v674 = vsel %vm668, %v673, %v661
        %675 = vrot.lane.b32.xlu0 %v311, 100
        %v676 = vpop.permute.xlu0 %675
        %s678 = vtos %v676
        %v679 = vstv %s678
        %v680 = vsel %vm668, %v679, %v667
        %vm681 = vcmp.eq.s32.totalorder %v305, 29
        %682 = vrot.lane.b32.xlu0 %v307, 99
        %v683 = vpop.permute.xlu0 %682
        %s685 = vtos %v683
        %v686 = vstv %s685
        %v687 = vsel %vm681, %v686, %v674
        %688 = vrot.lane.b32.xlu0 %v311, 99
        %v689 = vpop.permute.xlu0 %688
        %s691 = vtos %v689
        %v692 = vstv %s691
        %v693 = vsel %vm681, %v692, %v680
        %vm694 = vcmp.eq.s32.totalorder %v305, 30
        %695 = vrot.lane.b32.xlu0 %v307, 98
        %v696 = vpop.permute.xlu0 %695
        %s698 = vtos %v696
        %v699 = vstv %s698
        %v700 = vsel %vm694, %v699, %v687
        %701 = vrot.lane.b32.xlu0 %v311, 98
        %v702 = vpop.permute.xlu0 %701
        %s704 = vtos %v702
        %v705 = vstv %s704
        %v706 = vsel %vm694, %v705, %v693
        %vm707 = vcmp.eq.s32.totalorder %v305, 31
        %708 = vrot.lane.b32.xlu0 %v307, 97
        %v709 = vpop.permute.xlu0 %708
        %s711 = vtos %v709
        %v712 = vstv %s711
        %v713 = vsel %vm707, %v712, %v700
        %714 = vrot.lane.b32.xlu0 %v311, 97
        %v715 = vpop.permute.xlu0 %714
        %s717 = vtos %v715
        %v718 = vstv %s717
        %v719 = vsel %vm707, %v718, %v706
        %vm720 = vcmp.eq.s32.totalorder %v305, 32
        %721 = vrot.lane.b32.xlu0 %v307, 96
        %v722 = vpop.permute.xlu0 %721
        %s724 = vtos %v722
        %v725 = vstv %s724
        %v726 = vsel %vm720, %v725, %v713
        %727 = vrot.lane.b32.xlu0 %v311, 96
        %v728 = vpop.permute.xlu0 %727
        %s730 = vtos %v728
        %v731 = vstv %s730
        %v732 = vsel %vm720, %v731, %v719
        %vm733 = vcmp.eq.s32.totalorder %v305, 33
        %734 = vrot.lane.b32.xlu0 %v307, 95
        %v735 = vpop.permute.xlu0 %734
        %s737 = vtos %v735
        %v738 = vstv %s737
        %v739 = vsel %vm733, %v738, %v726
        %740 = vrot.lane.b32.xlu0 %v311, 95
        %v741 = vpop.permute.xlu0 %740
        %s743 = vtos %v741
        %v744 = vstv %s743
        %v745 = vsel %vm733, %v744, %v732
        %vm746 = vcmp.eq.s32.totalorder %v305, 34
        %747 = vrot.lane.b32.xlu0 %v307, 94
        %v748 = vpop.permute.xlu0 %747
        %s750 = vtos %v748
        %v751 = vstv %s750
        %v752 = vsel %vm746, %v751, %v739
        %753 = vrot.lane.b32.xlu0 %v311, 94
        %v754 = vpop.permute.xlu0 %753
        %s756 = vtos %v754
        %v757 = vstv %s756
        %v758 = vsel %vm746, %v757, %v745
        %vm759 = vcmp.eq.s32.totalorder %v305, 35
        %760 = vrot.lane.b32.xlu0 %v307, 93
        %v761 = vpop.permute.xlu0 %760
        %s763 = vtos %v761
        %v764 = vstv %s763
        %v765 = vsel %vm759, %v764, %v752
        %766 = vrot.lane.b32.xlu0 %v311, 93
        %v767 = vpop.permute.xlu0 %766
        %s769 = vtos %v767
        %v770 = vstv %s769
        %v771 = vsel %vm759, %v770, %v758
        %vm772 = vcmp.eq.s32.totalorder %v305, 36
        %773 = vrot.lane.b32.xlu0 %v307, 92
        %v774 = vpop.permute.xlu0 %773
        %s776 = vtos %v774
        %v777 = vstv %s776
        %v778 = vsel %vm772, %v777, %v765
        %779 = vrot.lane.b32.xlu0 %v311, 92
        %v780 = vpop.permute.xlu0 %779
        %s782 = vtos %v780
        %v783 = vstv %s782
        %v784 = vsel %vm772, %v783, %v771
        %vm785 = vcmp.eq.s32.totalorder %v305, 37
        %786 = vrot.lane.b32.xlu0 %v307, 91
        %v787 = vpop.permute.xlu0 %786
        %s789 = vtos %v787
        %v790 = vstv %s789
        %v791 = vsel %vm785, %v790, %v778
        %792 = vrot.lane.b32.xlu0 %v311, 91
        %v793 = vpop.permute.xlu0 %792
        %s795 = vtos %v793
        %v796 = vstv %s795
        %v797 = vsel %vm785, %v796, %v784
        %vm798 = vcmp.eq.s32.totalorder %v305, 38
        %799 = vrot.lane.b32.xlu0 %v307, 90
        %v800 = vpop.permute.xlu0 %799
        %s802 = vtos %v800
        %v803 = vstv %s802
        %v804 = vsel %vm798, %v803, %v791
        %805 = vrot.lane.b32.xlu0 %v311, 90
        %v806 = vpop.permute.xlu0 %805
        %s808 = vtos %v806
        %v809 = vstv %s808
        %v810 = vsel %vm798, %v809, %v797
        %vm811 = vcmp.eq.s32.totalorder %v305, 39
        %812 = vrot.lane.b32.xlu0 %v307, 89
        %v813 = vpop.permute.xlu0 %812
        %s815 = vtos %v813
        %v816 = vstv %s815
        %v817 = vsel %vm811, %v816, %v804
        %818 = vrot.lane.b32.xlu0 %v311, 89
        %v819 = vpop.permute.xlu0 %818
        %s821 = vtos %v819
        %v822 = vstv %s821
        %v823 = vsel %vm811, %v822, %v810
        %v824 = vmul.f32 %v298, %v817
        %v825 = vadd.f32 %v824, %v823
        %826 = vst [vmem:[%s291] sm:$0x3] %v825
        %s827 = scalar_lea.vmem %s252, 2 [#allocation3]
        %v828 = vld [vmem:[%s827] sm:$0x3]
        %v829 = vmul.f32 %v828, %v299
        %v830 = vfloor.f32 %v829
        %v831 = vadd.f32 %v830, 20.0
        %v832 = vmax.f32 %v831, 0.0
        %v833 = vmin.f32 %v832, 39.0
        %v834 = vcvt.f32.s32.to.zero.pseudo %v833
        %vm835 = vcmp.eq.s32.totalorder %v834, 0
        %v836 = vld [vmem:[%s260] sm:$0x1]
        %s837 = vtos %v836
        %v838 = vstv %s837
        %v839 = vsel %vm835, %v838, 0.0
        %v840 = vld [vmem:[%s295] sm:$0x1]
        %s841 = vtos %v840
        %v842 = vstv %s841
        %v843 = vsel %vm835, %v842, 0.0
        %vm844 = vcmp.eq.s32.totalorder %v834, 1
        %846 = vrot.lane.b32.xlu0 %v836, 127
        %v847 = vpop.permute.xlu0 %846
        %s849 = vtos %v847
        %v850 = vstv %s849
        %v851 = vsel %vm844, %v850, %v839
        %853 = vrot.lane.b32.xlu0 %v840, 127
        %v854 = vpop.permute.xlu0 %853
        %s856 = vtos %v854
        %v857 = vstv %s856
        %v858 = vsel %vm844, %v857, %v843
        %vm859 = vcmp.eq.s32.totalorder %v834, 2
        %860 = vrot.lane.b32.xlu0 %v836, 126
        %v861 = vpop.permute.xlu0 %860
        %s863 = vtos %v861
        %v864 = vstv %s863
        %v865 = vsel %vm859, %v864, %v851
        %866 = vrot.lane.b32.xlu0 %v840, 126
        %v867 = vpop.permute.xlu0 %866
        %s869 = vtos %v867
        %v870 = vstv %s869
        %v871 = vsel %vm859, %v870, %v858
        %vm872 = vcmp.eq.s32.totalorder %v834, 3
        %873 = vrot.lane.b32.xlu0 %v836, 125
        %v874 = vpop.permute.xlu0 %873
        %s876 = vtos %v874
        %v877 = vstv %s876
        %v878 = vsel %vm872, %v877, %v865
        %879 = vrot.lane.b32.xlu0 %v840, 125
        %v880 = vpop.permute.xlu0 %879
        %s882 = vtos %v880
        %v883 = vstv %s882
        %v884 = vsel %vm872, %v883, %v871
        %vm885 = vcmp.eq.s32.totalorder %v834, 4
        %886 = vrot.lane.b32.xlu0 %v836, 124
        %v887 = vpop.permute.xlu0 %886
        %s889 = vtos %v887
        %v890 = vstv %s889
        %v891 = vsel %vm885, %v890, %v878
        %892 = vrot.lane.b32.xlu0 %v840, 124
        %v893 = vpop.permute.xlu0 %892
        %s895 = vtos %v893
        %v896 = vstv %s895
        %v897 = vsel %vm885, %v896, %v884
        %vm898 = vcmp.eq.s32.totalorder %v834, 5
        %899 = vrot.lane.b32.xlu0 %v836, 123
        %v900 = vpop.permute.xlu0 %899
        %s902 = vtos %v900
        %v903 = vstv %s902
        %v904 = vsel %vm898, %v903, %v891
        %905 = vrot.lane.b32.xlu0 %v840, 123
        %v906 = vpop.permute.xlu0 %905
        %s908 = vtos %v906
        %v909 = vstv %s908
        %v910 = vsel %vm898, %v909, %v897
        %vm911 = vcmp.eq.s32.totalorder %v834, 6
        %912 = vrot.lane.b32.xlu0 %v836, 122
        %v913 = vpop.permute.xlu0 %912
        %s915 = vtos %v913
        %v916 = vstv %s915
        %v917 = vsel %vm911, %v916, %v904
        %918 = vrot.lane.b32.xlu0 %v840, 122
        %v919 = vpop.permute.xlu0 %918
        %s921 = vtos %v919
        %v922 = vstv %s921
        %v923 = vsel %vm911, %v922, %v910
        %vm924 = vcmp.eq.s32.totalorder %v834, 7
        %925 = vrot.lane.b32.xlu0 %v836, 121
        %v926 = vpop.permute.xlu0 %925
        %s928 = vtos %v926
        %v929 = vstv %s928
        %v930 = vsel %vm924, %v929, %v917
        %931 = vrot.lane.b32.xlu0 %v840, 121
        %v932 = vpop.permute.xlu0 %931
        %s934 = vtos %v932
        %v935 = vstv %s934
        %v936 = vsel %vm924, %v935, %v923
        %vm937 = vcmp.eq.s32.totalorder %v834, 8
        %938 = vrot.lane.b32.xlu0 %v836, 120
        %v939 = vpop.permute.xlu0 %938
        %s941 = vtos %v939
        %v942 = vstv %s941
        %v943 = vsel %vm937, %v942, %v930
        %944 = vrot.lane.b32.xlu0 %v840, 120
        %v945 = vpop.permute.xlu0 %944
        %s947 = vtos %v945
        %v948 = vstv %s947
        %v949 = vsel %vm937, %v948, %v936
        %vm950 = vcmp.eq.s32.totalorder %v834, 9
        %951 = vrot.lane.b32.xlu0 %v836, 119
        %v952 = vpop.permute.xlu0 %951
        %s954 = vtos %v952
        %v955 = vstv %s954
        %v956 = vsel %vm950, %v955, %v943
        %957 = vrot.lane.b32.xlu0 %v840, 119
        %v958 = vpop.permute.xlu0 %957
        %s960 = vtos %v958
        %v961 = vstv %s960
        %v962 = vsel %vm950, %v961, %v949
        %vm963 = vcmp.eq.s32.totalorder %v834, 10
        %964 = vrot.lane.b32.xlu0 %v836, 118
        %v965 = vpop.permute.xlu0 %964
        %s967 = vtos %v965
        %v968 = vstv %s967
        %v969 = vsel %vm963, %v968, %v956
        %970 = vrot.lane.b32.xlu0 %v840, 118
        %v971 = vpop.permute.xlu0 %970
        %s973 = vtos %v971
        %v974 = vstv %s973
        %v975 = vsel %vm963, %v974, %v962
        %vm976 = vcmp.eq.s32.totalorder %v834, 11
        %977 = vrot.lane.b32.xlu0 %v836, 117
        %v978 = vpop.permute.xlu0 %977
        %s980 = vtos %v978
        %v981 = vstv %s980
        %v982 = vsel %vm976, %v981, %v969
        %983 = vrot.lane.b32.xlu0 %v840, 117
        %v984 = vpop.permute.xlu0 %983
        %s986 = vtos %v984
        %v987 = vstv %s986
        %v988 = vsel %vm976, %v987, %v975
        %vm989 = vcmp.eq.s32.totalorder %v834, 12
        %990 = vrot.lane.b32.xlu0 %v836, 116
        %v991 = vpop.permute.xlu0 %990
        %s993 = vtos %v991
        %v994 = vstv %s993
        %v995 = vsel %vm989, %v994, %v982
        %996 = vrot.lane.b32.xlu0 %v840, 116
        %v997 = vpop.permute.xlu0 %996
        %s999 = vtos %v997
        %v1000 = vstv %s999
        %v1001 = vsel %vm989, %v1000, %v988
        %vm1002 = vcmp.eq.s32.totalorder %v834, 13
        %1003 = vrot.lane.b32.xlu0 %v836, 115
        %v1004 = vpop.permute.xlu0 %1003
        %s1006 = vtos %v1004
        %v1007 = vstv %s1006
        %v1008 = vsel %vm1002, %v1007, %v995
        %1009 = vrot.lane.b32.xlu0 %v840, 115
        %v1010 = vpop.permute.xlu0 %1009
        %s1012 = vtos %v1010
        %v1013 = vstv %s1012
        %v1014 = vsel %vm1002, %v1013, %v1001
        %vm1015 = vcmp.eq.s32.totalorder %v834, 14
        %1016 = vrot.lane.b32.xlu0 %v836, 114
        %v1017 = vpop.permute.xlu0 %1016
        %s1019 = vtos %v1017
        %v1020 = vstv %s1019
        %v1021 = vsel %vm1015, %v1020, %v1008
        %1022 = vrot.lane.b32.xlu0 %v840, 114
        %v1023 = vpop.permute.xlu0 %1022
        %s1025 = vtos %v1023
        %v1026 = vstv %s1025
        %v1027 = vsel %vm1015, %v1026, %v1014
        %vm1028 = vcmp.eq.s32.totalorder %v834, 15
        %1029 = vrot.lane.b32.xlu0 %v836, 113
        %v1030 = vpop.permute.xlu0 %1029
        %s1032 = vtos %v1030
        %v1033 = vstv %s1032
        %v1034 = vsel %vm1028, %v1033, %v1021
        %1035 = vrot.lane.b32.xlu0 %v840, 113
        %v1036 = vpop.permute.xlu0 %1035
        %s1038 = vtos %v1036
        %v1039 = vstv %s1038
        %v1040 = vsel %vm1028, %v1039, %v1027
        %vm1041 = vcmp.eq.s32.totalorder %v834, 16
        %1042 = vrot.lane.b32.xlu0 %v836, 112
        %v1043 = vpop.permute.xlu0 %1042
        %s1045 = vtos %v1043
        %v1046 = vstv %s1045
        %v1047 = vsel %vm1041, %v1046, %v1034
        %1048 = vrot.lane.b32.xlu0 %v840, 112
        %v1049 = vpop.permute.xlu0 %1048
        %s1051 = vtos %v1049
        %v1052 = vstv %s1051
        %v1053 = vsel %vm1041, %v1052, %v1040
        %vm1054 = vcmp.eq.s32.totalorder %v834, 17
        %1055 = vrot.lane.b32.xlu0 %v836, 111
        %v1056 = vpop.permute.xlu0 %1055
        %s1058 = vtos %v1056
        %v1059 = vstv %s1058
        %v1060 = vsel %vm1054, %v1059, %v1047
        %1061 = vrot.lane.b32.xlu0 %v840, 111
        %v1062 = vpop.permute.xlu0 %1061
        %s1064 = vtos %v1062
        %v1065 = vstv %s1064
        %v1066 = vsel %vm1054, %v1065, %v1053
        %vm1067 = vcmp.eq.s32.totalorder %v834, 18
        %1068 = vrot.lane.b32.xlu0 %v836, 110
        %v1069 = vpop.permute.xlu0 %1068
        %s1071 = vtos %v1069
        %v1072 = vstv %s1071
        %v1073 = vsel %vm1067, %v1072, %v1060
        %1074 = vrot.lane.b32.xlu0 %v840, 110
        %v1075 = vpop.permute.xlu0 %1074
        %s1077 = vtos %v1075
        %v1078 = vstv %s1077
        %v1079 = vsel %vm1067, %v1078, %v1066
        %vm1080 = vcmp.eq.s32.totalorder %v834, 19
        %1081 = vrot.lane.b32.xlu0 %v836, 109
        %v1082 = vpop.permute.xlu0 %1081
        %s1084 = vtos %v1082
        %v1085 = vstv %s1084
        %v1086 = vsel %vm1080, %v1085, %v1073
        %1087 = vrot.lane.b32.xlu0 %v840, 109
        %v1088 = vpop.permute.xlu0 %1087
        %s1090 = vtos %v1088
        %v1091 = vstv %s1090
        %v1092 = vsel %vm1080, %v1091, %v1079
        %vm1093 = vcmp.eq.s32.totalorder %v834, 20
        %1094 = vrot.lane.b32.xlu0 %v836, 108
        %v1095 = vpop.permute.xlu0 %1094
        %s1097 = vtos %v1095
        %v1098 = vstv %s1097
        %v1099 = vsel %vm1093, %v1098, %v1086
        %1100 = vrot.lane.b32.xlu0 %v840, 108
        %v1101 = vpop.permute.xlu0 %1100
        %s1103 = vtos %v1101
        %v1104 = vstv %s1103
        %v1105 = vsel %vm1093, %v1104, %v1092
        %vm1106 = vcmp.eq.s32.totalorder %v834, 21
        %1107 = vrot.lane.b32.xlu0 %v836, 107
        %v1108 = vpop.permute.xlu0 %1107
        %s1110 = vtos %v1108
        %v1111 = vstv %s1110
        %v1112 = vsel %vm1106, %v1111, %v1099
        %1113 = vrot.lane.b32.xlu0 %v840, 107
        %v1114 = vpop.permute.xlu0 %1113
        %s1116 = vtos %v1114
        %v1117 = vstv %s1116
        %v1118 = vsel %vm1106, %v1117, %v1105
        %vm1119 = vcmp.eq.s32.totalorder %v834, 22
        %1120 = vrot.lane.b32.xlu0 %v836, 106
        %v1121 = vpop.permute.xlu0 %1120
        %s1123 = vtos %v1121
        %v1124 = vstv %s1123
        %v1125 = vsel %vm1119, %v1124, %v1112
        %1126 = vrot.lane.b32.xlu0 %v840, 106
        %v1127 = vpop.permute.xlu0 %1126
        %s1129 = vtos %v1127
        %v1130 = vstv %s1129
        %v1131 = vsel %vm1119, %v1130, %v1118
        %vm1132 = vcmp.eq.s32.totalorder %v834, 23
        %1133 = vrot.lane.b32.xlu0 %v836, 105
        %v1134 = vpop.permute.xlu0 %1133
        %s1136 = vtos %v1134
        %v1137 = vstv %s1136
        %v1138 = vsel %vm1132, %v1137, %v1125
        %1139 = vrot.lane.b32.xlu0 %v840, 105
        %v1140 = vpop.permute.xlu0 %1139
        %s1142 = vtos %v1140
        %v1143 = vstv %s1142
        %v1144 = vsel %vm1132, %v1143, %v1131
        %vm1145 = vcmp.eq.s32.totalorder %v834, 24
        %1146 = vrot.lane.b32.xlu0 %v836, 104
        %v1147 = vpop.permute.xlu0 %1146
        %s1149 = vtos %v1147
        %v1150 = vstv %s1149
        %v1151 = vsel %vm1145, %v1150, %v1138
        %1152 = vrot.lane.b32.xlu0 %v840, 104
        %v1153 = vpop.permute.xlu0 %1152
        %s1155 = vtos %v1153
        %v1156 = vstv %s1155
        %v1157 = vsel %vm1145, %v1156, %v1144
        %vm1158 = vcmp.eq.s32.totalorder %v834, 25
        %1159 = vrot.lane.b32.xlu0 %v836, 103
        %v1160 = vpop.permute.xlu0 %1159
        %s1162 = vtos %v1160
        %v1163 = vstv %s1162
        %v1164 = vsel %vm1158, %v1163, %v1151
        %1165 = vrot.lane.b32.xlu0 %v840, 103
        %v1166 = vpop.permute.xlu0 %1165
        %s1168 = vtos %v1166
        %v1169 = vstv %s1168
        %v1170 = vsel %vm1158, %v1169, %v1157
        %vm1171 = vcmp.eq.s32.totalorder %v834, 26
        %1172 = vrot.lane.b32.xlu0 %v836, 102
        %v1173 = vpop.permute.xlu0 %1172
        %s1175 = vtos %v1173
        %v1176 = vstv %s1175
        %v1177 = vsel %vm1171, %v1176, %v1164
        %1178 = vrot.lane.b32.xlu0 %v840, 102
        %v1179 = vpop.permute.xlu0 %1178
        %s1181 = vtos %v1179
        %v1182 = vstv %s1181
        %v1183 = vsel %vm1171, %v1182, %v1170
        %vm1184 = vcmp.eq.s32.totalorder %v834, 27
        %1185 = vrot.lane.b32.xlu0 %v836, 101
        %v1186 = vpop.permute.xlu0 %1185
        %s1188 = vtos %v1186
        %v1189 = vstv %s1188
        %v1190 = vsel %vm1184, %v1189, %v1177
        %1191 = vrot.lane.b32.xlu0 %v840, 101
        %v1192 = vpop.permute.xlu0 %1191
        %s1194 = vtos %v1192
        %v1195 = vstv %s1194
        %v1196 = vsel %vm1184, %v1195, %v1183
        %vm1197 = vcmp.eq.s32.totalorder %v834, 28
        %1198 = vrot.lane.b32.xlu0 %v836, 100
        %v1199 = vpop.permute.xlu0 %1198
        %s1201 = vtos %v1199
        %v1202 = vstv %s1201
        %v1203 = vsel %vm1197, %v1202, %v1190
        %1204 = vrot.lane.b32.xlu0 %v840, 100
        %v1205 = vpop.permute.xlu0 %1204
        %s1207 = vtos %v1205
        %v1208 = vstv %s1207
        %v1209 = vsel %vm1197, %v1208, %v1196
        %vm1210 = vcmp.eq.s32.totalorder %v834, 29
        %1211 = vrot.lane.b32.xlu0 %v836, 99
        %v1212 = vpop.permute.xlu0 %1211
        %s1214 = vtos %v1212
        %v1215 = vstv %s1214
        %v1216 = vsel %vm1210, %v1215, %v1203
        %1217 = vrot.lane.b32.xlu0 %v840, 99
        %v1218 = vpop.permute.xlu0 %1217
        %s1220 = vtos %v1218
        %v1221 = vstv %s1220
        %v1222 = vsel %vm1210, %v1221, %v1209
        %vm1223 = vcmp.eq.s32.totalorder %v834, 30
        %1224 = vrot.lane.b32.xlu0 %v836, 98
        %v1225 = vpop.permute.xlu0 %1224
        %s1227 = vtos %v1225
        %v1228 = vstv %s1227
        %v1229 = vsel %vm1223, %v1228, %v1216
        %1230 = vrot.lane.b32.xlu0 %v840, 98
        %v1231 = vpop.permute.xlu0 %1230
        %s1233 = vtos %v1231
        %v1234 = vstv %s1233
        %v1235 = vsel %vm1223, %v1234, %v1222
        %vm1236 = vcmp.eq.s32.totalorder %v834, 31
        %1237 = vrot.lane.b32.xlu0 %v836, 97
        %v1238 = vpop.permute.xlu0 %1237
        %s1240 = vtos %v1238
        %v1241 = vstv %s1240
        %v1242 = vsel %vm1236, %v1241, %v1229
        %1243 = vrot.lane.b32.xlu0 %v840, 97
        %v1244 = vpop.permute.xlu0 %1243
        %s1246 = vtos %v1244
        %v1247 = vstv %s1246
        %v1248 = vsel %vm1236, %v1247, %v1235
        %vm1249 = vcmp.eq.s32.totalorder %v834, 32
        %1250 = vrot.lane.b32.xlu0 %v836, 96
        %v1251 = vpop.permute.xlu0 %1250
        %s1253 = vtos %v1251
        %v1254 = vstv %s1253
        %v1255 = vsel %vm1249, %v1254, %v1242
        %1256 = vrot.lane.b32.xlu0 %v840, 96
        %v1257 = vpop.permute.xlu0 %1256
        %s1259 = vtos %v1257
        %v1260 = vstv %s1259
        %v1261 = vsel %vm1249, %v1260, %v1248
        %vm1262 = vcmp.eq.s32.totalorder %v834, 33
        %1263 = vrot.lane.b32.xlu0 %v836, 95
        %v1264 = vpop.permute.xlu0 %1263
        %s1266 = vtos %v1264
        %v1267 = vstv %s1266
        %v1268 = vsel %vm1262, %v1267, %v1255
        %1269 = vrot.lane.b32.xlu0 %v840, 95
        %v1270 = vpop.permute.xlu0 %1269
        %s1272 = vtos %v1270
        %v1273 = vstv %s1272
        %v1274 = vsel %vm1262, %v1273, %v1261
        %vm1275 = vcmp.eq.s32.totalorder %v834, 34
        %1276 = vrot.lane.b32.xlu0 %v836, 94
        %v1277 = vpop.permute.xlu0 %1276
        %s1279 = vtos %v1277
        %v1280 = vstv %s1279
        %v1281 = vsel %vm1275, %v1280, %v1268
        %1282 = vrot.lane.b32.xlu0 %v840, 94
        %v1283 = vpop.permute.xlu0 %1282
        %s1285 = vtos %v1283
        %v1286 = vstv %s1285
        %v1287 = vsel %vm1275, %v1286, %v1274
        %vm1288 = vcmp.eq.s32.totalorder %v834, 35
        %1289 = vrot.lane.b32.xlu0 %v836, 93
        %v1290 = vpop.permute.xlu0 %1289
        %s1292 = vtos %v1290
        %v1293 = vstv %s1292
        %v1294 = vsel %vm1288, %v1293, %v1281
        %1295 = vrot.lane.b32.xlu0 %v840, 93
        %v1296 = vpop.permute.xlu0 %1295
        %s1298 = vtos %v1296
        %v1299 = vstv %s1298
        %v1300 = vsel %vm1288, %v1299, %v1287
        %vm1301 = vcmp.eq.s32.totalorder %v834, 36
        %1302 = vrot.lane.b32.xlu0 %v836, 92
        %v1303 = vpop.permute.xlu0 %1302
        %s1305 = vtos %v1303
        %v1306 = vstv %s1305
        %v1307 = vsel %vm1301, %v1306, %v1294
        %1308 = vrot.lane.b32.xlu0 %v840, 92
        %v1309 = vpop.permute.xlu0 %1308
        %s1311 = vtos %v1309
        %v1312 = vstv %s1311
        %v1313 = vsel %vm1301, %v1312, %v1300
        %vm1314 = vcmp.eq.s32.totalorder %v834, 37
        %1315 = vrot.lane.b32.xlu0 %v836, 91
        %v1316 = vpop.permute.xlu0 %1315
        %s1318 = vtos %v1316
        %v1319 = vstv %s1318
        %v1320 = vsel %vm1314, %v1319, %v1307
        %1321 = vrot.lane.b32.xlu0 %v840, 91
        %v1322 = vpop.permute.xlu0 %1321
        %s1324 = vtos %v1322
        %v1325 = vstv %s1324
        %v1326 = vsel %vm1314, %v1325, %v1313
        %vm1327 = vcmp.eq.s32.totalorder %v834, 38
        %1328 = vrot.lane.b32.xlu0 %v836, 90
        %v1329 = vpop.permute.xlu0 %1328
        %s1331 = vtos %v1329
        %v1332 = vstv %s1331
        %v1333 = vsel %vm1327, %v1332, %v1320
        %1334 = vrot.lane.b32.xlu0 %v840, 90
        %v1335 = vpop.permute.xlu0 %1334
        %s1337 = vtos %v1335
        %v1338 = vstv %s1337
        %v1339 = vsel %vm1327, %v1338, %v1326
        %vm1340 = vcmp.eq.s32.totalorder %v834, 39
        %1341 = vrot.lane.b32.xlu0 %v836, 89
        %v1342 = vpop.permute.xlu0 %1341
        %s1344 = vtos %v1342
        %v1345 = vstv %s1344
        %v1346 = vsel %vm1340, %v1345, %v1333
        %1347 = vrot.lane.b32.xlu0 %v840, 89
        %v1348 = vpop.permute.xlu0 %1347
        %s1350 = vtos %v1348
        %v1351 = vstv %s1350
        %v1352 = vsel %vm1340, %v1351, %v1339
        %v1353 = vmul.f32 %v828, %v1346
        %v1354 = vadd.f32 %v1353, %v1352
        %s1355 = scalar_lea.vmem %s291, 2 [#allocation8]
        %1356 = vst [vmem:[%s1355] sm:$0x3] %v1354
        %s1357 = sand.u32 %s159, 1
        %s1358 = scalar_lea.sflag [#allocation5], %s1357
        %s1359 = sand.u32 %s159, 1
        %s1360 = smul.addr %s1359, 4
        %s1361 = scalar_lea.vmem [#allocation8], %s1360
        // Predicated region
        $region45: #{tpu_custom_call.1} parent=35 // pred_check
          %p1362 = pneg %p169
        $region46: #{tpu_custom_call.1} parent=35 // pred_check_branch
          %1364 = sbr.rel (%p1362) target = $region48
        $region47: #{tpu_custom_call.1} parent=35 // pred_region
          %s1365 = smul.u32 2, %s31
          %s1367 = ssub.s32 64, 64
          %1368 = vsyncadd %s1358, %s1367
          %s1369 = sadd.s32 %s32, %s30
          %s1370 = smul.addr %s1365, 8
          %s1371 = sadd.s32 %s1369, %s1370
          %s1372 = smul.addr %s1371, 32
          %s1373 = scalar_lea.hbm %s4, %s1372
          %s1374 = sshll.u32 %s1361, 4
          %s1375 = int_to_ptr.vmem [resolvable:$true] %s1374
          %1380 = dma.vmem_to_hbm [thread:$0]  %s1375, 64, %s1373, %s1358, 32, 256, 2
        $region48: #{tpu_custom_call.1} parent=35 // pred_fallthru
          _
      $region36: #{tpu_custom_call.1} parent=5 // pred_fallthru
        _
      %p1381 = scmp.le.s32.totalorder 2, %s20
      // Predicated region
      $region49: #{tpu_custom_call.1} parent=5 // pred_check
        %p1382 = pneg %p1381
      $region50: #{tpu_custom_call.1} parent=5 // pred_check_branch
        %1384 = sbr.rel (%p1382) target = $region52
      $region51: #{tpu_custom_call.1} parent=5 // pred_region
        %s1385 = ssub.s32 %s20, 2
        // Predicated region
        $region53: #{tpu_custom_call.1} parent=51 // pred_check
          %p1386 = pneg %p175
        $region54: #{tpu_custom_call.1} parent=51 // pred_check_branch
          %1388 = sbr.rel (%p1386) target = $region56
        $region55: #{tpu_custom_call.1} parent=51 // pred_region
          %s1389 = sand.u32 %s160, 1
          %s1390 = scalar_lea.sflag [#allocation5], %s1389
          %s1391 = sand.u32 %s160, 1
          %s1392 = smul.addr %s1391, 4
          %s1393 = scalar_lea.vmem [#allocation8], %s1392
          %1394 = dma.done %s1390, 64
        $region56: #{tpu_custom_call.1} parent=51 // pred_fallthru
          _
      $region52: #{tpu_custom_call.1} parent=5 // pred_fallthru
        _
    $region6: #{tpu_custom_call.1} parent=1 // loop_footer
      %s24 = sadd.s32 1, %s20
    $region7: #{tpu_custom_call.1} parent=1 // loop_footer_branch
      %19 = sbr.rel target = $region3
    $region8: #{tpu_custom_call.1} parent=1 // loop_exit
      _
    %1395 = vsyncpa [#allocation4], 1
    %s1396 = scalar_lea.sflag [#allocation4], 1
    %1397 = vsyncpa %s1396, 1
    %1398 = vsyncpa [#allocation7], 1
    %s1399 = scalar_lea.sflag [#allocation7], 1
    %1400 = vsyncpa %s1399, 1
    %1401 = vsyncpa [#allocation5], 1
    %s1402 = scalar_lea.sflag [#allocation5], 1
    %1403 = vsyncpa %s1402, 1

</llo_original>
